<compile_context>
chip_gen: v7x
topology: tpu7x:2x2x1
jax: 0.10.0
libtpu: 0.0.40
codegen_flags: <defaults>
</compile_context>

<pallas_src>
import numpy as np
import jax
import jax.numpy as jnp
from jax.experimental import pallas as pl
from jax.experimental.pallas import tpu as pltpu

LATENT_DIM = 100
NUM_CLASSES = 10
IMG_SIZE = 28
CHANNELS = 1
IMG_FLAT = CHANNELS * IMG_SIZE * IMG_SIZE          # 784
BN_EPS = 1e-5

GEN_IN = LATENT_DIM + NUM_CLASSES                  # 110
GEN_IN_PAD = 128                                   # lane-padded K for generator layer 1
GEN_OUT_PAD = 896                                  # lane-padded generator output (784 -> 896)
DISC_IN = NUM_CLASSES + IMG_FLAT                   # 794
DISC_IN_PAD = 896                                  # lane-padded K for discriminator layer 1
MAX_TILE_B = 128                                   # batch tile (fills MXU M on v5e; fine on v6e/v7x)


def _leaky_relu(x, slope=0.2):
    return jnp.where(x > 0, x, slope * x)


def _round_up(x, m):
    return ((x + m - 1) // m) * m


def _batch_tiling(B):
    pb = _round_up(B, 8)
    tile = min(MAX_TILE_B, pb)
    pb = _round_up(pb, tile)
    return pb, tile


# ----------------------------------------------------------------------------
# Generator kernel (BN already folded into W2/W3/W4):
#   Linear(128->128)  + LeakyReLU(0.2)
#   Linear(128->256)  + LeakyReLU   (BN folded)
#   Linear(256->512)  + LeakyReLU   (BN folded)
#   Linear(512->1024) + LeakyReLU   (BN folded)
#   Linear(1024->896) + Tanh        (cols 784..895 are zero padding)
# ----------------------------------------------------------------------------
def _gen_kernel(z_ref,
                w1_ref, b1_ref,
                w2_ref, b2_ref,
                w3_ref, b3_ref,
                w4_ref, b4_ref,
                w5_ref, b5_ref,
                o_ref):
    h = jnp.dot(z_ref[...].astype(jnp.bfloat16), w1_ref[...],
                preferred_element_type=jnp.float32) + b1_ref[...]
    h = _leaky_relu(h)

    h = jnp.dot(h.astype(jnp.bfloat16), w2_ref[...],
                preferred_element_type=jnp.float32) + b2_ref[...]
    h = _leaky_relu(h)

    h = jnp.dot(h.astype(jnp.bfloat16), w3_ref[...],
                preferred_element_type=jnp.float32) + b3_ref[...]
    h = _leaky_relu(h)

    h = jnp.dot(h.astype(jnp.bfloat16), w4_ref[...],
                preferred_element_type=jnp.float32) + b4_ref[...]
    h = _leaky_relu(h)

    h = jnp.dot(h.astype(jnp.bfloat16), w5_ref[...],
                preferred_element_type=jnp.float32) + b5_ref[...]
    o_ref[...] = jnp.tanh(h)


# ----------------------------------------------------------------------------
# Discriminator kernel:
#   Linear(896->1024) + [Dropout=id] + LeakyReLU
#   Linear(1024->512) + [Dropout=id] + LeakyReLU
#   Linear(512->256)  + [Dropout=id] + LeakyReLU
#   fused Linear(256->1) (= Linear(256->128) @ Linear(128->1)) as mul+reduce, + Sigmoid
# ----------------------------------------------------------------------------
def _disc_kernel(x_ref,
                 w1_ref, b1_ref,
                 w2_ref, b2_ref,
                 w3_ref, b3_ref,
                 w45_ref, b45_ref,
                 o_ref):
    h = jnp.dot(x_ref[...].astype(jnp.bfloat16), w1_ref[...],
                preferred_element_type=jnp.float32) + b1_ref[...]
    h = _leaky_relu(h)

    h = jnp.dot(h.astype(jnp.bfloat16), w2_ref[...],
                preferred_element_type=jnp.float32) + b2_ref[...]
    h = _leaky_relu(h)

    h = jnp.dot(h.astype(jnp.bfloat16), w3_ref[...],
                preferred_element_type=jnp.float32) + b3_ref[...]
    h = _leaky_relu(h)

    # N=1 head: elementwise multiply + lane reduction (VPU/XLU) instead of an MXU pass.
    logit = jnp.sum(h * w45_ref[...], axis=-1, keepdims=True) + b45_ref[...]
    o_ref[...] = jax.nn.sigmoid(logit)


# ----------------------------------------------------------------------------
# Parameter construction (deterministic, synthetic — matches module shapes).
# BN folding, disc-head fusion, lane padding and bf16 cast all happen here.
# ----------------------------------------------------------------------------
def _fold_bn(w, b, gamma, beta, mean, var, eps=BN_EPS):
    s = gamma / jnp.sqrt(var + eps)                # (fan_out,)
    w2 = w * s[None, :]
    b2 = b * s[None, :] + (beta - mean * s)[None, :]
    return w2, b2


def init_params(key):
    def linear(k, fan_in, fan_out):
        # stored as (in, out) so the kernel computes x @ W + b (== x @ W_pt.T + b)
        kw, kb = jax.random.split(k)
        bound = 1.0 / np.sqrt(fan_in)
        w = jax.random.uniform(kw, (fan_in, fan_out), jnp.float32, -bound, bound)
        b = jax.random.uniform(kb, (1, fan_out), jnp.float32, -bound, bound)
        return w, b

    keys = jax.random.split(key, 12)
    params = {}
    # embedding (10, 10), N(0,1) like nn.Embedding default
    params["emb"] = jax.random.normal(keys[0], (NUM_CLASSES, NUM_CLASSES), jnp.float32)

    # ---------------- generator ----------------
    g_dims = [(GEN_IN, 128), (128, 256), (256, 512), (512, 1024), (1024, IMG_FLAT)]
    g_raw = [linear(keys[1 + i], fi, fo) for i, (fi, fo) in enumerate(g_dims)]

    # fold eval-mode BN (gamma=1, beta=0, running_mean=0, running_var=1) into layers 2..4
    g_fold = [g_raw[0]]
    for (w, b) in g_raw[1:4]:
        fo = w.shape[1]
        g_fold.append(_fold_bn(w, b,
                               gamma=jnp.ones((fo,), jnp.float32),
                               beta=jnp.zeros((fo,), jnp.float32),
                               mean=jnp.zeros((fo,), jnp.float32),
                               var=jnp.ones((fo,), jnp.float32)))
    g_fold.append(g_raw[4])

    # pad K of layer 1 (110 -> 128) and output cols of layer 5 (784 -> 896)
    w1, b1 = g_fold[0]
    w1 = jnp.pad(w1, ((0, GEN_IN_PAD - w1.shape[0]), (0, 0)))
    g_fold[0] = (w1, b1)
    w5, b5 = g_fold[4]
    w5 = jnp.pad(w5, ((0, 0), (0, GEN_OUT_PAD - IMG_FLAT)))
    b5 = jnp.pad(b5, ((0, 0), (0, GEN_OUT_PAD - IMG_FLAT)))
    g_fold[4] = (w5, b5)

    params["gen_lin"] = [(w.astype(jnp.bfloat16), b) for (w, b) in g_fold]

    # ---------------- discriminator ----------------
    d_dims = [(DISC_IN, 1024), (1024, 512), (512, 256), (256, 128), (128, 1)]
    d_raw = [linear(keys[6 + i], fi, fo) for i, (fi, fo) in enumerate(d_dims)]

    w1d, b1d = d_raw[0]
    w1d = jnp.pad(w1d, ((0, DISC_IN_PAD - w1d.shape[0]), (0, 0)))
    params["disc_lin"] = [(w1d.astype(jnp.bfloat16), b1d),
                          (d_raw[1][0].astype(jnp.bfloat16), d_raw[1][1]),
                          (d_raw[2][0].astype(jnp.bfloat16), d_raw[2][1])]

    # fuse Linear(256->128) @ Linear(128->1) (no nonlinearity in between)
    (w4, b4), (w5d, b5d) = d_raw[3], d_raw[4]
    w45 = (w4 @ w5d).T                              # (1, 256)  f32 (elementwise-reduce head)
    b45 = b4 @ w5d + b5d                            # (1, 1)
    params["disc_head"] = (w45, b45)
    return params


# ----------------------------------------------------------------------------
# pallas_call wrappers — batch grid, weights resident via constant index_map.
# ----------------------------------------------------------------------------
def _const_spec(shape):
    return pl.BlockSpec(shape, lambda i: (0, 0))


def _generator_mlp(z_padded, params, tile_b):
    pb = z_padded.shape[0]
    (w1, b1), (w2, b2), (w3, b3), (w4, b4), (w5, b5) = params["gen_lin"]
    args = (z_padded, w1, b1, w2, b2, w3, b3, w4, b4, w5, b5)
    in_specs = [pl.BlockSpec((tile_b, GEN_IN_PAD), lambda i: (i, 0))]
    in_specs += [_const_spec(a.shape) for a in args[1:]]
    return pl.pallas_call(
        _gen_kernel,
        out_shape=jax.ShapeDtypeStruct((pb, GEN_OUT_PAD), jnp.float32),
        grid=(pb // tile_b,),
        in_specs=in_specs,
        out_specs=pl.BlockSpec((tile_b, GEN_OUT_PAD), lambda i: (i, 0)),
        compiler_params=pltpu.CompilerParams(dimension_semantics=("parallel",)),
    )(*args)


def _discriminator_mlp(x_padded, params, tile_b):
    pb = x_padded.shape[0]
    (w1, b1), (w2, b2), (w3, b3) = params["disc_lin"]
    w45, b45 = params["disc_head"]
    args = (x_padded, w1, b1, w2, b2, w3, b3, w45, b45)
    in_specs = [pl.BlockSpec((tile_b, DISC_IN_PAD), lambda i: (i, 0))]
    in_specs += [_const_spec(a.shape) for a in args[1:]]
    return pl.pallas_call(
        _disc_kernel,
        out_shape=jax.ShapeDtypeStruct((pb, 1), jnp.float32),
        grid=(pb // tile_b,),
        in_specs=in_specs,
        out_specs=pl.BlockSpec((tile_b, 1), lambda i: (i, 0)),
        compiler_params=pltpu.CompilerParams(dimension_semantics=("parallel",)),
    )(*args)


def cgan_forward(params, inputs, labels):
    """Mirrors CGAN.forward: 2D input -> generator, 4D input -> discriminator."""
    emb = params["emb"][labels]                          # (B, 10) embedding lookup (glue)
    B = inputs.shape[0]
    pb, tile_b = _batch_tiling(B)
    if inputs.ndim == 2:
        z = jnp.concatenate([emb, inputs.astype(jnp.float32)], axis=-1)    # (B, 110)
        z = jnp.pad(z, ((0, pb - B), (0, GEN_IN_PAD - z.shape[1])))        # (pb, 128)
        x = _generator_mlp(z, params, tile_b)
        x = x[:B, :IMG_FLAT]
        return x.reshape(B, CHANNELS, IMG_SIZE, IMG_SIZE)
    elif inputs.ndim == 4:
        flat = inputs.reshape(B, -1).astype(jnp.float32)                   # NCHW row-major
        x = jnp.concatenate([flat, emb], axis=-1)                          # (B, 794)
        x = jnp.pad(x, ((0, pb - B), (0, DISC_IN_PAD - x.shape[1])))       # (pb, 896)
        s = _discriminator_mlp(x, params, tile_b)
        return s[:B]
    else:
        raise ValueError("input must be 2D (generator) or 4D (discriminator)")


if __name__ == "__main__":
    key = jax.random.PRNGKey(0)
    kp, kz, kl, ki = jax.random.split(key, 4)
    params = init_params(kp)

    B = 8
    labels = jax.random.randint(kl, (B,), 0, NUM_CLASSES)

    # Generator path: 2D latent input
    z = jax.random.normal(kz, (B, LATENT_DIM), jnp.float32)
    imgs = cgan_forward(params, z, labels)
    imgs = jax.block_until_ready(imgs)
    assert imgs.shape == (B, CHANNELS, IMG_SIZE, IMG_SIZE), imgs.shape
    assert bool(jnp.all(jnp.isfinite(imgs)))
    assert bool(jnp.all(jnp.abs(imgs) <= 1.0 + 1e-5))     # tanh range

    # Discriminator path: 4D image input
    fake_imgs = jax.random.normal(ki, (B, CHANNELS, IMG_SIZE, IMG_SIZE), jnp.float32)
    scores = cgan_forward(params, fake_imgs, labels)
    scores = jax.block_until_ready(scores)
    assert scores.shape == (B, 1), scores.shape
    assert bool(jnp.all((scores >= 0.0) & (scores <= 1.0)))  # sigmoid range

    print("KERNEL_OK")
</pallas_src>

<mosaic_0001>
module attributes {stable_mosaic.version = 11 : i64} {
  func.func @_gen_kernel(%arg0: i32, %arg1: memref<8x128xf32, #tpu.memory_space<vmem>>, %arg2: memref<128x128xbf16, #tpu.memory_space<vmem>>, %arg3: memref<1x128xf32, #tpu.memory_space<vmem>>, %arg4: memref<128x256xbf16, #tpu.memory_space<vmem>>, %arg5: memref<1x256xf32, #tpu.memory_space<vmem>>, %arg6: memref<256x512xbf16, #tpu.memory_space<vmem>>, %arg7: memref<1x512xf32, #tpu.memory_space<vmem>>, %arg8: memref<512x1024xbf16, #tpu.memory_space<vmem>>, %arg9: memref<1x1024xf32, #tpu.memory_space<vmem>>, %arg10: memref<1024x896xbf16, #tpu.memory_space<vmem>>, %arg11: memref<1x896xf32, #tpu.memory_space<vmem>>, %arg12: memref<8x896xf32, #tpu.memory_space<vmem>>) attributes {dimension_semantics = [#tpu.dimension_semantics<parallel>], iteration_bounds = array<i64: 1>, scalar_prefetch = 0 : i64, scratch_operands = 0 : i64, tpu.core_type = #tpu.core_type<tc>, window_params = [{transform_indices = @transform_0, window_bounds = array<i64: 8, 128>}, {pipeline_mode = #tpu.pipeline_mode<synchronous>, transform_indices = @transform_1, window_bounds = array<i64: 128, 128>}, {pipeline_mode = #tpu.pipeline_mode<synchronous>, transform_indices = @transform_2, window_bounds = array<i64: 1, 128>}, {pipeline_mode = #tpu.pipeline_mode<synchronous>, transform_indices = @transform_3, window_bounds = array<i64: 128, 256>}, {pipeline_mode = #tpu.pipeline_mode<synchronous>, transform_indices = @transform_4, window_bounds = array<i64: 1, 256>}, {pipeline_mode = #tpu.pipeline_mode<synchronous>, transform_indices = @transform_5, window_bounds = array<i64: 256, 512>}, {pipeline_mode = #tpu.pipeline_mode<synchronous>, transform_indices = @transform_6, window_bounds = array<i64: 1, 512>}, {pipeline_mode = #tpu.pipeline_mode<synchronous>, transform_indices = @transform_7, window_bounds = array<i64: 512, 1024>}, {pipeline_mode = #tpu.pipeline_mode<synchronous>, transform_indices = @transform_8, window_bounds = array<i64: 1, 1024>}, {pipeline_mode = #tpu.pipeline_mode<synchronous>, transform_indices = @transform_9, window_bounds = array<i64: 1024, 896>}, {pipeline_mode = #tpu.pipeline_mode<synchronous>, transform_indices = @transform_10, window_bounds = array<i64: 1, 896>}, {transform_indices = @transform_11, window_bounds = array<i64: 8, 896>}]} {
    %c0 = arith.constant 0 : index
    %c0_0 = arith.constant 0 : index
    %0 = vector.load %arg1[%c0, %c0_0] : memref<8x128xf32, #tpu.memory_space<vmem>>, vector<8x128xf32>
    %1 = arith.truncf %0 : vector<8x128xf32> to vector<8x128xbf16>
    %c0_1 = arith.constant 0 : index
    %c0_2 = arith.constant 0 : index
    %2 = vector.load %arg2[%c0_1, %c0_2] : memref<128x128xbf16, #tpu.memory_space<vmem>>, vector<128x128xbf16>
    %cst = arith.constant dense<0.000000e+00> : vector<8x128xf32>
    %3 = tpu.matmul %1, %2, %cst {dimension_numbers = #tpu.dot_dimension_numbers<[1], [0], [0], [1], [0, 0, 1, 1], [], []>} : vector<8x128xbf16>, vector<128x128xbf16>, vector<8x128xf32> -> vector<8x128xf32>
    %c0_3 = arith.constant 0 : index
    %c0_4 = arith.constant 0 : index
    %4 = vector.load %arg3[%c0_3, %c0_4] : memref<1x128xf32, #tpu.memory_space<vmem>>, vector<1x128xf32>
    %5 = vector.broadcast %4 : vector<1x128xf32> to vector<8x128xf32>
    %6 = arith.addf %3, %5 : vector<8x128xf32>
    %cst_5 = arith.constant 0.000000e+00 : f32
    %7 = vector.broadcast %cst_5 : f32 to vector<8x128xf32>
    %8 = arith.cmpf ogt, %6, %7 : vector<8x128xf32>
    %cst_6 = arith.constant 2.000000e-01 : f32
    %9 = vector.broadcast %cst_6 : f32 to vector<8x128xf32>
    %10 = arith.mulf %9, %6 : vector<8x128xf32>
    %11 = arith.select %8, %6, %10 : vector<8x128xi1>, vector<8x128xf32>
    %12 = arith.truncf %11 : vector<8x128xf32> to vector<8x128xbf16>
    %c0_7 = arith.constant 0 : index
    %c0_8 = arith.constant 0 : index
    %13 = vector.load %arg4[%c0_7, %c0_8] : memref<128x256xbf16, #tpu.memory_space<vmem>>, vector<128x256xbf16>
    %cst_9 = arith.constant dense<0.000000e+00> : vector<8x256xf32>
    %14 = tpu.matmul %12, %13, %cst_9 {dimension_numbers = #tpu.dot_dimension_numbers<[1], [0], [0], [1], [0, 0, 1, 1], [], []>} : vector<8x128xbf16>, vector<128x256xbf16>, vector<8x256xf32> -> vector<8x256xf32>
    %c0_10 = arith.constant 0 : index
    %c0_11 = arith.constant 0 : index
    %15 = vector.load %arg5[%c0_10, %c0_11] : memref<1x256xf32, #tpu.memory_space<vmem>>, vector<1x256xf32>
    %16 = vector.broadcast %15 : vector<1x256xf32> to vector<8x256xf32>
    %17 = arith.addf %14, %16 : vector<8x256xf32>
    %cst_12 = arith.constant 0.000000e+00 : f32
    %18 = vector.broadcast %cst_12 : f32 to vector<8x256xf32>
    %19 = arith.cmpf ogt, %17, %18 : vector<8x256xf32>
    %cst_13 = arith.constant 2.000000e-01 : f32
    %20 = vector.broadcast %cst_13 : f32 to vector<8x256xf32>
    %21 = arith.mulf %20, %17 : vector<8x256xf32>
    %22 = arith.select %19, %17, %21 : vector<8x256xi1>, vector<8x256xf32>
    %23 = arith.truncf %22 : vector<8x256xf32> to vector<8x256xbf16>
    %c0_14 = arith.constant 0 : index
    %c0_15 = arith.constant 0 : index
    %24 = vector.load %arg6[%c0_14, %c0_15] : memref<256x512xbf16, #tpu.memory_space<vmem>>, vector<256x512xbf16>
    %cst_16 = arith.constant dense<0.000000e+00> : vector<8x512xf32>
    %25 = tpu.matmul %23, %24, %cst_16 {dimension_numbers = #tpu.dot_dimension_numbers<[1], [0], [0], [1], [0, 0, 1, 1], [], []>} : vector<8x256xbf16>, vector<256x512xbf16>, vector<8x512xf32> -> vector<8x512xf32>
    %c0_17 = arith.constant 0 : index
    %c0_18 = arith.constant 0 : index
    %26 = vector.load %arg7[%c0_17, %c0_18] : memref<1x512xf32, #tpu.memory_space<vmem>>, vector<1x512xf32>
    %27 = vector.broadcast %26 : vector<1x512xf32> to vector<8x512xf32>
    %28 = arith.addf %25, %27 : vector<8x512xf32>
    %cst_19 = arith.constant 0.000000e+00 : f32
    %29 = vector.broadcast %cst_19 : f32 to vector<8x512xf32>
    %30 = arith.cmpf ogt, %28, %29 : vector<8x512xf32>
    %cst_20 = arith.constant 2.000000e-01 : f32
    %31 = vector.broadcast %cst_20 : f32 to vector<8x512xf32>
    %32 = arith.mulf %31, %28 : vector<8x512xf32>
    %33 = arith.select %30, %28, %32 : vector<8x512xi1>, vector<8x512xf32>
    %34 = arith.truncf %33 : vector<8x512xf32> to vector<8x512xbf16>
    %c0_21 = arith.constant 0 : index
    %c0_22 = arith.constant 0 : index
    %35 = vector.load %arg8[%c0_21, %c0_22] : memref<512x1024xbf16, #tpu.memory_space<vmem>>, vector<512x1024xbf16>
    %cst_23 = arith.constant dense<0.000000e+00> : vector<8x1024xf32>
    %36 = tpu.matmul %34, %35, %cst_23 {dimension_numbers = #tpu.dot_dimension_numbers<[1], [0], [0], [1], [0, 0, 1, 1], [], []>} : vector<8x512xbf16>, vector<512x1024xbf16>, vector<8x1024xf32> -> vector<8x1024xf32>
    %c0_24 = arith.constant 0 : index
    %c0_25 = arith.constant 0 : index
    %37 = vector.load %arg9[%c0_24, %c0_25] : memref<1x1024xf32, #tpu.memory_space<vmem>>, vector<1x1024xf32>
    %38 = vector.broadcast %37 : vector<1x1024xf32> to vector<8x1024xf32>
    %39 = arith.addf %36, %38 : vector<8x1024xf32>
    %cst_26 = arith.constant 0.000000e+00 : f32
    %40 = vector.broadcast %cst_26 : f32 to vector<8x1024xf32>
    %41 = arith.cmpf ogt, %39, %40 : vector<8x1024xf32>
    %cst_27 = arith.constant 2.000000e-01 : f32
    %42 = vector.broadcast %cst_27 : f32 to vector<8x1024xf32>
    %43 = arith.mulf %42, %39 : vector<8x1024xf32>
    %44 = arith.select %41, %39, %43 : vector<8x1024xi1>, vector<8x1024xf32>
    %45 = arith.truncf %44 : vector<8x1024xf32> to vector<8x1024xbf16>
    %c0_28 = arith.constant 0 : index
    %c0_29 = arith.constant 0 : index
    %46 = vector.load %arg10[%c0_28, %c0_29] : memref<1024x896xbf16, #tpu.memory_space<vmem>>, vector<1024x896xbf16>
    %cst_30 = arith.constant dense<0.000000e+00> : vector<8x896xf32>
    %47 = tpu.matmul %45, %46, %cst_30 {dimension_numbers = #tpu.dot_dimension_numbers<[1], [0], [0], [1], [0, 0, 1, 1], [], []>} : vector<8x1024xbf16>, vector<1024x896xbf16>, vector<8x896xf32> -> vector<8x896xf32>
    %c0_31 = arith.constant 0 : index
    %c0_32 = arith.constant 0 : index
    %48 = vector.load %arg11[%c0_31, %c0_32] : memref<1x896xf32, #tpu.memory_space<vmem>>, vector<1x896xf32>
    %49 = vector.broadcast %48 : vector<1x896xf32> to vector<8x896xf32>
    %50 = arith.addf %47, %49 : vector<8x896xf32>
    %51 = math.tanh %50 : vector<8x896xf32>
    %c0_33 = arith.constant 0 : index
    %c0_34 = arith.constant 0 : index
    %52 = vector.load %arg12[%c0_33, %c0_34] : memref<8x896xf32, #tpu.memory_space<vmem>>, vector<8x896xf32>
    tpu.vector_store %arg12[%c0_33, %c0_34], %51 {strides = array<i32>} : memref<8x896xf32, #tpu.memory_space<vmem>>, vector<8x896xf32>,
    return
  }
  func.func @transform_0(%arg0: i32) -> (i32, i32) {
    %c0_i32 = arith.constant 0 : i32
    %c0_i32_0 = arith.constant 0 : i32
    return %arg0, %c0_i32 : i32, i32
  }
  func.func @transform_1(%arg0: i32) -> (i32, i32) {
    %c0_i32 = arith.constant 0 : i32
    %c0_i32_0 = arith.constant 0 : i32
    %c0_i32_1 = arith.constant 0 : i32
    return %c0_i32, %c0_i32_0 : i32, i32
  }
  func.func @transform_2(%arg0: i32) -> (i32, i32) {
    %c0_i32 = arith.constant 0 : i32
    %c0_i32_0 = arith.constant 0 : i32
    %c0_i32_1 = arith.constant 0 : i32
    return %c0_i32, %c0_i32_0 : i32, i32
  }
  func.func @transform_3(%arg0: i32) -> (i32, i32) {
    %c0_i32 = arith.constant 0 : i32
    %c0_i32_0 = arith.constant 0 : i32
    %c0_i32_1 = arith.constant 0 : i32
    return %c0_i32, %c0_i32_0 : i32, i32
  }
  func.func @transform_4(%arg0: i32) -> (i32, i32) {
    %c0_i32 = arith.constant 0 : i32
    %c0_i32_0 = arith.constant 0 : i32
    %c0_i32_1 = arith.constant 0 : i32
    return %c0_i32, %c0_i32_0 : i32, i32
  }
  func.func @transform_5(%arg0: i32) -> (i32, i32) {
    %c0_i32 = arith.constant 0 : i32
    %c0_i32_0 = arith.constant 0 : i32
    %c0_i32_1 = arith.constant 0 : i32
    return %c0_i32, %c0_i32_0 : i32, i32
  }
  func.func @transform_6(%arg0: i32) -> (i32, i32) {
    %c0_i32 = arith.constant 0 : i32
    %c0_i32_0 = arith.constant 0 : i32
    %c0_i32_1 = arith.constant 0 : i32
    return %c0_i32, %c0_i32_0 : i32, i32
  }
  func.func @transform_7(%arg0: i32) -> (i32, i32) {
    %c0_i32 = arith.constant 0 : i32
    %c0_i32_0 = arith.constant 0 : i32
    %c0_i32_1 = arith.constant 0 : i32
    return %c0_i32, %c0_i32_0 : i32, i32
  }
  func.func @transform_8(%arg0: i32) -> (i32, i32) {
    %c0_i32 = arith.constant 0 : i32
    %c0_i32_0 = arith.constant 0 : i32
    %c0_i32_1 = arith.constant 0 : i32
    return %c0_i32, %c0_i32_0 : i32, i32
  }
  func.func @transform_9(%arg0: i32) -> (i32, i32) {
    %c0_i32 = arith.constant 0 : i32
    %c0_i32_0 = arith.constant 0 : i32
    %c0_i32_1 = arith.constant 0 : i32
    return %c0_i32, %c0_i32_0 : i32, i32
  }
  func.func @transform_10(%arg0: i32) -> (i32, i32) {
    %c0_i32 = arith.constant 0 : i32
    %c0_i32_0 = arith.constant 0 : i32
    %c0_i32_1 = arith.constant 0 : i32
    return %c0_i32, %c0_i32_0 : i32, i32
  }
  func.func @transform_11(%arg0: i32) -> (i32, i32) {
    %c0_i32 = arith.constant 0 : i32
    %c0_i32_0 = arith.constant 0 : i32
    return %arg0, %c0_i32 : i32, i32
  }
}

</mosaic_0001>

<llo_original>
// kernel: tpu_custom_call.1
$region0: #{tpu_custom_call.1}
  #allocation0 [shape = 'u32[]', space=smem, size = 0x4, offset = 0x4, fixed_abs, tag = 'smem constant byte address 0x4 - core index']
  #allocation1 [shape = 'u32[144,128]{1,0:T(1,128)}', space=vmem, size = 0x12000, scoped, tag = 'internal scratch']
  %s0 = inlined_call_operand.hbm [shape: f32[8,128], index: 0, kind: input, shape index: {}]
  %s1 = inlined_call_operand.hbm [shape: bf16[128,128], index: 1, kind: input, shape index: {}]
  %s2 = inlined_call_operand.hbm [shape: f32[1,128], index: 2, kind: input, shape index: {}]
  %s3 = inlined_call_operand.hbm [shape: bf16[128,256], index: 3, kind: input, shape index: {}]
  %s4 = inlined_call_operand.hbm [shape: f32[1,256], index: 4, kind: input, shape index: {}]
  %s5 = inlined_call_operand.hbm [shape: bf16[256,512], index: 5, kind: input, shape index: {}]
  %s6 = inlined_call_operand.hbm [shape: f32[1,512], index: 6, kind: input, shape index: {}]
  %s7 = inlined_call_operand.hbm [shape: bf16[512,1024], index: 7, kind: input, shape index: {}]
  %s8 = inlined_call_operand.hbm [shape: f32[1,1024], index: 8, kind: input, shape index: {}]
  %s9 = inlined_call_operand.hbm [shape: bf16[1024,896], index: 9, kind: input, shape index: {}]
  %s10 = inlined_call_operand.hbm [shape: f32[1,896], index: 10, kind: input, shape index: {}]
  %s11 = inlined_call_operand.hbm [shape: f32[8,896], index: 11, kind: output, shape index: {}]
  %s12 = sld [smem:[#allocation0]]
  $region98: #{tpu_custom_call.1} parent=0
    _
  %s14 = ssub.s32 1, %s12
  %s15 = scalar_select 0, %s14, %s12
  $region1: #{tpu_custom_call.1} parent=0
    #allocation2 [shape = 'u8[4096]{0}', space=vmem, size = 0x1000, scoped, tag = 'input window, operand 0, single buffered']
    #allocation3 [shape = 's32[1]{0}', space=sflag, size = 0x4, scoped, tag = 'scoped memory for tpu_custom_call.1']
    #allocation4 [shape = 's32[1]{0}', space=sflag, size = 0x4, scoped, tag = 'scoped memory for tpu_custom_call.1']
    #allocation5 [shape = 'u8[32768]{0}', space=vmem, size = 0x8000, scoped, tag = 'input window, operand 1, single buffered']
    #allocation6 [shape = 's32[1]{0}', space=sflag, size = 0x4, scoped, tag = 'scoped memory for tpu_custom_call.1']
    #allocation7 [shape = 'u8[512]{0}', space=vmem, size = 0x400, scoped, tag = 'input window, operand 2, single buffered']
    #allocation8 [shape = 'u8[65536]{0}', space=vmem, size = 0x10000, scoped, tag = 'input window, operand 3, single buffered']
    #allocation9 [shape = 's32[1]{0}', space=sflag, size = 0x4, scoped, tag = 'scoped memory for tpu_custom_call.1']
    #allocation10 [shape = 'u8[1024]{0}', space=vmem, size = 0x400, scoped, tag = 'input window, operand 4, single buffered']
    #allocation11 [shape = 'u8[262144]{0}', space=vmem, size = 0x40000, scoped, tag = 'input window, operand 5, single buffered']
    #allocation12 [shape = 's32[1]{0}', space=sflag, size = 0x4, scoped, tag = 'scoped memory for tpu_custom_call.1']
    #allocation13 [shape = 'u8[2048]{0}', space=vmem, size = 0x800, scoped, tag = 'input window, operand 6, single buffered']
    #allocation14 [shape = 'u8[1048576]{0}', space=vmem, size = 0x100000, scoped, tag = 'input window, operand 7, single buffered']
    #allocation15 [shape = 's32[1]{0}', space=sflag, size = 0x4, scoped, tag = 'scoped memory for tpu_custom_call.1']
    #allocation16 [shape = 'u8[4096]{0}', space=vmem, size = 0x1000, scoped, tag = 'input window, operand 8, single buffered']
    #allocation17 [shape = 'u8[1835008]{0}', space=vmem, size = 0x1c0000, scoped, tag = 'input window, operand 9, single buffered']
    #allocation18 [shape = 's32[1]{0}', space=sflag, size = 0x4, scoped, tag = 'scoped memory for tpu_custom_call.1']
    #allocation19 [shape = 'u8[3584]{0}', space=vmem, size = 0x1000, scoped, tag = 'input window, operand 10, single buffered']
    #allocation20 [shape = 'u8[28672]{0}', space=vmem, size = 0x7000, scoped, tag = 'output window, operand 0, single buffered']
    %16 = vsyncpa [#allocation3], 0
    %17 = vsyncpa [#allocation6], 0
    %18 = vsyncpa [#allocation9], 0
    %19 = vsyncpa [#allocation12], 0
    %20 = vsyncpa [#allocation15], 0
    %21 = vsyncpa [#allocation18], 0
    %22 = vsyncpa [#allocation4], 0
    // Predicated region
    $region2: #{tpu_custom_call.1} parent=1 // pred_check
      _
    $region3: #{tpu_custom_call.1} parent=1 // pred_check_branch
      %24 = sbr.rel (0) target = $region5
    $region4: #{tpu_custom_call.1} parent=1 // pred_region
      %s26 = ssub.s32 128, 128
      %27 = vsyncadd [#allocation3], %s26
      %s29 = sshll.u32 [#allocation2], 4
      %s30 = int_to_ptr.vmem [resolvable:$true] %s29
      %32 = dma.hbm_to_vmem [thread:$0]  %s0, 128, %s30, [#allocation3]
    $region5: #{tpu_custom_call.1} parent=1 // pred_fallthru
      _
    // Predicated region
    $region6: #{tpu_custom_call.1} parent=1 // pred_check
      _
    $region7: #{tpu_custom_call.1} parent=1 // pred_check_branch
      %34 = sbr.rel (0) target = $region9
    $region8: #{tpu_custom_call.1} parent=1 // pred_region
      %s36 = ssub.s32 1024, 1024
      %37 = vsyncadd [#allocation6], %s36
      %s38 = sshll.u32 [#allocation5], 4
      %s39 = int_to_ptr.vmem [resolvable:$true] %s38
      %44 = dma.hbm_to_vmem [thread:$0]  %s1, 1024, %s39, [#allocation6], 64, 64, 4
    $region9: #{tpu_custom_call.1} parent=1 // pred_fallthru
      _
    // Predicated region
    $region10: #{tpu_custom_call.1} parent=1 // pred_check
      _
    $region11: #{tpu_custom_call.1} parent=1 // pred_check_branch
      %46 = sbr.rel (0) target = $region13
    $region12: #{tpu_custom_call.1} parent=1 // pred_region
      %s48 = ssub.s32 16, 16
      %49 = vsyncadd [#allocation6], %s48
      %s51 = sshll.u32 [#allocation7], 4
      %s52 = int_to_ptr.vmem [resolvable:$true] %s51
      %54 = dma.hbm_to_vmem [thread:$0]  %s2, 16, %s52, [#allocation6]
    $region13: #{tpu_custom_call.1} parent=1 // pred_fallthru
      _
    // Predicated region
    $region14: #{tpu_custom_call.1} parent=1 // pred_check
      _
    $region15: #{tpu_custom_call.1} parent=1 // pred_check_branch
      %56 = sbr.rel (0) target = $region17
    $region16: #{tpu_custom_call.1} parent=1 // pred_region
      %s58 = ssub.s32 2048, 2048
      %59 = vsyncadd [#allocation9], %s58
      %s60 = sshll.u32 [#allocation8], 4
      %s61 = int_to_ptr.vmem [resolvable:$true] %s60
      %66 = dma.hbm_to_vmem [thread:$0]  %s3, 2048, %s61, [#allocation9], 128, 128, 8
    $region17: #{tpu_custom_call.1} parent=1 // pred_fallthru
      _
    // Predicated region
    $region18: #{tpu_custom_call.1} parent=1 // pred_check
      _
    $region19: #{tpu_custom_call.1} parent=1 // pred_check_branch
      %68 = sbr.rel (0) target = $region21
    $region20: #{tpu_custom_call.1} parent=1 // pred_region
      %s70 = ssub.s32 32, 32
      %71 = vsyncadd [#allocation9], %s70
      %s73 = sshll.u32 [#allocation10], 4
      %s74 = int_to_ptr.vmem [resolvable:$true] %s73
      %76 = dma.hbm_to_vmem [thread:$0]  %s4, 32, %s74, [#allocation9]
    $region21: #{tpu_custom_call.1} parent=1 // pred_fallthru
      _
    // Predicated region
    $region22: #{tpu_custom_call.1} parent=1 // pred_check
      _
    $region23: #{tpu_custom_call.1} parent=1 // pred_check_branch
      %78 = sbr.rel (0) target = $region25
    $region24: #{tpu_custom_call.1} parent=1 // pred_region
      %s80 = ssub.s32 8192, 8192
      %81 = vsyncadd [#allocation12], %s80
      %s82 = sshll.u32 [#allocation11], 4
      %s83 = int_to_ptr.vmem [resolvable:$true] %s82
      %88 = dma.hbm_to_vmem [thread:$0]  %s5, 8192, %s83, [#allocation12], 256, 256, 16
    $region25: #{tpu_custom_call.1} parent=1 // pred_fallthru
      _
    // Predicated region
    $region26: #{tpu_custom_call.1} parent=1 // pred_check
      _
    $region27: #{tpu_custom_call.1} parent=1 // pred_check_branch
      %90 = sbr.rel (0) target = $region29
    $region28: #{tpu_custom_call.1} parent=1 // pred_region
      %s92 = ssub.s32 64, 64
      %93 = vsyncadd [#allocation12], %s92
      %s95 = sshll.u32 [#allocation13], 4
      %s96 = int_to_ptr.vmem [resolvable:$true] %s95
      %98 = dma.hbm_to_vmem [thread:$0]  %s6, 64, %s96, [#allocation12]
    $region29: #{tpu_custom_call.1} parent=1 // pred_fallthru
      _
    // Predicated region
    $region30: #{tpu_custom_call.1} parent=1 // pred_check
      _
    $region31: #{tpu_custom_call.1} parent=1 // pred_check_branch
      %100 = sbr.rel (0) target = $region33
    $region32: #{tpu_custom_call.1} parent=1 // pred_region
      %s102 = ssub.s32 32768, 32768
      %103 = vsyncadd [#allocation15], %s102
      %s104 = sshll.u32 [#allocation14], 4
      %s105 = int_to_ptr.vmem [resolvable:$true] %s104
      %110 = dma.hbm_to_vmem [thread:$0]  %s7, 32768, %s105, [#allocation15], 512, 512, 32
    $region33: #{tpu_custom_call.1} parent=1 // pred_fallthru
      _
    // Predicated region
    $region34: #{tpu_custom_call.1} parent=1 // pred_check
      _
    $region35: #{tpu_custom_call.1} parent=1 // pred_check_branch
      %112 = sbr.rel (0) target = $region37
    $region36: #{tpu_custom_call.1} parent=1 // pred_region
      %s114 = ssub.s32 128, 128
      %115 = vsyncadd [#allocation15], %s114
      %s117 = sshll.u32 [#allocation16], 4
      %s118 = int_to_ptr.vmem [resolvable:$true] %s117
      %120 = dma.hbm_to_vmem [thread:$0]  %s8, 128, %s118, [#allocation15]
    $region37: #{tpu_custom_call.1} parent=1 // pred_fallthru
      _
    // Predicated region
    $region38: #{tpu_custom_call.1} parent=1 // pred_check
      _
    $region39: #{tpu_custom_call.1} parent=1 // pred_check_branch
      %122 = sbr.rel (0) target = $region41
    $region40: #{tpu_custom_call.1} parent=1 // pred_region
      %s124 = ssub.s32 57344, 57344
      %125 = vsyncadd [#allocation18], %s124
      %s126 = sshll.u32 [#allocation17], 4
      %s127 = int_to_ptr.vmem [resolvable:$true] %s126
      %132 = dma.hbm_to_vmem [thread:$0]  %s9, 57344, %s127, [#allocation18], 448, 448, 28
    $region41: #{tpu_custom_call.1} parent=1 // pred_fallthru
      _
    // Predicated region
    $region42: #{tpu_custom_call.1} parent=1 // pred_check
      _
    $region43: #{tpu_custom_call.1} parent=1 // pred_check_branch
      %134 = sbr.rel (0) target = $region45
    $region44: #{tpu_custom_call.1} parent=1 // pred_region
      %s136 = ssub.s32 112, 112
      %137 = vsyncadd [#allocation18], %s136
      %s139 = sshll.u32 [#allocation19], 4
      %s140 = int_to_ptr.vmem [resolvable:$true] %s139
      %142 = dma.hbm_to_vmem [thread:$0]  %s10, 112, %s140, [#allocation18]
    $region45: #{tpu_custom_call.1} parent=1 // pred_fallthru
      _
    // Predicated region
    $region46: #{tpu_custom_call.1} parent=1 // pred_check
      _
    $region47: #{tpu_custom_call.1} parent=1 // pred_check_branch
      %144 = sbr.rel (0) target = $region49
    $region48: #{tpu_custom_call.1} parent=1 // pred_region
      %145 = dma.done [#allocation3], 128
    $region49: #{tpu_custom_call.1} parent=1 // pred_fallthru
      _
    // Predicated region
    $region50: #{tpu_custom_call.1} parent=1 // pred_check
      _
    $region51: #{tpu_custom_call.1} parent=1 // pred_check_branch
      %147 = sbr.rel (0) target = $region53
    $region52: #{tpu_custom_call.1} parent=1 // pred_region
      %148 = dma.done [#allocation6], 1024
    $region53: #{tpu_custom_call.1} parent=1 // pred_fallthru
      _
    // Predicated region
    $region54: #{tpu_custom_call.1} parent=1 // pred_check
      _
    $region55: #{tpu_custom_call.1} parent=1 // pred_check_branch
      %150 = sbr.rel (0) target = $region57
    $region56: #{tpu_custom_call.1} parent=1 // pred_region
      %151 = dma.done [#allocation6], 16
    $region57: #{tpu_custom_call.1} parent=1 // pred_fallthru
      _
    // Predicated region
    $region58: #{tpu_custom_call.1} parent=1 // pred_check
      _
    $region59: #{tpu_custom_call.1} parent=1 // pred_check_branch
      %153 = sbr.rel (0) target = $region61
    $region60: #{tpu_custom_call.1} parent=1 // pred_region
      %154 = dma.done [#allocation9], 2048
    $region61: #{tpu_custom_call.1} parent=1 // pred_fallthru
      _
    // Predicated region
    $region62: #{tpu_custom_call.1} parent=1 // pred_check
      _
    $region63: #{tpu_custom_call.1} parent=1 // pred_check_branch
      %156 = sbr.rel (0) target = $region65
    $region64: #{tpu_custom_call.1} parent=1 // pred_region
      %157 = dma.done [#allocation9], 32
    $region65: #{tpu_custom_call.1} parent=1 // pred_fallthru
      _
    // Predicated region
    $region66: #{tpu_custom_call.1} parent=1 // pred_check
      _
    $region67: #{tpu_custom_call.1} parent=1 // pred_check_branch
      %159 = sbr.rel (0) target = $region69
    $region68: #{tpu_custom_call.1} parent=1 // pred_region
      %160 = dma.done [#allocation12], 8192
    $region69: #{tpu_custom_call.1} parent=1 // pred_fallthru
      _
    // Predicated region
    $region70: #{tpu_custom_call.1} parent=1 // pred_check
      _
    $region71: #{tpu_custom_call.1} parent=1 // pred_check_branch
      %162 = sbr.rel (0) target = $region73
    $region72: #{tpu_custom_call.1} parent=1 // pred_region
      %163 = dma.done [#allocation12], 64
    $region73: #{tpu_custom_call.1} parent=1 // pred_fallthru
      _
    // Predicated region
    $region74: #{tpu_custom_call.1} parent=1 // pred_check
      _
    $region75: #{tpu_custom_call.1} parent=1 // pred_check_branch
      %165 = sbr.rel (0) target = $region77
    $region76: #{tpu_custom_call.1} parent=1 // pred_region
      %166 = dma.done [#allocation15], 32768
    $region77: #{tpu_custom_call.1} parent=1 // pred_fallthru
      _
    // Predicated region
    $region78: #{tpu_custom_call.1} parent=1 // pred_check
      _
    $region79: #{tpu_custom_call.1} parent=1 // pred_check_branch
      %168 = sbr.rel (0) target = $region81
    $region80: #{tpu_custom_call.1} parent=1 // pred_region
      %169 = dma.done [#allocation15], 128
    $region81: #{tpu_custom_call.1} parent=1 // pred_fallthru
      _
    // Predicated region
    $region82: #{tpu_custom_call.1} parent=1 // pred_check
      _
    $region83: #{tpu_custom_call.1} parent=1 // pred_check_branch
      %171 = sbr.rel (0) target = $region85
    $region84: #{tpu_custom_call.1} parent=1 // pred_region
      %172 = dma.done [#allocation18], 57344
    $region85: #{tpu_custom_call.1} parent=1 // pred_fallthru
      _
    // Predicated region
    $region86: #{tpu_custom_call.1} parent=1 // pred_check
      _
    $region87: #{tpu_custom_call.1} parent=1 // pred_check_branch
      %174 = sbr.rel (0) target = $region89
    $region88: #{tpu_custom_call.1} parent=1 // pred_region
      %175 = dma.done [#allocation18], 112
    $region89: #{tpu_custom_call.1} parent=1 // pred_fallthru
      _
    %v177 = vld [vmem:[#allocation2] sm:$0xff]
    %v178 = vpack.c.bf16 %v177, %v177
    %v179 = vld [vmem:[#allocation5] sm:$0xf]
    %v180 = vld [vmem:[#allocation5 + $0x4] sm:$0xf]
    %v181 = vld [vmem:[#allocation5 + $0x8] sm:$0xf]
    %v182 = vld [vmem:[#allocation5 + $0xc] sm:$0xf]
    %v183 = vld [vmem:[#allocation5 + $0x10] sm:$0xf]
    %v184 = vld [vmem:[#allocation5 + $0x14] sm:$0xf]
    %v185 = vld [vmem:[#allocation5 + $0x18] sm:$0xf]
    %v186 = vld [vmem:[#allocation5 + $0x1c] sm:$0xf]
    %v187 = vld [vmem:[#allocation5 + $0x20] sm:$0xf]
    %v188 = vld [vmem:[#allocation5 + $0x24] sm:$0xf]
    %v189 = vld [vmem:[#allocation5 + $0x28] sm:$0xf]
    %v190 = vld [vmem:[#allocation5 + $0x2c] sm:$0xf]
    %v191 = vld [vmem:[#allocation5 + $0x30] sm:$0xf]
    %v192 = vld [vmem:[#allocation5 + $0x34] sm:$0xf]
    %v193 = vld [vmem:[#allocation5 + $0x38] sm:$0xf]
    %v194 = vld [vmem:[#allocation5 + $0x3c] sm:$0xf]
    %v195 = vld [vmem:[#allocation7] sm:$0x1]
    %v197 = vlaneseq
    %v198 = vshrl.u32 %v197, 7
    %v199 = vsub.s32 0, %v198
    %v200 = vrot.slane %v195, %v199
    %v218 = vunpack.c.l.b16 %v179
    %v219 = vunpack.c.l.b16 %v180
    %v220 = vunpack.c.l.b16 %v181
    %v221 = vunpack.c.l.b16 %v182
    %v222 = vunpack.c.l.b16 %v183
    %v223 = vunpack.c.l.b16 %v184
    %v224 = vunpack.c.l.b16 %v185
    %v225 = vunpack.c.l.b16 %v186
    %v226 = vunpack.c.l.b16 %v187
    %v227 = vunpack.c.l.b16 %v188
    %v228 = vunpack.c.l.b16 %v189
    %v229 = vunpack.c.l.b16 %v190
    %v230 = vunpack.c.l.b16 %v191
    %v231 = vunpack.c.l.b16 %v192
    %v232 = vunpack.c.l.b16 %v193
    %v233 = vunpack.c.l.b16 %v194
    %v234 = vpack.c.b16 %v219, %v218
    %v235 = vpack.c.b16 %v221, %v220
    %v236 = vpack.c.b16 %v223, %v222
    %v237 = vpack.c.b16 %v225, %v224
    %v238 = vpack.c.b16 %v227, %v226
    %v239 = vpack.c.b16 %v229, %v228
    %v240 = vpack.c.b16 %v231, %v230
    %v241 = vpack.c.b16 %v233, %v232
    %250 = vmatprep.subr.bf16.mxu0 0
    %251 = vmatpush1.bf16.msra.mxu0 %v234
    %252 = vmatprep.subr.bf16.mxu0 0
    %253 = vmatpush1.bf16.msra.mxu0 %v235
    %254 = vmatprep.subr.bf16.mxu0 0
    %255 = vmatpush1.bf16.msra.mxu0 %v236
    %256 = vmatprep.subr.bf16.mxu0 0
    %257 = vmatpush1.bf16.msra.mxu0 %v237
    %258 = vmatprep.subr.bf16.mxu0 0
    %259 = vmatpush1.bf16.msra.mxu0 %v238
    %260 = vmatprep.subr.bf16.mxu0 0
    %261 = vmatpush1.bf16.msra.mxu0 %v239
    %262 = vmatprep.subr.bf16.mxu0 0
    %263 = vmatpush1.bf16.msra.mxu0 %v240
    %264 = vmatprep.subr.bf16.mxu0 0
    %265 = vmatpush1.bf16.msra.mxu0 %v241
    %266 = vmatprep.subr.bf16.mxu0 0
    %267 = vmatpush1.bf16.msra.mxu0 0
    %268 = vmatprep.subr.bf16.mxu0 0
    %269 = vmatpush1.bf16.msra.mxu0 0
    %270 = vmatprep.subr.bf16.mxu0 0
    %271 = vmatpush1.bf16.msra.mxu0 0
    %272 = vmatprep.subr.bf16.mxu0 0
    %273 = vmatpush1.bf16.msra.mxu0 0
    %274 = vmatprep.subr.bf16.mxu0 0
    %275 = vmatpush1.bf16.msra.mxu0 0
    %276 = vmatprep.subr.bf16.mxu0 0
    %277 = vmatpush1.bf16.msra.mxu0 0
    %278 = vmatprep.subr.bf16.mxu0 0
    %279 = vmatpush1.bf16.msra.mxu0 0
    %280 = vmatprep.subr.bf16.mxu0 0
    %281 = vmatpush1.bf16.msra.mxu0 0
    %282 = vmatprep.mubr.bf16.mxu0 0
    %283 = vmatmul.mubr.bf16.gmra.mrb[0].mxu0 %v178
    %v284 = vpop.f32.mrb[0].mxu0
    %v285 = vadd.f32 %v200, %v284
    %v286 = vpop.f32.mrb[0].mxu0
    %v287 = vpop.f32.mrb[0].mxu0
    %v288 = vpop.f32.mrb[0].mxu0
    %289 = vdwg.mxu0
    %vm290 = vcmp.gt.f32.partialorder %v285, 0.0
    %v291 = vmul.f32 %v285, 0.2
    %v292 = vsel %vm290, %v285, %v291
    %v293 = vpack.c.bf16 %v292, %v292
    %v294 = vld [vmem:[#allocation8] sm:$0xff]
    %v295 = vld [vmem:[#allocation8 + $0x8] sm:$0xff]
    %v296 = vld [vmem:[#allocation8 + $0x10] sm:$0xff]
    %v297 = vld [vmem:[#allocation8 + $0x18] sm:$0xff]
    %v298 = vld [vmem:[#allocation8 + $0x20] sm:$0xff]
    %v299 = vld [vmem:[#allocation8 + $0x28] sm:$0xff]
    %v300 = vld [vmem:[#allocation8 + $0x30] sm:$0xff]
    %v301 = vld [vmem:[#allocation8 + $0x38] sm:$0xff]
    %v302 = vld [vmem:[#allocation8 + $0x40] sm:$0xff]
    %v303 = vld [vmem:[#allocation8 + $0x48] sm:$0xff]
    %v304 = vld [vmem:[#allocation8 + $0x50] sm:$0xff]
    %v305 = vld [vmem:[#allocation8 + $0x58] sm:$0xff]
    %v306 = vld [vmem:[#allocation8 + $0x60] sm:$0xff]
    %v307 = vld [vmem:[#allocation8 + $0x68] sm:$0xff]
    %v308 = vld [vmem:[#allocation8 + $0x70] sm:$0xff]
    %v309 = vld [vmem:[#allocation8 + $0x78] sm:$0xff]
    %v310 = vld [vmem:[#allocation10] sm:$0x3]
    %v312 = vlaneseq
    %v313 = vshrl.u32 %v312, 7
    %v314 = vsub.s32 0, %v313
    %v315 = vrot.slane %v310, %v314
    %v316 = vlaneseq
    %v317 = vshrl.u32 %v316, 7
    %v318 = vsub.s32 1, %v317
    %v319 = vrot.slane %v310, %v318
    %v338 = vunpack.c.l.b16 %v294
    %v339 = vunpack.c.h.b16 %v294
    %v340 = vunpack.c.l.b16 %v295
    %v341 = vunpack.c.h.b16 %v295
    %v342 = vunpack.c.l.b16 %v296
    %v343 = vunpack.c.h.b16 %v296
    %v344 = vunpack.c.l.b16 %v297
    %v345 = vunpack.c.h.b16 %v297
    %v346 = vunpack.c.l.b16 %v298
    %v347 = vunpack.c.h.b16 %v298
    %v348 = vunpack.c.l.b16 %v299
    %v349 = vunpack.c.h.b16 %v299
    %v350 = vunpack.c.l.b16 %v300
    %v351 = vunpack.c.h.b16 %v300
    %v352 = vunpack.c.l.b16 %v301
    %v353 = vunpack.c.h.b16 %v301
    %v354 = vunpack.c.l.b16 %v302
    %v355 = vunpack.c.h.b16 %v302
    %v356 = vunpack.c.l.b16 %v303
    %v357 = vunpack.c.h.b16 %v303
    %v358 = vunpack.c.l.b16 %v304
    %v359 = vunpack.c.h.b16 %v304
    %v360 = vunpack.c.l.b16 %v305
    %v361 = vunpack.c.h.b16 %v305
    %v362 = vunpack.c.l.b16 %v306
    %v363 = vunpack.c.h.b16 %v306
    %v364 = vunpack.c.l.b16 %v307
    %v365 = vunpack.c.h.b16 %v307
    %v366 = vunpack.c.l.b16 %v308
    %v367 = vunpack.c.h.b16 %v308
    %v368 = vunpack.c.l.b16 %v309
    %v369 = vunpack.c.h.b16 %v309
    %v370 = vpack.c.b16 %v340, %v338
    %v371 = vpack.c.b16 %v341, %v339
    %v372 = vpack.c.b16 %v344, %v342
    %v373 = vpack.c.b16 %v345, %v343
    %v374 = vpack.c.b16 %v348, %v346
    %v375 = vpack.c.b16 %v349, %v347
    %v376 = vpack.c.b16 %v352, %v350
    %v377 = vpack.c.b16 %v353, %v351
    %v378 = vpack.c.b16 %v356, %v354
    %v379 = vpack.c.b16 %v357, %v355
    %v380 = vpack.c.b16 %v360, %v358
    %v381 = vpack.c.b16 %v361, %v359
    %v382 = vpack.c.b16 %v364, %v362
    %v383 = vpack.c.b16 %v365, %v363
    %v384 = vpack.c.b16 %v368, %v366
    %v385 = vpack.c.b16 %v369, %v367
    %402 = vmatprep.subr.bf16.mxu0 %v371
    %403 = vmatpush1.bf16.msra.mxu0 %v370
    %404 = vmatprep.subr.bf16.mxu0 %v373
    %405 = vmatpush1.bf16.msra.mxu0 %v372
    %406 = vmatprep.subr.bf16.mxu0 %v375
    %407 = vmatpush1.bf16.msra.mxu0 %v374
    %408 = vmatprep.subr.bf16.mxu0 %v377
    %409 = vmatpush1.bf16.msra.mxu0 %v376
    %410 = vmatprep.subr.bf16.mxu0 %v379
    %411 = vmatpush1.bf16.msra.mxu0 %v378
    %412 = vmatprep.subr.bf16.mxu0 %v381
    %413 = vmatpush1.bf16.msra.mxu0 %v380
    %414 = vmatprep.subr.bf16.mxu0 %v383
    %415 = vmatpush1.bf16.msra.mxu0 %v382
    %416 = vmatprep.subr.bf16.mxu0 %v385
    %417 = vmatpush1.bf16.msra.mxu0 %v384
    %418 = vmatprep.subr.bf16.mxu0 0
    %419 = vmatpush1.bf16.msra.mxu0 0
    %420 = vmatprep.subr.bf16.mxu0 0
    %421 = vmatpush1.bf16.msra.mxu0 0
    %422 = vmatprep.subr.bf16.mxu0 0
    %423 = vmatpush1.bf16.msra.mxu0 0
    %424 = vmatprep.subr.bf16.mxu0 0
    %425 = vmatpush1.bf16.msra.mxu0 0
    %426 = vmatprep.subr.bf16.mxu0 0
    %427 = vmatpush1.bf16.msra.mxu0 0
    %428 = vmatprep.subr.bf16.mxu0 0
    %429 = vmatpush1.bf16.msra.mxu0 0
    %430 = vmatprep.subr.bf16.mxu0 0
    %431 = vmatpush1.bf16.msra.mxu0 0
    %432 = vmatprep.subr.bf16.mxu0 0
    %433 = vmatpush1.bf16.msra.mxu0 0
    %434 = vmatprep.mubr.bf16.mxu0 0
    %435 = vmatmul.mubr.bf16.gmra.mrb[0].mxu0 %v293
    %v436 = vpop.f32.mrb[0].mxu0
    %v437 = vadd.f32 %v315, %v436
    %v438 = vpop.f32.mrb[0].mxu0
    %v439 = vadd.f32 %v319, %v438
    %v440 = vpop.f32.mrb[0].mxu0
    %v441 = vpop.f32.mrb[0].mxu0
    %442 = vdwg.mxu0
    %vm443 = vcmp.gt.f32.partialorder %v437, 0.0
    %vm444 = vcmp.gt.f32.partialorder %v439, 0.0
    %v445 = vmul.f32 %v437, 0.2
    %v446 = vmul.f32 %v439, 0.2
    %v447 = vsel %vm443, %v437, %v445
    %v448 = vsel %vm444, %v439, %v446
    %v449 = vpack.c.bf16 %v447, %v447
    %v450 = vpack.c.bf16 %v448, %v448
    %v451 = vld [vmem:[#allocation11] sm:$0xff]
    %v452 = vld [vmem:[#allocation11 + $0x8] sm:$0xff]
    %v453 = vld [vmem:[#allocation11 + $0x10] sm:$0xff]
    %v454 = vld [vmem:[#allocation11 + $0x18] sm:$0xff]
    %v455 = vld [vmem:[#allocation11 + $0x20] sm:$0xff]
    %v456 = vld [vmem:[#allocation11 + $0x28] sm:$0xff]
    %v457 = vld [vmem:[#allocation11 + $0x30] sm:$0xff]
    %v458 = vld [vmem:[#allocation11 + $0x38] sm:$0xff]
    %v459 = vld [vmem:[#allocation11 + $0x40] sm:$0xff]
    %v460 = vld [vmem:[#allocation11 + $0x48] sm:$0xff]
    %v461 = vld [vmem:[#allocation11 + $0x50] sm:$0xff]
    %v462 = vld [vmem:[#allocation11 + $0x58] sm:$0xff]
    %v463 = vld [vmem:[#allocation11 + $0x60] sm:$0xff]
    %v464 = vld [vmem:[#allocation11 + $0x68] sm:$0xff]
    %v465 = vld [vmem:[#allocation11 + $0x70] sm:$0xff]
    %v466 = vld [vmem:[#allocation11 + $0x78] sm:$0xff]
    %v467 = vld [vmem:[#allocation11 + $0x80] sm:$0xff]
    %v468 = vld [vmem:[#allocation11 + $0x88] sm:$0xff]
    %v469 = vld [vmem:[#allocation11 + $0x90] sm:$0xff]
    %v470 = vld [vmem:[#allocation11 + $0x98] sm:$0xff]
    %v471 = vld [vmem:[#allocation11 + $0xa0] sm:$0xff]
    %v472 = vld [vmem:[#allocation11 + $0xa8] sm:$0xff]
    %v473 = vld [vmem:[#allocation11 + $0xb0] sm:$0xff]
    %v474 = vld [vmem:[#allocation11 + $0xb8] sm:$0xff]
    %v475 = vld [vmem:[#allocation11 + $0xc0] sm:$0xff]
    %v476 = vld [vmem:[#allocation11 + $0xc8] sm:$0xff]
    %v477 = vld [vmem:[#allocation11 + $0xd0] sm:$0xff]
    %v478 = vld [vmem:[#allocation11 + $0xd8] sm:$0xff]
    %v479 = vld [vmem:[#allocation11 + $0xe0] sm:$0xff]
    %v480 = vld [vmem:[#allocation11 + $0xe8] sm:$0xff]
    %v481 = vld [vmem:[#allocation11 + $0xf0] sm:$0xff]
    %v482 = vld [vmem:[#allocation11 + $0xf8] sm:$0xff]
    %v483 = vld [vmem:[#allocation11 + $0x100] sm:$0xff]
    %v484 = vld [vmem:[#allocation11 + $0x108] sm:$0xff]
    %v485 = vld [vmem:[#allocation11 + $0x110] sm:$0xff]
    %v486 = vld [vmem:[#allocation11 + $0x118] sm:$0xff]
    %v487 = vld [vmem:[#allocation11 + $0x120] sm:$0xff]
    %v488 = vld [vmem:[#allocation11 + $0x128] sm:$0xff]
    %v489 = vld [vmem:[#allocation11 + $0x130] sm:$0xff]
    %v490 = vld [vmem:[#allocation11 + $0x138] sm:$0xff]
    %v491 = vld [vmem:[#allocation11 + $0x140] sm:$0xff]
    %v492 = vld [vmem:[#allocation11 + $0x148] sm:$0xff]
    %v493 = vld [vmem:[#allocation11 + $0x150] sm:$0xff]
    %v494 = vld [vmem:[#allocation11 + $0x158] sm:$0xff]
    %v495 = vld [vmem:[#allocation11 + $0x160] sm:$0xff]
    %v496 = vld [vmem:[#allocation11 + $0x168] sm:$0xff]
    %v497 = vld [vmem:[#allocation11 + $0x170] sm:$0xff]
    %v498 = vld [vmem:[#allocation11 + $0x178] sm:$0xff]
    %v499 = vld [vmem:[#allocation11 + $0x180] sm:$0xff]
    %v500 = vld [vmem:[#allocation11 + $0x188] sm:$0xff]
    %v501 = vld [vmem:[#allocation11 + $0x190] sm:$0xff]
    %v502 = vld [vmem:[#allocation11 + $0x198] sm:$0xff]
    %v503 = vld [vmem:[#allocation11 + $0x1a0] sm:$0xff]
    %v504 = vld [vmem:[#allocation11 + $0x1a8] sm:$0xff]
    %v505 = vld [vmem:[#allocation11 + $0x1b0] sm:$0xff]
    %v506 = vld [vmem:[#allocation11 + $0x1b8] sm:$0xff]
    %v507 = vld [vmem:[#allocation11 + $0x1c0] sm:$0xff]
    %v508 = vld [vmem:[#allocation11 + $0x1c8] sm:$0xff]
    %v509 = vld [vmem:[#allocation11 + $0x1d0] sm:$0xff]
    %v510 = vld [vmem:[#allocation11 + $0x1d8] sm:$0xff]
    %v511 = vld [vmem:[#allocation11 + $0x1e0] sm:$0xff]
    %v512 = vld [vmem:[#allocation11 + $0x1e8] sm:$0xff]
    %v513 = vld [vmem:[#allocation11 + $0x1f0] sm:$0xff]
    %v514 = vld [vmem:[#allocation11 + $0x1f8] sm:$0xff]
    %v515 = vld [vmem:[#allocation13] sm:$0xf]
    %v517 = vlaneseq
    %v518 = vshrl.u32 %v517, 7
    %v519 = vsub.s32 0, %v518
    %v520 = vrot.slane %v515, %v519
    %v521 = vlaneseq
    %v522 = vshrl.u32 %v521, 7
    %v523 = vsub.s32 1, %v522
    %v524 = vrot.slane %v515, %v523
    %v525 = vlaneseq
    %v526 = vshrl.u32 %v525, 7
    %v527 = vsub.s32 2, %v526
    %v528 = vrot.slane %v515, %v527
    %v529 = vlaneseq
    %v530 = vshrl.u32 %v529, 7
    %v531 = vsub.s32 3, %v530
    %v532 = vrot.slane %v515, %v531
    %v601 = vunpack.c.l.b16 %v451
    %v602 = vunpack.c.h.b16 %v451
    %v603 = vunpack.c.l.b16 %v452
    %v604 = vunpack.c.h.b16 %v452
    %v605 = vunpack.c.l.b16 %v453
    %v606 = vunpack.c.h.b16 %v453
    %v607 = vunpack.c.l.b16 %v454
    %v608 = vunpack.c.h.b16 %v454
    %v609 = vunpack.c.l.b16 %v455
    %v610 = vunpack.c.h.b16 %v455
    %v611 = vunpack.c.l.b16 %v456
    %v612 = vunpack.c.h.b16 %v456
    %v613 = vunpack.c.l.b16 %v457
    %v614 = vunpack.c.h.b16 %v457
    %v615 = vunpack.c.l.b16 %v458
    %v616 = vunpack.c.h.b16 %v458
    %v617 = vunpack.c.l.b16 %v459
    %v618 = vunpack.c.h.b16 %v459
    %v619 = vunpack.c.l.b16 %v460
    %v620 = vunpack.c.h.b16 %v460
    %v621 = vunpack.c.l.b16 %v461
    %v622 = vunpack.c.h.b16 %v461
    %v623 = vunpack.c.l.b16 %v462
    %v624 = vunpack.c.h.b16 %v462
    %v625 = vunpack.c.l.b16 %v463
    %v626 = vunpack.c.h.b16 %v463
    %v627 = vunpack.c.l.b16 %v464
    %v628 = vunpack.c.h.b16 %v464
    %v629 = vunpack.c.l.b16 %v465
    %v630 = vunpack.c.h.b16 %v465
    %v631 = vunpack.c.l.b16 %v466
    %v632 = vunpack.c.h.b16 %v466
    %v633 = vunpack.c.l.b16 %v467
    %v634 = vunpack.c.h.b16 %v467
    %v635 = vunpack.c.l.b16 %v468
    %v636 = vunpack.c.h.b16 %v468
    %v637 = vunpack.c.l.b16 %v469
    %v638 = vunpack.c.h.b16 %v469
    %v639 = vunpack.c.l.b16 %v470
    %v640 = vunpack.c.h.b16 %v470
    %v641 = vunpack.c.l.b16 %v471
    %v642 = vunpack.c.h.b16 %v471
    %v643 = vunpack.c.l.b16 %v472
    %v644 = vunpack.c.h.b16 %v472
    %v645 = vunpack.c.l.b16 %v473
    %v646 = vunpack.c.h.b16 %v473
    %v647 = vunpack.c.l.b16 %v474
    %v648 = vunpack.c.h.b16 %v474
    %v649 = vunpack.c.l.b16 %v475
    %v650 = vunpack.c.h.b16 %v475
    %v651 = vunpack.c.l.b16 %v476
    %v652 = vunpack.c.h.b16 %v476
    %v653 = vunpack.c.l.b16 %v477
    %v654 = vunpack.c.h.b16 %v477
    %v655 = vunpack.c.l.b16 %v478
    %v656 = vunpack.c.h.b16 %v478
    %v657 = vunpack.c.l.b16 %v479
    %v658 = vunpack.c.h.b16 %v479
    %v659 = vunpack.c.l.b16 %v480
    %v660 = vunpack.c.h.b16 %v480
    %v661 = vunpack.c.l.b16 %v481
    %v662 = vunpack.c.h.b16 %v481
    %v663 = vunpack.c.l.b16 %v482
    %v664 = vunpack.c.h.b16 %v482
    %v665 = vunpack.c.l.b16 %v483
    %v666 = vunpack.c.h.b16 %v483
    %v667 = vunpack.c.l.b16 %v484
    %v668 = vunpack.c.h.b16 %v484
    %v669 = vunpack.c.l.b16 %v485
    %v670 = vunpack.c.h.b16 %v485
    %v671 = vunpack.c.l.b16 %v486
    %v672 = vunpack.c.h.b16 %v486
    %v673 = vunpack.c.l.b16 %v487
    %v674 = vunpack.c.h.b16 %v487
    %v675 = vunpack.c.l.b16 %v488
    %v676 = vunpack.c.h.b16 %v488
    %v677 = vunpack.c.l.b16 %v489
    %v678 = vunpack.c.h.b16 %v489
    %v679 = vunpack.c.l.b16 %v490
    %v680 = vunpack.c.h.b16 %v490
    %v681 = vunpack.c.l.b16 %v491
    %v682 = vunpack.c.h.b16 %v491
    %v683 = vunpack.c.l.b16 %v492
    %v684 = vunpack.c.h.b16 %v492
    %v685 = vunpack.c.l.b16 %v493
    %v686 = vunpack.c.h.b16 %v493
    %v687 = vunpack.c.l.b16 %v494
    %v688 = vunpack.c.h.b16 %v494
    %v689 = vunpack.c.l.b16 %v495
    %v690 = vunpack.c.h.b16 %v495
    %v691 = vunpack.c.l.b16 %v496
    %v692 = vunpack.c.h.b16 %v496
    %v693 = vunpack.c.l.b16 %v497
    %v694 = vunpack.c.h.b16 %v497
    %v695 = vunpack.c.l.b16 %v498
    %v696 = vunpack.c.h.b16 %v498
    %v697 = vunpack.c.l.b16 %v499
    %v698 = vunpack.c.h.b16 %v499
    %v699 = vunpack.c.l.b16 %v500
    %v700 = vunpack.c.h.b16 %v500
    %v701 = vunpack.c.l.b16 %v501
    %v702 = vunpack.c.h.b16 %v501
    %v703 = vunpack.c.l.b16 %v502
    %v704 = vunpack.c.h.b16 %v502
    %v705 = vunpack.c.l.b16 %v503
    %v706 = vunpack.c.h.b16 %v503
    %v707 = vunpack.c.l.b16 %v504
    %v708 = vunpack.c.h.b16 %v504
    %v709 = vunpack.c.l.b16 %v505
    %v710 = vunpack.c.h.b16 %v505
    %v711 = vunpack.c.l.b16 %v506
    %v712 = vunpack.c.h.b16 %v506
    %v713 = vunpack.c.l.b16 %v507
    %v714 = vunpack.c.h.b16 %v507
    %v715 = vunpack.c.l.b16 %v508
    %v716 = vunpack.c.h.b16 %v508
    %v717 = vunpack.c.l.b16 %v509
    %v718 = vunpack.c.h.b16 %v509
    %v719 = vunpack.c.l.b16 %v510
    %v720 = vunpack.c.h.b16 %v510
    %v721 = vunpack.c.l.b16 %v511
    %v722 = vunpack.c.h.b16 %v511
    %v723 = vunpack.c.l.b16 %v512
    %v724 = vunpack.c.h.b16 %v512
    %v725 = vunpack.c.l.b16 %v513
    %v726 = vunpack.c.h.b16 %v513
    %v727 = vunpack.c.l.b16 %v514
    %v728 = vunpack.c.h.b16 %v514
    %v729 = vpack.c.b16 %v605, %v601
    %v730 = vpack.c.b16 %v606, %v602
    %v731 = vpack.c.b16 %v607, %v603
    %v732 = vpack.c.b16 %v608, %v604
    %v733 = vpack.c.b16 %v613, %v609
    %v734 = vpack.c.b16 %v614, %v610
    %v735 = vpack.c.b16 %v615, %v611
    %v736 = vpack.c.b16 %v616, %v612
    %v737 = vpack.c.b16 %v621, %v617
    %v738 = vpack.c.b16 %v622, %v618
    %v739 = vpack.c.b16 %v623, %v619
    %v740 = vpack.c.b16 %v624, %v620
    %v741 = vpack.c.b16 %v629, %v625
    %v742 = vpack.c.b16 %v630, %v626
    %v743 = vpack.c.b16 %v631, %v627
    %v744 = vpack.c.b16 %v632, %v628
    %v745 = vpack.c.b16 %v637, %v633
    %v746 = vpack.c.b16 %v638, %v634
    %v747 = vpack.c.b16 %v639, %v635
    %v748 = vpack.c.b16 %v640, %v636
    %v749 = vpack.c.b16 %v645, %v641
    %v750 = vpack.c.b16 %v646, %v642
    %v751 = vpack.c.b16 %v647, %v643
    %v752 = vpack.c.b16 %v648, %v644
    %v753 = vpack.c.b16 %v653, %v649
    %v754 = vpack.c.b16 %v654, %v650
    %v755 = vpack.c.b16 %v655, %v651
    %v756 = vpack.c.b16 %v656, %v652
    %v757 = vpack.c.b16 %v661, %v657
    %v758 = vpack.c.b16 %v662, %v658
    %v759 = vpack.c.b16 %v663, %v659
    %v760 = vpack.c.b16 %v664, %v660
    %v761 = vpack.c.b16 %v669, %v665
    %v762 = vpack.c.b16 %v670, %v666
    %v763 = vpack.c.b16 %v671, %v667
    %v764 = vpack.c.b16 %v672, %v668
    %v765 = vpack.c.b16 %v677, %v673
    %v766 = vpack.c.b16 %v678, %v674
    %v767 = vpack.c.b16 %v679, %v675
    %v768 = vpack.c.b16 %v680, %v676
    %v769 = vpack.c.b16 %v685, %v681
    %v770 = vpack.c.b16 %v686, %v682
    %v771 = vpack.c.b16 %v687, %v683
    %v772 = vpack.c.b16 %v688, %v684
    %v773 = vpack.c.b16 %v693, %v689
    %v774 = vpack.c.b16 %v694, %v690
    %v775 = vpack.c.b16 %v695, %v691
    %v776 = vpack.c.b16 %v696, %v692
    %v777 = vpack.c.b16 %v701, %v697
    %v778 = vpack.c.b16 %v702, %v698
    %v779 = vpack.c.b16 %v703, %v699
    %v780 = vpack.c.b16 %v704, %v700
    %v781 = vpack.c.b16 %v709, %v705
    %v782 = vpack.c.b16 %v710, %v706
    %v783 = vpack.c.b16 %v711, %v707
    %v784 = vpack.c.b16 %v712, %v708
    %v785 = vpack.c.b16 %v717, %v713
    %v786 = vpack.c.b16 %v718, %v714
    %v787 = vpack.c.b16 %v719, %v715
    %v788 = vpack.c.b16 %v720, %v716
    %v789 = vpack.c.b16 %v725, %v721
    %v790 = vpack.c.b16 %v726, %v722
    %v791 = vpack.c.b16 %v727, %v723
    %v792 = vpack.c.b16 %v728, %v724
    %857 = vmatprep.subr.bf16.mxu0 %v730
    %858 = vmatpush1.bf16.msra.mxu0 %v729
    %859 = vmatprep.subr.bf16.mxu0 %v734
    %860 = vmatpush1.bf16.msra.mxu0 %v733
    %861 = vmatprep.subr.bf16.mxu0 %v738
    %862 = vmatpush1.bf16.msra.mxu0 %v737
    %863 = vmatprep.subr.bf16.mxu0 %v742
    %864 = vmatpush1.bf16.msra.mxu0 %v741
    %865 = vmatprep.subr.bf16.mxu0 %v746
    %866 = vmatpush1.bf16.msra.mxu0 %v745
    %867 = vmatprep.subr.bf16.mxu0 %v750
    %868 = vmatpush1.bf16.msra.mxu0 %v749
    %869 = vmatprep.subr.bf16.mxu0 %v754
    %870 = vmatpush1.bf16.msra.mxu0 %v753
    %871 = vmatprep.subr.bf16.mxu0 %v758
    %872 = vmatpush1.bf16.msra.mxu0 %v757
    %873 = vmatprep.subr.bf16.mxu0 %v762
    %874 = vmatpush1.bf16.msra.mxu0 %v761
    %875 = vmatprep.subr.bf16.mxu0 %v766
    %876 = vmatpush1.bf16.msra.mxu0 %v765
    %877 = vmatprep.subr.bf16.mxu0 %v770
    %878 = vmatpush1.bf16.msra.mxu0 %v769
    %879 = vmatprep.subr.bf16.mxu0 %v774
    %880 = vmatpush1.bf16.msra.mxu0 %v773
    %881 = vmatprep.subr.bf16.mxu0 %v778
    %882 = vmatpush1.bf16.msra.mxu0 %v777
    %883 = vmatprep.subr.bf16.mxu0 %v782
    %884 = vmatpush1.bf16.msra.mxu0 %v781
    %885 = vmatprep.subr.bf16.mxu0 %v786
    %886 = vmatpush1.bf16.msra.mxu0 %v785
    %887 = vmatprep.subr.bf16.mxu0 %v790
    %888 = vmatpush1.bf16.msra.mxu0 %v789
    %889 = vmatprep.mubr.bf16.mxu0 %v450
    %890 = vmatmul.mubr.bf16.gmra.mrb[0].mxu0 %v449
    %v891 = vpop.f32.mrb[0].mxu0
    %v892 = vadd.f32 %v520, %v891
    %v893 = vpop.f32.mrb[0].mxu0
    %v894 = vadd.f32 %v524, %v893
    %v895 = vpop.f32.mrb[0].mxu0
    %v896 = vpop.f32.mrb[0].mxu0
    %897 = vdwg.mxu0
    %898 = vmatprep.subr.bf16.mxu0 %v732
    %899 = vmatpush1.bf16.msra.mxu0 %v731
    %900 = vmatprep.subr.bf16.mxu0 %v736
    %901 = vmatpush1.bf16.msra.mxu0 %v735
    %902 = vmatprep.subr.bf16.mxu0 %v740
    %903 = vmatpush1.bf16.msra.mxu0 %v739
    %904 = vmatprep.subr.bf16.mxu0 %v744
    %905 = vmatpush1.bf16.msra.mxu0 %v743
    %906 = vmatprep.subr.bf16.mxu0 %v748
    %907 = vmatpush1.bf16.msra.mxu0 %v747
    %908 = vmatprep.subr.bf16.mxu0 %v752
    %909 = vmatpush1.bf16.msra.mxu0 %v751
    %910 = vmatprep.subr.bf16.mxu0 %v756
    %911 = vmatpush1.bf16.msra.mxu0 %v755
    %912 = vmatprep.subr.bf16.mxu0 %v760
    %913 = vmatpush1.bf16.msra.mxu0 %v759
    %914 = vmatprep.subr.bf16.mxu0 %v764
    %915 = vmatpush1.bf16.msra.mxu0 %v763
    %916 = vmatprep.subr.bf16.mxu0 %v768
    %917 = vmatpush1.bf16.msra.mxu0 %v767
    %918 = vmatprep.subr.bf16.mxu0 %v772
    %919 = vmatpush1.bf16.msra.mxu0 %v771
    %920 = vmatprep.subr.bf16.mxu0 %v776
    %921 = vmatpush1.bf16.msra.mxu0 %v775
    %922 = vmatprep.subr.bf16.mxu0 %v780
    %923 = vmatpush1.bf16.msra.mxu0 %v779
    %924 = vmatprep.subr.bf16.mxu0 %v784
    %925 = vmatpush1.bf16.msra.mxu0 %v783
    %926 = vmatprep.subr.bf16.mxu0 %v788
    %927 = vmatpush1.bf16.msra.mxu0 %v787
    %928 = vmatprep.subr.bf16.mxu0 %v792
    %929 = vmatpush1.bf16.msra.mxu0 %v791
    %930 = vmatprep.mubr.bf16.mxu0 %v450
    %931 = vmatmul.mubr.bf16.gmra.mrb[0].mxu0 %v449
    %v932 = vpop.f32.mrb[0].mxu0
    %v933 = vadd.f32 %v528, %v932
    %v934 = vpop.f32.mrb[0].mxu0
    %v935 = vadd.f32 %v532, %v934
    %v936 = vpop.f32.mrb[0].mxu0
    %v937 = vpop.f32.mrb[0].mxu0
    %938 = vdwg.mxu0
    %vm939 = vcmp.gt.f32.partialorder %v892, 0.0
    %vm940 = vcmp.gt.f32.partialorder %v894, 0.0
    %vm941 = vcmp.gt.f32.partialorder %v933, 0.0
    %vm942 = vcmp.gt.f32.partialorder %v935, 0.0
    %v943 = vmul.f32 %v892, 0.2
    %v944 = vmul.f32 %v894, 0.2
    %v945 = vmul.f32 %v933, 0.2
    %v946 = vmul.f32 %v935, 0.2
    %v947 = vsel %vm939, %v892, %v943
    %v948 = vsel %vm940, %v894, %v944
    %v949 = vsel %vm941, %v933, %v945
    %v950 = vsel %vm942, %v935, %v946
    %v951 = vpack.c.bf16 %v947, %v947
    %v952 = vpack.c.bf16 %v948, %v948
    %v953 = vpack.c.bf16 %v949, %v949
    %v954 = vpack.c.bf16 %v950, %v950
    %v955 = vld [vmem:[#allocation14] sm:$0xff]
    %v956 = vld [vmem:[#allocation14 + $0x8] sm:$0xff]
    %v957 = vld [vmem:[#allocation14 + $0x10] sm:$0xff]
    %v958 = vld [vmem:[#allocation14 + $0x18] sm:$0xff]
    %v959 = vld [vmem:[#allocation14 + $0x20] sm:$0xff]
    %v960 = vld [vmem:[#allocation14 + $0x28] sm:$0xff]
    %v961 = vld [vmem:[#allocation14 + $0x30] sm:$0xff]
    %v962 = vld [vmem:[#allocation14 + $0x38] sm:$0xff]
    %v963 = vld [vmem:[#allocation14 + $0x40] sm:$0xff]
    %v964 = vld [vmem:[#allocation14 + $0x48] sm:$0xff]
    %v965 = vld [vmem:[#allocation14 + $0x50] sm:$0xff]
    %v966 = vld [vmem:[#allocation14 + $0x58] sm:$0xff]
    %v967 = vld [vmem:[#allocation14 + $0x60] sm:$0xff]
    %v968 = vld [vmem:[#allocation14 + $0x68] sm:$0xff]
    %v969 = vld [vmem:[#allocation14 + $0x70] sm:$0xff]
    %v970 = vld [vmem:[#allocation14 + $0x78] sm:$0xff]
    %v971 = vld [vmem:[#allocation14 + $0x80] sm:$0xff]
    %v972 = vld [vmem:[#allocation14 + $0x88] sm:$0xff]
    %v973 = vld [vmem:[#allocation14 + $0x90] sm:$0xff]
    %v974 = vld [vmem:[#allocation14 + $0x98] sm:$0xff]
    %v975 = vld [vmem:[#allocation14 + $0xa0] sm:$0xff]
    %v976 = vld [vmem:[#allocation14 + $0xa8] sm:$0xff]
    %v977 = vld [vmem:[#allocation14 + $0xb0] sm:$0xff]
    %v978 = vld [vmem:[#allocation14 + $0xb8] sm:$0xff]
    %v979 = vld [vmem:[#allocation14 + $0xc0] sm:$0xff]
    %v980 = vld [vmem:[#allocation14 + $0xc8] sm:$0xff]
    %v981 = vld [vmem:[#allocation14 + $0xd0] sm:$0xff]
    %v982 = vld [vmem:[#allocation14 + $0xd8] sm:$0xff]
    %v983 = vld [vmem:[#allocation14 + $0xe0] sm:$0xff]
    %v984 = vld [vmem:[#allocation14 + $0xe8] sm:$0xff]
    %v985 = vld [vmem:[#allocation14 + $0xf0] sm:$0xff]
    %v986 = vld [vmem:[#allocation14 + $0xf8] sm:$0xff]
    %v987 = vld [vmem:[#allocation14 + $0x100] sm:$0xff]
    %v988 = vld [vmem:[#allocation14 + $0x108] sm:$0xff]
    %v989 = vld [vmem:[#allocation14 + $0x110] sm:$0xff]
    %v990 = vld [vmem:[#allocation14 + $0x118] sm:$0xff]
    %v991 = vld [vmem:[#allocation14 + $0x120] sm:$0xff]
    %v992 = vld [vmem:[#allocation14 + $0x128] sm:$0xff]
    %v993 = vld [vmem:[#allocation14 + $0x130] sm:$0xff]
    %v994 = vld [vmem:[#allocation14 + $0x138] sm:$0xff]
    %v995 = vld [vmem:[#allocation14 + $0x140] sm:$0xff]
    %v996 = vld [vmem:[#allocation14 + $0x148] sm:$0xff]
    %v997 = vld [vmem:[#allocation14 + $0x150] sm:$0xff]
    %v998 = vld [vmem:[#allocation14 + $0x158] sm:$0xff]
    %v999 = vld [vmem:[#allocation14 + $0x160] sm:$0xff]
    %v1000 = vld [vmem:[#allocation14 + $0x168] sm:$0xff]
    %v1001 = vld [vmem:[#allocation14 + $0x170] sm:$0xff]
    %v1002 = vld [vmem:[#allocation14 + $0x178] sm:$0xff]
    %v1003 = vld [vmem:[#allocation14 + $0x180] sm:$0xff]
    %v1004 = vld [vmem:[#allocation14 + $0x188] sm:$0xff]
    %v1005 = vld [vmem:[#allocation14 + $0x190] sm:$0xff]
    %v1006 = vld [vmem:[#allocation14 + $0x198] sm:$0xff]
    %v1007 = vld [vmem:[#allocation14 + $0x1a0] sm:$0xff]
    %v1008 = vld [vmem:[#allocation14 + $0x1a8] sm:$0xff]
    %v1009 = vld [vmem:[#allocation14 + $0x1b0] sm:$0xff]
    %v1010 = vld [vmem:[#allocation14 + $0x1b8] sm:$0xff]
    %v1011 = vld [vmem:[#allocation14 + $0x1c0] sm:$0xff]
    %v1012 = vld [vmem:[#allocation14 + $0x1c8] sm:$0xff]
    %v1013 = vld [vmem:[#allocation14 + $0x1d0] sm:$0xff]
    %v1014 = vld [vmem:[#allocation14 + $0x1d8] sm:$0xff]
    %v1015 = vld [vmem:[#allocation14 + $0x1e0] sm:$0xff]
    %v1016 = vld [vmem:[#allocation14 + $0x1e8] sm:$0xff]
    %v1017 = vld [vmem:[#allocation14 + $0x1f0] sm:$0xff]
    %v1018 = vld [vmem:[#allocation14 + $0x1f8] sm:$0xff]
    %v1019 = vld [vmem:[#allocation14 + $0x200] sm:$0xff]
    %v1020 = vld [vmem:[#allocation14 + $0x208] sm:$0xff]
    %v1021 = vld [vmem:[#allocation14 + $0x210] sm:$0xff]
    %v1022 = vld [vmem:[#allocation14 + $0x218] sm:$0xff]
    %v1023 = vld [vmem:[#allocation14 + $0x220] sm:$0xff]
    %v1024 = vld [vmem:[#allocation14 + $0x228] sm:$0xff]
    %v1025 = vld [vmem:[#allocation14 + $0x230] sm:$0xff]
    %v1026 = vld [vmem:[#allocation14 + $0x238] sm:$0xff]
    %v1027 = vld [vmem:[#allocation14 + $0x240] sm:$0xff]
    %v1028 = vld [vmem:[#allocation14 + $0x248] sm:$0xff]
    %v1029 = vld [vmem:[#allocation14 + $0x250] sm:$0xff]
    %v1030 = vld [vmem:[#allocation14 + $0x258] sm:$0xff]
    %v1031 = vld [vmem:[#allocation14 + $0x260] sm:$0xff]
    %v1032 = vld [vmem:[#allocation14 + $0x268] sm:$0xff]
    %v1033 = vld [vmem:[#allocation14 + $0x270] sm:$0xff]
    %v1034 = vld [vmem:[#allocation14 + $0x278] sm:$0xff]
    %v1035 = vld [vmem:[#allocation14 + $0x280] sm:$0xff]
    %v1036 = vld [vmem:[#allocation14 + $0x288] sm:$0xff]
    %v1037 = vld [vmem:[#allocation14 + $0x290] sm:$0xff]
    %v1038 = vld [vmem:[#allocation14 + $0x298] sm:$0xff]
    %v1039 = vld [vmem:[#allocation14 + $0x2a0] sm:$0xff]
    %v1040 = vld [vmem:[#allocation14 + $0x2a8] sm:$0xff]
    %v1041 = vld [vmem:[#allocation14 + $0x2b0] sm:$0xff]
    %v1042 = vld [vmem:[#allocation14 + $0x2b8] sm:$0xff]
    %v1043 = vld [vmem:[#allocation14 + $0x2c0] sm:$0xff]
    %v1044 = vld [vmem:[#allocation14 + $0x2c8] sm:$0xff]
    %v1045 = vld [vmem:[#allocation14 + $0x2d0] sm:$0xff]
    %v1046 = vld [vmem:[#allocation14 + $0x2d8] sm:$0xff]
    %v1047 = vld [vmem:[#allocation14 + $0x2e0] sm:$0xff]
    %v1048 = vld [vmem:[#allocation14 + $0x2e8] sm:$0xff]
    %v1049 = vld [vmem:[#allocation14 + $0x2f0] sm:$0xff]
    %v1050 = vld [vmem:[#allocation14 + $0x2f8] sm:$0xff]
    %v1051 = vld [vmem:[#allocation14 + $0x300] sm:$0xff]
    %v1052 = vld [vmem:[#allocation14 + $0x308] sm:$0xff]
    %v1053 = vld [vmem:[#allocation14 + $0x310] sm:$0xff]
    %v1054 = vld [vmem:[#allocation14 + $0x318] sm:$0xff]
    %v1055 = vld [vmem:[#allocation14 + $0x320] sm:$0xff]
    %v1056 = vld [vmem:[#allocation14 + $0x328] sm:$0xff]
    %v1057 = vld [vmem:[#allocation14 + $0x330] sm:$0xff]
    %v1058 = vld [vmem:[#allocation14 + $0x338] sm:$0xff]
    %v1059 = vld [vmem:[#allocation14 + $0x340] sm:$0xff]
    %v1060 = vld [vmem:[#allocation14 + $0x348] sm:$0xff]
    %v1061 = vld [vmem:[#allocation14 + $0x350] sm:$0xff]
    %v1062 = vld [vmem:[#allocation14 + $0x358] sm:$0xff]
    %v1063 = vld [vmem:[#allocation14 + $0x360] sm:$0xff]
    %v1064 = vld [vmem:[#allocation14 + $0x368] sm:$0xff]
    %v1065 = vld [vmem:[#allocation14 + $0x370] sm:$0xff]
    %v1066 = vld [vmem:[#allocation14 + $0x378] sm:$0xff]
    %v1067 = vld [vmem:[#allocation14 + $0x380] sm:$0xff]
    %v1068 = vld [vmem:[#allocation14 + $0x388] sm:$0xff]
    %v1069 = vld [vmem:[#allocation14 + $0x390] sm:$0xff]
    %v1070 = vld [vmem:[#allocation14 + $0x398] sm:$0xff]
    %v1071 = vld [vmem:[#allocation14 + $0x3a0] sm:$0xff]
    %v1072 = vld [vmem:[#allocation14 + $0x3a8] sm:$0xff]
    %v1073 = vld [vmem:[#allocation14 + $0x3b0] sm:$0xff]
    %v1074 = vld [vmem:[#allocation14 + $0x3b8] sm:$0xff]
    %v1075 = vld [vmem:[#allocation14 + $0x3c0] sm:$0xff]
    %v1076 = vld [vmem:[#allocation14 + $0x3c8] sm:$0xff]
    %v1077 = vld [vmem:[#allocation14 + $0x3d0] sm:$0xff]
    %v1078 = vld [vmem:[#allocation14 + $0x3d8] sm:$0xff]
    %v1079 = vld [vmem:[#allocation14 + $0x3e0] sm:$0xff]
    %v1080 = vld [vmem:[#allocation14 + $0x3e8] sm:$0xff]
    %v1081 = vld [vmem:[#allocation14 + $0x3f0] sm:$0xff]
    %v1082 = vld [vmem:[#allocation14 + $0x3f8] sm:$0xff]
    %v1083 = vld [vmem:[#allocation14 + $0x400] sm:$0xff]
    %v1084 = vld [vmem:[#allocation14 + $0x408] sm:$0xff]
    %v1085 = vld [vmem:[#allocation14 + $0x410] sm:$0xff]
    %v1086 = vld [vmem:[#allocation14 + $0x418] sm:$0xff]
    %v1087 = vld [vmem:[#allocation14 + $0x420] sm:$0xff]
    %v1088 = vld [vmem:[#allocation14 + $0x428] sm:$0xff]
    %v1089 = vld [vmem:[#allocation14 + $0x430] sm:$0xff]
    %v1090 = vld [vmem:[#allocation14 + $0x438] sm:$0xff]
    %v1091 = vld [vmem:[#allocation14 + $0x440] sm:$0xff]
    %v1092 = vld [vmem:[#allocation14 + $0x448] sm:$0xff]
    %v1093 = vld [vmem:[#allocation14 + $0x450] sm:$0xff]
    %v1094 = vld [vmem:[#allocation14 + $0x458] sm:$0xff]
    %v1095 = vld [vmem:[#allocation14 + $0x460] sm:$0xff]
    %v1096 = vld [vmem:[#allocation14 + $0x468] sm:$0xff]
    %v1097 = vld [vmem:[#allocation14 + $0x470] sm:$0xff]
    %v1098 = vld [vmem:[#allocation14 + $0x478] sm:$0xff]
    %v1099 = vld [vmem:[#allocation14 + $0x480] sm:$0xff]
    %v1100 = vld [vmem:[#allocation14 + $0x488] sm:$0xff]
    %v1101 = vld [vmem:[#allocation14 + $0x490] sm:$0xff]
    %v1102 = vld [vmem:[#allocation14 + $0x498] sm:$0xff]
    %v1103 = vld [vmem:[#allocation14 + $0x4a0] sm:$0xff]
    %v1104 = vld [vmem:[#allocation14 + $0x4a8] sm:$0xff]
    %v1105 = vld [vmem:[#allocation14 + $0x4b0] sm:$0xff]
    %v1106 = vld [vmem:[#allocation14 + $0x4b8] sm:$0xff]
    %v1107 = vld [vmem:[#allocation14 + $0x4c0] sm:$0xff]
    %v1108 = vld [vmem:[#allocation14 + $0x4c8] sm:$0xff]
    %v1109 = vld [vmem:[#allocation14 + $0x4d0] sm:$0xff]
    %v1110 = vld [vmem:[#allocation14 + $0x4d8] sm:$0xff]
    %v1111 = vld [vmem:[#allocation14 + $0x4e0] sm:$0xff]
    %v1112 = vld [vmem:[#allocation14 + $0x4e8] sm:$0xff]
    %v1113 = vld [vmem:[#allocation14 + $0x4f0] sm:$0xff]
    %v1114 = vld [vmem:[#allocation14 + $0x4f8] sm:$0xff]
    %v1115 = vld [vmem:[#allocation14 + $0x500] sm:$0xff]
    %v1116 = vld [vmem:[#allocation14 + $0x508] sm:$0xff]
    %v1117 = vld [vmem:[#allocation14 + $0x510] sm:$0xff]
    %v1118 = vld [vmem:[#allocation14 + $0x518] sm:$0xff]
    %v1119 = vld [vmem:[#allocation14 + $0x520] sm:$0xff]
    %v1120 = vld [vmem:[#allocation14 + $0x528] sm:$0xff]
    %v1121 = vld [vmem:[#allocation14 + $0x530] sm:$0xff]
    %v1122 = vld [vmem:[#allocation14 + $0x538] sm:$0xff]
    %v1123 = vld [vmem:[#allocation14 + $0x540] sm:$0xff]
    %v1124 = vld [vmem:[#allocation14 + $0x548] sm:$0xff]
    %v1125 = vld [vmem:[#allocation14 + $0x550] sm:$0xff]
    %v1126 = vld [vmem:[#allocation14 + $0x558] sm:$0xff]
    %v1127 = vld [vmem:[#allocation14 + $0x560] sm:$0xff]
    %v1128 = vld [vmem:[#allocation14 + $0x568] sm:$0xff]
    %v1129 = vld [vmem:[#allocation14 + $0x570] sm:$0xff]
    %v1130 = vld [vmem:[#allocation14 + $0x578] sm:$0xff]
    %v1131 = vld [vmem:[#allocation14 + $0x580] sm:$0xff]
    %v1132 = vld [vmem:[#allocation14 + $0x588] sm:$0xff]
    %v1133 = vld [vmem:[#allocation14 + $0x590] sm:$0xff]
    %v1134 = vld [vmem:[#allocation14 + $0x598] sm:$0xff]
    %v1135 = vld [vmem:[#allocation14 + $0x5a0] sm:$0xff]
    %v1136 = vld [vmem:[#allocation14 + $0x5a8] sm:$0xff]
    %v1137 = vld [vmem:[#allocation14 + $0x5b0] sm:$0xff]
    %v1138 = vld [vmem:[#allocation14 + $0x5b8] sm:$0xff]
    %v1139 = vld [vmem:[#allocation14 + $0x5c0] sm:$0xff]
    %v1140 = vld [vmem:[#allocation14 + $0x5c8] sm:$0xff]
    %v1141 = vld [vmem:[#allocation14 + $0x5d0] sm:$0xff]
    %v1142 = vld [vmem:[#allocation14 + $0x5d8] sm:$0xff]
    %v1143 = vld [vmem:[#allocation14 + $0x5e0] sm:$0xff]
    %v1144 = vld [vmem:[#allocation14 + $0x5e8] sm:$0xff]
    %v1145 = vld [vmem:[#allocation14 + $0x5f0] sm:$0xff]
    %v1146 = vld [vmem:[#allocation14 + $0x5f8] sm:$0xff]
    %v1147 = vld [vmem:[#allocation14 + $0x600] sm:$0xff]
    %v1148 = vld [vmem:[#allocation14 + $0x608] sm:$0xff]
    %v1149 = vld [vmem:[#allocation14 + $0x610] sm:$0xff]
    %v1150 = vld [vmem:[#allocation14 + $0x618] sm:$0xff]
    %v1151 = vld [vmem:[#allocation14 + $0x620] sm:$0xff]
    %v1152 = vld [vmem:[#allocation14 + $0x628] sm:$0xff]
    %v1153 = vld [vmem:[#allocation14 + $0x630] sm:$0xff]
    %v1154 = vld [vmem:[#allocation14 + $0x638] sm:$0xff]
    %v1155 = vld [vmem:[#allocation14 + $0x640] sm:$0xff]
    %v1156 = vld [vmem:[#allocation14 + $0x648] sm:$0xff]
    %v1157 = vld [vmem:[#allocation14 + $0x650] sm:$0xff]
    %v1158 = vld [vmem:[#allocation14 + $0x658] sm:$0xff]
    %v1159 = vld [vmem:[#allocation14 + $0x660] sm:$0xff]
    %v1160 = vld [vmem:[#allocation14 + $0x668] sm:$0xff]
    %v1161 = vld [vmem:[#allocation14 + $0x670] sm:$0xff]
    %v1162 = vld [vmem:[#allocation14 + $0x678] sm:$0xff]
    %v1163 = vld [vmem:[#allocation14 + $0x680] sm:$0xff]
    %v1164 = vld [vmem:[#allocation14 + $0x688] sm:$0xff]
    %v1165 = vld [vmem:[#allocation14 + $0x690] sm:$0xff]
    %v1166 = vld [vmem:[#allocation14 + $0x698] sm:$0xff]
    %v1167 = vld [vmem:[#allocation14 + $0x6a0] sm:$0xff]
    %v1168 = vld [vmem:[#allocation14 + $0x6a8] sm:$0xff]
    %v1169 = vld [vmem:[#allocation14 + $0x6b0] sm:$0xff]
    %v1170 = vld [vmem:[#allocation14 + $0x6b8] sm:$0xff]
    %v1171 = vld [vmem:[#allocation14 + $0x6c0] sm:$0xff]
    %v1172 = vld [vmem:[#allocation14 + $0x6c8] sm:$0xff]
    %v1173 = vld [vmem:[#allocation14 + $0x6d0] sm:$0xff]
    %v1174 = vld [vmem:[#allocation14 + $0x6d8] sm:$0xff]
    %v1175 = vld [vmem:[#allocation14 + $0x6e0] sm:$0xff]
    %v1176 = vld [vmem:[#allocation14 + $0x6e8] sm:$0xff]
    %v1177 = vld [vmem:[#allocation14 + $0x6f0] sm:$0xff]
    %v1178 = vld [vmem:[#allocation14 + $0x6f8] sm:$0xff]
    %v1179 = vld [vmem:[#allocation14 + $0x700] sm:$0xff]
    %v1180 = vld [vmem:[#allocation14 + $0x708] sm:$0xff]
    %v1181 = vld [vmem:[#allocation14 + $0x710] sm:$0xff]
    %v1182 = vld [vmem:[#allocation14 + $0x718] sm:$0xff]
    %v1183 = vld [vmem:[#allocation14 + $0x720] sm:$0xff]
    %v1184 = vld [vmem:[#allocation14 + $0x728] sm:$0xff]
    %v1185 = vld [vmem:[#allocation14 + $0x730] sm:$0xff]
    %v1186 = vld [vmem:[#allocation14 + $0x738] sm:$0xff]
    %v1187 = vld [vmem:[#allocation14 + $0x740] sm:$0xff]
    %v1188 = vld [vmem:[#allocation14 + $0x748] sm:$0xff]
    %v1189 = vld [vmem:[#allocation14 + $0x750] sm:$0xff]
    %v1190 = vld [vmem:[#allocation14 + $0x758] sm:$0xff]
    %v1191 = vld [vmem:[#allocation14 + $0x760] sm:$0xff]
    %v1192 = vld [vmem:[#allocation14 + $0x768] sm:$0xff]
    %v1193 = vld [vmem:[#allocation14 + $0x770] sm:$0xff]
    %v1194 = vld [vmem:[#allocation14 + $0x778] sm:$0xff]
    %v1195 = vld [vmem:[#allocation14 + $0x780] sm:$0xff]
    %v1196 = vld [vmem:[#allocation14 + $0x788] sm:$0xff]
    %v1197 = vld [vmem:[#allocation14 + $0x790] sm:$0xff]
    %v1198 = vld [vmem:[#allocation14 + $0x798] sm:$0xff]
    %v1199 = vld [vmem:[#allocation14 + $0x7a0] sm:$0xff]
    %v1200 = vld [vmem:[#allocation14 + $0x7a8] sm:$0xff]
    %v1201 = vld [vmem:[#allocation14 + $0x7b0] sm:$0xff]
    %v1202 = vld [vmem:[#allocation14 + $0x7b8] sm:$0xff]
    %v1203 = vld [vmem:[#allocation14 + $0x7c0] sm:$0xff]
    %v1204 = vld [vmem:[#allocation14 + $0x7c8] sm:$0xff]
    %v1205 = vld [vmem:[#allocation14 + $0x7d0] sm:$0xff]
    %v1206 = vld [vmem:[#allocation14 + $0x7d8] sm:$0xff]
    %v1207 = vld [vmem:[#allocation14 + $0x7e0] sm:$0xff]
    %v1208 = vld [vmem:[#allocation14 + $0x7e8] sm:$0xff]
    %v1209 = vld [vmem:[#allocation14 + $0x7f0] sm:$0xff]
    %v1210 = vld [vmem:[#allocation14 + $0x7f8] sm:$0xff]
    %v1211 = vld [vmem:[#allocation16] sm:$0xff]
    %v1213 = vlaneseq
    %v1214 = vshrl.u32 %v1213, 7
    %v1215 = vsub.s32 0, %v1214
    %v1216 = vrot.slane %v1211, %v1215
    %v1217 = vlaneseq
    %v1218 = vshrl.u32 %v1217, 7
    %v1219 = vsub.s32 1, %v1218
    %v1220 = vrot.slane %v1211, %v1219
    %v1221 = vlaneseq
    %v1222 = vshrl.u32 %v1221, 7
    %v1223 = vsub.s32 2, %v1222
    %v1224 = vrot.slane %v1211, %v1223
    %v1225 = vlaneseq
    %v1226 = vshrl.u32 %v1225, 7
    %v1227 = vsub.s32 3, %v1226
    %v1228 = vrot.slane %v1211, %v1227
    %v1229 = vlaneseq
    %v1230 = vshrl.u32 %v1229, 7
    %v1231 = vsub.s32 4, %v1230
    %v1232 = vrot.slane %v1211, %v1231
    %v1233 = vlaneseq
    %v1234 = vshrl.u32 %v1233, 7
    %v1235 = vsub.s32 5, %v1234
    %v1236 = vrot.slane %v1211, %v1235
    %v1237 = vlaneseq
    %v1238 = vshrl.u32 %v1237, 7
    %v1239 = vsub.s32 6, %v1238
    %v1240 = vrot.slane %v1211, %v1239
    %v1241 = vlaneseq
    %v1242 = vshrl.u32 %v1241, 7
    %v1243 = vsub.s32 7, %v1242
    %v1244 = vrot.slane %v1211, %v1243
    %v1509 = vunpack.c.l.b16 %v955
    %v1510 = vunpack.c.h.b16 %v955
    %v1511 = vunpack.c.l.b16 %v956
    %v1512 = vunpack.c.h.b16 %v956
    %v1513 = vunpack.c.l.b16 %v957
    %v1514 = vunpack.c.h.b16 %v957
    %v1515 = vunpack.c.l.b16 %v958
    %v1516 = vunpack.c.h.b16 %v958
    %v1517 = vunpack.c.l.b16 %v959
    %v1518 = vunpack.c.h.b16 %v959
    %v1519 = vunpack.c.l.b16 %v960
    %v1520 = vunpack.c.h.b16 %v960
    %v1521 = vunpack.c.l.b16 %v961
    %v1522 = vunpack.c.h.b16 %v961
    %v1523 = vunpack.c.l.b16 %v962
    %v1524 = vunpack.c.h.b16 %v962
    %v1525 = vunpack.c.l.b16 %v963
    %v1526 = vunpack.c.h.b16 %v963
    %v1527 = vunpack.c.l.b16 %v964
    %v1528 = vunpack.c.h.b16 %v964
    %v1529 = vunpack.c.l.b16 %v965
    %v1530 = vunpack.c.h.b16 %v965
    %v1531 = vunpack.c.l.b16 %v966
    %v1532 = vunpack.c.h.b16 %v966
    %v1533 = vunpack.c.l.b16 %v967
    %v1534 = vunpack.c.h.b16 %v967
    %v1535 = vunpack.c.l.b16 %v968
    %v1536 = vunpack.c.h.b16 %v968
    %v1537 = vunpack.c.l.b16 %v969
    %v1538 = vunpack.c.h.b16 %v969
    %v1539 = vunpack.c.l.b16 %v970
    %v1540 = vunpack.c.h.b16 %v970
    %v1541 = vunpack.c.l.b16 %v971
    %v1542 = vunpack.c.h.b16 %v971
    %v1543 = vunpack.c.l.b16 %v972
    %v1544 = vunpack.c.h.b16 %v972
    %v1545 = vunpack.c.l.b16 %v973
    %v1546 = vunpack.c.h.b16 %v973
    %v1547 = vunpack.c.l.b16 %v974
    %v1548 = vunpack.c.h.b16 %v974
    %v1549 = vunpack.c.l.b16 %v975
    %v1550 = vunpack.c.h.b16 %v975
    %v1551 = vunpack.c.l.b16 %v976
    %v1552 = vunpack.c.h.b16 %v976
    %v1553 = vunpack.c.l.b16 %v977
    %v1554 = vunpack.c.h.b16 %v977
    %v1555 = vunpack.c.l.b16 %v978
    %v1556 = vunpack.c.h.b16 %v978
    %v1557 = vunpack.c.l.b16 %v979
    %v1558 = vunpack.c.h.b16 %v979
    %v1559 = vunpack.c.l.b16 %v980
    %v1560 = vunpack.c.h.b16 %v980
    %v1561 = vunpack.c.l.b16 %v981
    %v1562 = vunpack.c.h.b16 %v981
    %v1563 = vunpack.c.l.b16 %v982
    %v1564 = vunpack.c.h.b16 %v982
    %v1565 = vunpack.c.l.b16 %v983
    %v1566 = vunpack.c.h.b16 %v983
    %v1567 = vunpack.c.l.b16 %v984
    %v1568 = vunpack.c.h.b16 %v984
    %v1569 = vunpack.c.l.b16 %v985
    %v1570 = vunpack.c.h.b16 %v985
    %v1571 = vunpack.c.l.b16 %v986
    %v1572 = vunpack.c.h.b16 %v986
    %v1573 = vunpack.c.l.b16 %v987
    %v1574 = vunpack.c.h.b16 %v987
    %v1575 = vunpack.c.l.b16 %v988
    %v1576 = vunpack.c.h.b16 %v988
    %v1577 = vunpack.c.l.b16 %v989
    %v1578 = vunpack.c.h.b16 %v989
    %v1579 = vunpack.c.l.b16 %v990
    %v1580 = vunpack.c.h.b16 %v990
    %v1581 = vunpack.c.l.b16 %v991
    %v1582 = vunpack.c.h.b16 %v991
    %v1583 = vunpack.c.l.b16 %v992
    %v1584 = vunpack.c.h.b16 %v992
    %v1585 = vunpack.c.l.b16 %v993
    %v1586 = vunpack.c.h.b16 %v993
    %v1587 = vunpack.c.l.b16 %v994
    %v1588 = vunpack.c.h.b16 %v994
    %v1589 = vunpack.c.l.b16 %v995
    %v1590 = vunpack.c.h.b16 %v995
    %v1591 = vunpack.c.l.b16 %v996
    %v1592 = vunpack.c.h.b16 %v996
    %v1593 = vunpack.c.l.b16 %v997
    %v1594 = vunpack.c.h.b16 %v997
    %v1595 = vunpack.c.l.b16 %v998
    %v1596 = vunpack.c.h.b16 %v998
    %v1597 = vunpack.c.l.b16 %v999
    %v1598 = vunpack.c.h.b16 %v999
    %v1599 = vunpack.c.l.b16 %v1000
    %v1600 = vunpack.c.h.b16 %v1000
    %v1601 = vunpack.c.l.b16 %v1001
    %v1602 = vunpack.c.h.b16 %v1001
    %v1603 = vunpack.c.l.b16 %v1002
    %v1604 = vunpack.c.h.b16 %v1002
    %v1605 = vunpack.c.l.b16 %v1003
    %v1606 = vunpack.c.h.b16 %v1003
    %v1607 = vunpack.c.l.b16 %v1004
    %v1608 = vunpack.c.h.b16 %v1004
    %v1609 = vunpack.c.l.b16 %v1005
    %v1610 = vunpack.c.h.b16 %v1005
    %v1611 = vunpack.c.l.b16 %v1006
    %v1612 = vunpack.c.h.b16 %v1006
    %v1613 = vunpack.c.l.b16 %v1007
    %v1614 = vunpack.c.h.b16 %v1007
    %v1615 = vunpack.c.l.b16 %v1008
    %v1616 = vunpack.c.h.b16 %v1008
    %v1617 = vunpack.c.l.b16 %v1009
    %v1618 = vunpack.c.h.b16 %v1009
    %v1619 = vunpack.c.l.b16 %v1010
    %v1620 = vunpack.c.h.b16 %v1010
    %v1621 = vunpack.c.l.b16 %v1011
    %v1622 = vunpack.c.h.b16 %v1011
    %v1623 = vunpack.c.l.b16 %v1012
    %v1624 = vunpack.c.h.b16 %v1012
    %v1625 = vunpack.c.l.b16 %v1013
    %v1626 = vunpack.c.h.b16 %v1013
    %v1627 = vunpack.c.l.b16 %v1014
    %v1628 = vunpack.c.h.b16 %v1014
    %v1629 = vunpack.c.l.b16 %v1015
    %v1630 = vunpack.c.h.b16 %v1015
    %v1631 = vunpack.c.l.b16 %v1016
    %v1632 = vunpack.c.h.b16 %v1016
    %v1633 = vunpack.c.l.b16 %v1017
    %v1634 = vunpack.c.h.b16 %v1017
    %v1635 = vunpack.c.l.b16 %v1018
    %v1636 = vunpack.c.h.b16 %v1018
    %v1637 = vunpack.c.l.b16 %v1019
    %v1638 = vunpack.c.h.b16 %v1019
    %v1639 = vunpack.c.l.b16 %v1020
    %v1640 = vunpack.c.h.b16 %v1020
    %v1641 = vunpack.c.l.b16 %v1021
    %v1642 = vunpack.c.h.b16 %v1021
    %v1643 = vunpack.c.l.b16 %v1022
    %v1644 = vunpack.c.h.b16 %v1022
    %v1645 = vunpack.c.l.b16 %v1023
    %v1646 = vunpack.c.h.b16 %v1023
    %v1647 = vunpack.c.l.b16 %v1024
    %v1648 = vunpack.c.h.b16 %v1024
    %v1649 = vunpack.c.l.b16 %v1025
    %v1650 = vunpack.c.h.b16 %v1025
    %v1651 = vunpack.c.l.b16 %v1026
    %v1652 = vunpack.c.h.b16 %v1026
    %v1653 = vunpack.c.l.b16 %v1027
    %v1654 = vunpack.c.h.b16 %v1027
    %v1655 = vunpack.c.l.b16 %v1028
    %v1656 = vunpack.c.h.b16 %v1028
    %v1657 = vunpack.c.l.b16 %v1029
    %v1658 = vunpack.c.h.b16 %v1029
    %v1659 = vunpack.c.l.b16 %v1030
    %v1660 = vunpack.c.h.b16 %v1030
    %v1661 = vunpack.c.l.b16 %v1031
    %v1662 = vunpack.c.h.b16 %v1031
    %v1663 = vunpack.c.l.b16 %v1032
    %v1664 = vunpack.c.h.b16 %v1032
    %v1665 = vunpack.c.l.b16 %v1033
    %v1666 = vunpack.c.h.b16 %v1033
    %v1667 = vunpack.c.l.b16 %v1034
    %v1668 = vunpack.c.h.b16 %v1034
    %v1669 = vunpack.c.l.b16 %v1035
    %v1670 = vunpack.c.h.b16 %v1035
    %v1671 = vunpack.c.l.b16 %v1036
    %v1672 = vunpack.c.h.b16 %v1036
    %v1673 = vunpack.c.l.b16 %v1037
    %v1674 = vunpack.c.h.b16 %v1037
    %v1675 = vunpack.c.l.b16 %v1038
    %v1676 = vunpack.c.h.b16 %v1038
    %v1677 = vunpack.c.l.b16 %v1039
    %v1678 = vunpack.c.h.b16 %v1039
    %v1679 = vunpack.c.l.b16 %v1040
    %v1680 = vunpack.c.h.b16 %v1040
    %v1681 = vunpack.c.l.b16 %v1041
    %v1682 = vunpack.c.h.b16 %v1041
    %v1683 = vunpack.c.l.b16 %v1042
    %v1684 = vunpack.c.h.b16 %v1042
    %v1685 = vunpack.c.l.b16 %v1043
    %v1686 = vunpack.c.h.b16 %v1043
    %v1687 = vunpack.c.l.b16 %v1044
    %v1688 = vunpack.c.h.b16 %v1044
    %v1689 = vunpack.c.l.b16 %v1045
    %v1690 = vunpack.c.h.b16 %v1045
    %v1691 = vunpack.c.l.b16 %v1046
    %v1692 = vunpack.c.h.b16 %v1046
    %v1693 = vunpack.c.l.b16 %v1047
    %v1694 = vunpack.c.h.b16 %v1047
    %v1695 = vunpack.c.l.b16 %v1048
    %v1696 = vunpack.c.h.b16 %v1048
    %v1697 = vunpack.c.l.b16 %v1049
    %v1698 = vunpack.c.h.b16 %v1049
    %v1699 = vunpack.c.l.b16 %v1050
    %v1700 = vunpack.c.h.b16 %v1050
    %v1701 = vunpack.c.l.b16 %v1051
    %v1702 = vunpack.c.h.b16 %v1051
    %v1703 = vunpack.c.l.b16 %v1052
    %v1704 = vunpack.c.h.b16 %v1052
    %v1705 = vunpack.c.l.b16 %v1053
    %v1706 = vunpack.c.h.b16 %v1053
    %v1707 = vunpack.c.l.b16 %v1054
    %v1708 = vunpack.c.h.b16 %v1054
    %v1709 = vunpack.c.l.b16 %v1055
    %v1710 = vunpack.c.h.b16 %v1055
    %v1711 = vunpack.c.l.b16 %v1056
    %v1712 = vunpack.c.h.b16 %v1056
    %v1713 = vunpack.c.l.b16 %v1057
    %v1714 = vunpack.c.h.b16 %v1057
    %v1715 = vunpack.c.l.b16 %v1058
    %v1716 = vunpack.c.h.b16 %v1058
    %v1717 = vunpack.c.l.b16 %v1059
    %v1718 = vunpack.c.h.b16 %v1059
    %v1719 = vunpack.c.l.b16 %v1060
    %v1720 = vunpack.c.h.b16 %v1060
    %v1721 = vunpack.c.l.b16 %v1061
    %v1722 = vunpack.c.h.b16 %v1061
    %v1723 = vunpack.c.l.b16 %v1062
    %v1724 = vunpack.c.h.b16 %v1062
    %v1725 = vunpack.c.l.b16 %v1063
    %v1726 = vunpack.c.h.b16 %v1063
    %v1727 = vunpack.c.l.b16 %v1064
    %v1728 = vunpack.c.h.b16 %v1064
    %v1729 = vunpack.c.l.b16 %v1065
    %v1730 = vunpack.c.h.b16 %v1065
    %v1731 = vunpack.c.l.b16 %v1066
    %v1732 = vunpack.c.h.b16 %v1066
    %v1733 = vunpack.c.l.b16 %v1067
    %v1734 = vunpack.c.h.b16 %v1067
    %v1735 = vunpack.c.l.b16 %v1068
    %v1736 = vunpack.c.h.b16 %v1068
    %v1737 = vunpack.c.l.b16 %v1069
    %v1738 = vunpack.c.h.b16 %v1069
    %v1739 = vunpack.c.l.b16 %v1070
    %v1740 = vunpack.c.h.b16 %v1070
    %v1741 = vunpack.c.l.b16 %v1071
    %v1742 = vunpack.c.h.b16 %v1071
    %v1743 = vunpack.c.l.b16 %v1072
    %v1744 = vunpack.c.h.b16 %v1072
    %v1745 = vunpack.c.l.b16 %v1073
    %v1746 = vunpack.c.h.b16 %v1073
    %v1747 = vunpack.c.l.b16 %v1074
    %v1748 = vunpack.c.h.b16 %v1074
    %v1749 = vunpack.c.l.b16 %v1075
    %v1750 = vunpack.c.h.b16 %v1075
    %v1751 = vunpack.c.l.b16 %v1076
    %v1752 = vunpack.c.h.b16 %v1076
    %v1753 = vunpack.c.l.b16 %v1077
    %v1754 = vunpack.c.h.b16 %v1077
    %v1755 = vunpack.c.l.b16 %v1078
    %v1756 = vunpack.c.h.b16 %v1078
    %v1757 = vunpack.c.l.b16 %v1079
    %v1758 = vunpack.c.h.b16 %v1079
    %v1759 = vunpack.c.l.b16 %v1080
    %v1760 = vunpack.c.h.b16 %v1080
    %v1761 = vunpack.c.l.b16 %v1081
    %v1762 = vunpack.c.h.b16 %v1081
    %v1763 = vunpack.c.l.b16 %v1082
    %v1764 = vunpack.c.h.b16 %v1082
    %v1765 = vunpack.c.l.b16 %v1083
    %v1766 = vunpack.c.h.b16 %v1083
    %v1767 = vunpack.c.l.b16 %v1084
    %v1768 = vunpack.c.h.b16 %v1084
    %v1769 = vunpack.c.l.b16 %v1085
    %v1770 = vunpack.c.h.b16 %v1085
    %v1771 = vunpack.c.l.b16 %v1086
    %v1772 = vunpack.c.h.b16 %v1086
    %v1773 = vunpack.c.l.b16 %v1087
    %v1774 = vunpack.c.h.b16 %v1087
    %v1775 = vunpack.c.l.b16 %v1088
    %v1776 = vunpack.c.h.b16 %v1088
    %v1777 = vunpack.c.l.b16 %v1089
    %v1778 = vunpack.c.h.b16 %v1089
    %v1779 = vunpack.c.l.b16 %v1090
    %v1780 = vunpack.c.h.b16 %v1090
    %v1781 = vunpack.c.l.b16 %v1091
    %v1782 = vunpack.c.h.b16 %v1091
    %v1783 = vunpack.c.l.b16 %v1092
    %v1784 = vunpack.c.h.b16 %v1092
    %v1785 = vunpack.c.l.b16 %v1093
    %v1786 = vunpack.c.h.b16 %v1093
    %v1787 = vunpack.c.l.b16 %v1094
    %v1788 = vunpack.c.h.b16 %v1094
    %v1789 = vunpack.c.l.b16 %v1095
    %v1790 = vunpack.c.h.b16 %v1095
    %v1791 = vunpack.c.l.b16 %v1096
    %v1792 = vunpack.c.h.b16 %v1096
    %v1793 = vunpack.c.l.b16 %v1097
    %v1794 = vunpack.c.h.b16 %v1097
    %v1795 = vunpack.c.l.b16 %v1098
    %v1796 = vunpack.c.h.b16 %v1098
    %v1797 = vunpack.c.l.b16 %v1099
    %v1798 = vunpack.c.h.b16 %v1099
    %v1799 = vunpack.c.l.b16 %v1100
    %v1800 = vunpack.c.h.b16 %v1100
    %v1801 = vunpack.c.l.b16 %v1101
    %v1802 = vunpack.c.h.b16 %v1101
    %v1803 = vunpack.c.l.b16 %v1102
    %v1804 = vunpack.c.h.b16 %v1102
    %v1805 = vunpack.c.l.b16 %v1103
    %v1806 = vunpack.c.h.b16 %v1103
    %v1807 = vunpack.c.l.b16 %v1104
    %v1808 = vunpack.c.h.b16 %v1104
    %v1809 = vunpack.c.l.b16 %v1105
    %v1810 = vunpack.c.h.b16 %v1105
    %v1811 = vunpack.c.l.b16 %v1106
    %v1812 = vunpack.c.h.b16 %v1106
    %v1813 = vunpack.c.l.b16 %v1107
    %v1814 = vunpack.c.h.b16 %v1107
    %v1815 = vunpack.c.l.b16 %v1108
    %v1816 = vunpack.c.h.b16 %v1108
    %v1817 = vunpack.c.l.b16 %v1109
    %v1818 = vunpack.c.h.b16 %v1109
    %v1819 = vunpack.c.l.b16 %v1110
    %v1820 = vunpack.c.h.b16 %v1110
    %v1821 = vunpack.c.l.b16 %v1111
    %v1822 = vunpack.c.h.b16 %v1111
    %v1823 = vunpack.c.l.b16 %v1112
    %v1824 = vunpack.c.h.b16 %v1112
    %v1825 = vunpack.c.l.b16 %v1113
    %v1826 = vunpack.c.h.b16 %v1113
    %v1827 = vunpack.c.l.b16 %v1114
    %v1828 = vunpack.c.h.b16 %v1114
    %v1829 = vunpack.c.l.b16 %v1115
    %v1830 = vunpack.c.h.b16 %v1115
    %v1831 = vunpack.c.l.b16 %v1116
    %v1832 = vunpack.c.h.b16 %v1116
    %v1833 = vunpack.c.l.b16 %v1117
    %v1834 = vunpack.c.h.b16 %v1117
    %v1835 = vunpack.c.l.b16 %v1118
    %v1836 = vunpack.c.h.b16 %v1118
    %v1837 = vunpack.c.l.b16 %v1119
    %v1838 = vunpack.c.h.b16 %v1119
    %v1839 = vunpack.c.l.b16 %v1120
    %v1840 = vunpack.c.h.b16 %v1120
    %v1841 = vunpack.c.l.b16 %v1121
    %v1842 = vunpack.c.h.b16 %v1121
    %v1843 = vunpack.c.l.b16 %v1122
    %v1844 = vunpack.c.h.b16 %v1122
    %v1845 = vunpack.c.l.b16 %v1123
    %v1846 = vunpack.c.h.b16 %v1123
    %v1847 = vunpack.c.l.b16 %v1124
    %v1848 = vunpack.c.h.b16 %v1124
    %v1849 = vunpack.c.l.b16 %v1125
    %v1850 = vunpack.c.h.b16 %v1125
    %v1851 = vunpack.c.l.b16 %v1126
    %v1852 = vunpack.c.h.b16 %v1126
    %v1853 = vunpack.c.l.b16 %v1127
    %v1854 = vunpack.c.h.b16 %v1127
    %v1855 = vunpack.c.l.b16 %v1128
    %v1856 = vunpack.c.h.b16 %v1128
    %v1857 = vunpack.c.l.b16 %v1129
    %v1858 = vunpack.c.h.b16 %v1129
    %v1859 = vunpack.c.l.b16 %v1130
    %v1860 = vunpack.c.h.b16 %v1130
    %v1861 = vunpack.c.l.b16 %v1131
    %v1862 = vunpack.c.h.b16 %v1131
    %v1863 = vunpack.c.l.b16 %v1132
    %v1864 = vunpack.c.h.b16 %v1132
    %v1865 = vunpack.c.l.b16 %v1133
    %v1866 = vunpack.c.h.b16 %v1133
    %v1867 = vunpack.c.l.b16 %v1134
    %v1868 = vunpack.c.h.b16 %v1134
    %v1869 = vunpack.c.l.b16 %v1135
    %v1870 = vunpack.c.h.b16 %v1135
    %v1871 = vunpack.c.l.b16 %v1136
    %v1872 = vunpack.c.h.b16 %v1136
    %v1873 = vunpack.c.l.b16 %v1137
    %v1874 = vunpack.c.h.b16 %v1137
    %v1875 = vunpack.c.l.b16 %v1138
    %v1876 = vunpack.c.h.b16 %v1138
    %v1877 = vunpack.c.l.b16 %v1139
    %v1878 = vunpack.c.h.b16 %v1139
    %v1879 = vunpack.c.l.b16 %v1140
    %v1880 = vunpack.c.h.b16 %v1140
    %v1881 = vunpack.c.l.b16 %v1141
    %v1882 = vunpack.c.h.b16 %v1141
    %v1883 = vunpack.c.l.b16 %v1142
    %v1884 = vunpack.c.h.b16 %v1142
    %v1885 = vunpack.c.l.b16 %v1143
    %v1886 = vunpack.c.h.b16 %v1143
    %v1887 = vunpack.c.l.b16 %v1144
    %v1888 = vunpack.c.h.b16 %v1144
    %v1889 = vunpack.c.l.b16 %v1145
    %v1890 = vunpack.c.h.b16 %v1145
    %v1891 = vunpack.c.l.b16 %v1146
    %v1892 = vunpack.c.h.b16 %v1146
    %v1893 = vunpack.c.l.b16 %v1147
    %v1894 = vunpack.c.h.b16 %v1147
    %v1895 = vunpack.c.l.b16 %v1148
    %v1896 = vunpack.c.h.b16 %v1148
    %v1897 = vunpack.c.l.b16 %v1149
    %v1898 = vunpack.c.h.b16 %v1149
    %v1899 = vunpack.c.l.b16 %v1150
    %v1900 = vunpack.c.h.b16 %v1150
    %v1901 = vunpack.c.l.b16 %v1151
    %v1902 = vunpack.c.h.b16 %v1151
    %v1903 = vunpack.c.l.b16 %v1152
    %v1904 = vunpack.c.h.b16 %v1152
    %v1905 = vunpack.c.l.b16 %v1153
    %v1906 = vunpack.c.h.b16 %v1153
    %v1907 = vunpack.c.l.b16 %v1154
    %v1908 = vunpack.c.h.b16 %v1154
    %v1909 = vunpack.c.l.b16 %v1155
    %v1910 = vunpack.c.h.b16 %v1155
    %v1911 = vunpack.c.l.b16 %v1156
    %v1912 = vunpack.c.h.b16 %v1156
    %v1913 = vunpack.c.l.b16 %v1157
    %v1914 = vunpack.c.h.b16 %v1157
    %v1915 = vunpack.c.l.b16 %v1158
    %v1916 = vunpack.c.h.b16 %v1158
    %v1917 = vunpack.c.l.b16 %v1159
    %v1918 = vunpack.c.h.b16 %v1159
    %v1919 = vunpack.c.l.b16 %v1160
    %v1920 = vunpack.c.h.b16 %v1160
    %v1921 = vunpack.c.l.b16 %v1161
    %v1922 = vunpack.c.h.b16 %v1161
    %v1923 = vunpack.c.l.b16 %v1162
    %v1924 = vunpack.c.h.b16 %v1162
    %v1925 = vunpack.c.l.b16 %v1163
    %v1926 = vunpack.c.h.b16 %v1163
    %v1927 = vunpack.c.l.b16 %v1164
    %v1928 = vunpack.c.h.b16 %v1164
    %v1929 = vunpack.c.l.b16 %v1165
    %v1930 = vunpack.c.h.b16 %v1165
    %v1931 = vunpack.c.l.b16 %v1166
    %v1932 = vunpack.c.h.b16 %v1166
    %v1933 = vunpack.c.l.b16 %v1167
    %v1934 = vunpack.c.h.b16 %v1167
    %v1935 = vunpack.c.l.b16 %v1168
    %v1936 = vunpack.c.h.b16 %v1168
    %v1937 = vunpack.c.l.b16 %v1169
    %v1938 = vunpack.c.h.b16 %v1169
    %v1939 = vunpack.c.l.b16 %v1170
    %v1940 = vunpack.c.h.b16 %v1170
    %v1941 = vunpack.c.l.b16 %v1171
    %v1942 = vunpack.c.h.b16 %v1171
    %v1943 = vunpack.c.l.b16 %v1172
    %v1944 = vunpack.c.h.b16 %v1172
    %v1945 = vunpack.c.l.b16 %v1173
    %v1946 = vunpack.c.h.b16 %v1173
    %v1947 = vunpack.c.l.b16 %v1174
    %v1948 = vunpack.c.h.b16 %v1174
    %v1949 = vunpack.c.l.b16 %v1175
    %v1950 = vunpack.c.h.b16 %v1175
    %v1951 = vunpack.c.l.b16 %v1176
    %v1952 = vunpack.c.h.b16 %v1176
    %v1953 = vunpack.c.l.b16 %v1177
    %v1954 = vunpack.c.h.b16 %v1177
    %v1955 = vunpack.c.l.b16 %v1178
    %v1956 = vunpack.c.h.b16 %v1178
    %v1957 = vunpack.c.l.b16 %v1179
    %v1958 = vunpack.c.h.b16 %v1179
    %v1959 = vunpack.c.l.b16 %v1180
    %v1960 = vunpack.c.h.b16 %v1180
    %v1961 = vunpack.c.l.b16 %v1181
    %v1962 = vunpack.c.h.b16 %v1181
    %v1963 = vunpack.c.l.b16 %v1182
    %v1964 = vunpack.c.h.b16 %v1182
    %v1965 = vunpack.c.l.b16 %v1183
    %v1966 = vunpack.c.h.b16 %v1183
    %v1967 = vunpack.c.l.b16 %v1184
    %v1968 = vunpack.c.h.b16 %v1184
    %v1969 = vunpack.c.l.b16 %v1185
    %v1970 = vunpack.c.h.b16 %v1185
    %v1971 = vunpack.c.l.b16 %v1186
    %v1972 = vunpack.c.h.b16 %v1186
    %v1973 = vunpack.c.l.b16 %v1187
    %v1974 = vunpack.c.h.b16 %v1187
    %v1975 = vunpack.c.l.b16 %v1188
    %v1976 = vunpack.c.h.b16 %v1188
    %v1977 = vunpack.c.l.b16 %v1189
    %v1978 = vunpack.c.h.b16 %v1189
    %v1979 = vunpack.c.l.b16 %v1190
    %v1980 = vunpack.c.h.b16 %v1190
    %v1981 = vunpack.c.l.b16 %v1191
    %v1982 = vunpack.c.h.b16 %v1191
    %v1983 = vunpack.c.l.b16 %v1192
    %v1984 = vunpack.c.h.b16 %v1192
    %v1985 = vunpack.c.l.b16 %v1193
    %v1986 = vunpack.c.h.b16 %v1193
    %v1987 = vunpack.c.l.b16 %v1194
    %v1988 = vunpack.c.h.b16 %v1194
    %v1989 = vunpack.c.l.b16 %v1195
    %v1990 = vunpack.c.h.b16 %v1195
    %v1991 = vunpack.c.l.b16 %v1196
    %v1992 = vunpack.c.h.b16 %v1196
    %v1993 = vunpack.c.l.b16 %v1197
    %v1994 = vunpack.c.h.b16 %v1197
    %v1995 = vunpack.c.l.b16 %v1198
    %v1996 = vunpack.c.h.b16 %v1198
    %v1997 = vunpack.c.l.b16 %v1199
    %v1998 = vunpack.c.h.b16 %v1199
    %v1999 = vunpack.c.l.b16 %v1200
    %v2000 = vunpack.c.h.b16 %v1200
    %v2001 = vunpack.c.l.b16 %v1201
    %v2002 = vunpack.c.h.b16 %v1201
    %v2003 = vunpack.c.l.b16 %v1202
    %v2004 = vunpack.c.h.b16 %v1202
    %v2005 = vunpack.c.l.b16 %v1203
    %v2006 = vunpack.c.h.b16 %v1203
    %v2007 = vunpack.c.l.b16 %v1204
    %v2008 = vunpack.c.h.b16 %v1204
    %v2009 = vunpack.c.l.b16 %v1205
    %v2010 = vunpack.c.h.b16 %v1205
    %v2011 = vunpack.c.l.b16 %v1206
    %v2012 = vunpack.c.h.b16 %v1206
    %v2013 = vunpack.c.l.b16 %v1207
    %v2014 = vunpack.c.h.b16 %v1207
    %v2015 = vunpack.c.l.b16 %v1208
    %v2016 = vunpack.c.h.b16 %v1208
    %v2017 = vunpack.c.l.b16 %v1209
    %v2018 = vunpack.c.h.b16 %v1209
    %v2019 = vunpack.c.l.b16 %v1210
    %v2020 = vunpack.c.h.b16 %v1210
    %v2021 = vpack.c.b16 %v1517, %v1509
    %v2022 = vpack.c.b16 %v1518, %v1510
    %v2023 = vpack.c.b16 %v1519, %v1511
    %v2024 = vpack.c.b16 %v1520, %v1512
    %v2025 = vpack.c.b16 %v1521, %v1513
    %v2026 = vpack.c.b16 %v1522, %v1514
    %v2027 = vpack.c.b16 %v1523, %v1515
    %v2028 = vpack.c.b16 %v1524, %v1516
    %v2029 = vpack.c.b16 %v1533, %v1525
    %v2030 = vpack.c.b16 %v1534, %v1526
    %v2031 = vpack.c.b16 %v1535, %v1527
    %v2032 = vpack.c.b16 %v1536, %v1528
    %v2033 = vpack.c.b16 %v1537, %v1529
    %v2034 = vpack.c.b16 %v1538, %v1530
    %v2035 = vpack.c.b16 %v1539, %v1531
    %v2036 = vpack.c.b16 %v1540, %v1532
    %v2037 = vpack.c.b16 %v1549, %v1541
    %v2038 = vpack.c.b16 %v1550, %v1542
    %v2039 = vpack.c.b16 %v1551, %v1543
    %v2040 = vpack.c.b16 %v1552, %v1544
    %v2041 = vpack.c.b16 %v1553, %v1545
    %v2042 = vpack.c.b16 %v1554, %v1546
    %v2043 = vpack.c.b16 %v1555, %v1547
    %v2044 = vpack.c.b16 %v1556, %v1548
    %v2045 = vpack.c.b16 %v1565, %v1557
    %v2046 = vpack.c.b16 %v1566, %v1558
    %v2047 = vpack.c.b16 %v1567, %v1559
    %v2048 = vpack.c.b16 %v1568, %v1560
    %v2049 = vpack.c.b16 %v1569, %v1561
    %v2050 = vpack.c.b16 %v1570, %v1562
    %v2051 = vpack.c.b16 %v1571, %v1563
    %v2052 = vpack.c.b16 %v1572, %v1564
    %v2053 = vpack.c.b16 %v1581, %v1573
    %v2054 = vpack.c.b16 %v1582, %v1574
    %v2055 = vpack.c.b16 %v1583, %v1575
    %v2056 = vpack.c.b16 %v1584, %v1576
    %v2057 = vpack.c.b16 %v1585, %v1577
    %v2058 = vpack.c.b16 %v1586, %v1578
    %v2059 = vpack.c.b16 %v1587, %v1579
    %v2060 = vpack.c.b16 %v1588, %v1580
    %v2061 = vpack.c.b16 %v1597, %v1589
    %v2062 = vpack.c.b16 %v1598, %v1590
    %v2063 = vpack.c.b16 %v1599, %v1591
    %v2064 = vpack.c.b16 %v1600, %v1592
    %v2065 = vpack.c.b16 %v1601, %v1593
    %v2066 = vpack.c.b16 %v1602, %v1594
    %v2067 = vpack.c.b16 %v1603, %v1595
    %v2068 = vpack.c.b16 %v1604, %v1596
    %v2069 = vpack.c.b16 %v1613, %v1605
    %v2070 = vpack.c.b16 %v1614, %v1606
    %v2071 = vpack.c.b16 %v1615, %v1607
    %v2072 = vpack.c.b16 %v1616, %v1608
    %v2073 = vpack.c.b16 %v1617, %v1609
    %v2074 = vpack.c.b16 %v1618, %v1610
    %v2075 = vpack.c.b16 %v1619, %v1611
    %v2076 = vpack.c.b16 %v1620, %v1612
    %v2077 = vpack.c.b16 %v1629, %v1621
    %v2078 = vpack.c.b16 %v1630, %v1622
    %v2079 = vpack.c.b16 %v1631, %v1623
    %v2080 = vpack.c.b16 %v1632, %v1624
    %v2081 = vpack.c.b16 %v1633, %v1625
    %v2082 = vpack.c.b16 %v1634, %v1626
    %v2083 = vpack.c.b16 %v1635, %v1627
    %v2084 = vpack.c.b16 %v1636, %v1628
    %v2085 = vpack.c.b16 %v1645, %v1637
    %v2086 = vpack.c.b16 %v1646, %v1638
    %v2087 = vpack.c.b16 %v1647, %v1639
    %v2088 = vpack.c.b16 %v1648, %v1640
    %v2089 = vpack.c.b16 %v1649, %v1641
    %v2090 = vpack.c.b16 %v1650, %v1642
    %v2091 = vpack.c.b16 %v1651, %v1643
    %v2092 = vpack.c.b16 %v1652, %v1644
    %v2093 = vpack.c.b16 %v1661, %v1653
    %v2094 = vpack.c.b16 %v1662, %v1654
    %v2095 = vpack.c.b16 %v1663, %v1655
    %v2096 = vpack.c.b16 %v1664, %v1656
    %v2097 = vpack.c.b16 %v1665, %v1657
    %v2098 = vpack.c.b16 %v1666, %v1658
    %v2099 = vpack.c.b16 %v1667, %v1659
    %v2100 = vpack.c.b16 %v1668, %v1660
    %v2101 = vpack.c.b16 %v1677, %v1669
    %v2102 = vpack.c.b16 %v1678, %v1670
    %v2103 = vpack.c.b16 %v1679, %v1671
    %v2104 = vpack.c.b16 %v1680, %v1672
    %v2105 = vpack.c.b16 %v1681, %v1673
    %v2106 = vpack.c.b16 %v1682, %v1674
    %v2107 = vpack.c.b16 %v1683, %v1675
    %v2108 = vpack.c.b16 %v1684, %v1676
    %v2109 = vpack.c.b16 %v1693, %v1685
    %v2110 = vpack.c.b16 %v1694, %v1686
    %v2111 = vpack.c.b16 %v1695, %v1687
    %v2112 = vpack.c.b16 %v1696, %v1688
    %v2113 = vpack.c.b16 %v1697, %v1689
    %v2114 = vpack.c.b16 %v1698, %v1690
    %v2115 = vpack.c.b16 %v1699, %v1691
    %v2116 = vpack.c.b16 %v1700, %v1692
    %v2117 = vpack.c.b16 %v1709, %v1701
    %v2118 = vpack.c.b16 %v1710, %v1702
    %v2119 = vpack.c.b16 %v1711, %v1703
    %v2120 = vpack.c.b16 %v1712, %v1704
    %v2121 = vpack.c.b16 %v1713, %v1705
    %v2122 = vpack.c.b16 %v1714, %v1706
    %v2123 = vpack.c.b16 %v1715, %v1707
    %v2124 = vpack.c.b16 %v1716, %v1708
    %v2125 = vpack.c.b16 %v1725, %v1717
    %v2126 = vpack.c.b16 %v1726, %v1718
    %v2127 = vpack.c.b16 %v1727, %v1719
    %v2128 = vpack.c.b16 %v1728, %v1720
    %v2129 = vpack.c.b16 %v1729, %v1721
    %v2130 = vpack.c.b16 %v1730, %v1722
    %v2131 = vpack.c.b16 %v1731, %v1723
    %v2132 = vpack.c.b16 %v1732, %v1724
    %v2133 = vpack.c.b16 %v1741, %v1733
    %v2134 = vpack.c.b16 %v1742, %v1734
    %v2135 = vpack.c.b16 %v1743, %v1735
    %v2136 = vpack.c.b16 %v1744, %v1736
    %v2137 = vpack.c.b16 %v1745, %v1737
    %v2138 = vpack.c.b16 %v1746, %v1738
    %v2139 = vpack.c.b16 %v1747, %v1739
    %v2140 = vpack.c.b16 %v1748, %v1740
    %v2141 = vpack.c.b16 %v1757, %v1749
    %v2142 = vpack.c.b16 %v1758, %v1750
    %v2143 = vpack.c.b16 %v1759, %v1751
    %v2144 = vpack.c.b16 %v1760, %v1752
    %v2145 = vpack.c.b16 %v1761, %v1753
    %v2146 = vpack.c.b16 %v1762, %v1754
    %v2147 = vpack.c.b16 %v1763, %v1755
    %v2148 = vpack.c.b16 %v1764, %v1756
    %v2149 = vpack.c.b16 %v1773, %v1765
    %v2150 = vpack.c.b16 %v1774, %v1766
    %v2151 = vpack.c.b16 %v1775, %v1767
    %v2152 = vpack.c.b16 %v1776, %v1768
    %v2153 = vpack.c.b16 %v1777, %v1769
    %v2154 = vpack.c.b16 %v1778, %v1770
    %v2155 = vpack.c.b16 %v1779, %v1771
    %v2156 = vpack.c.b16 %v1780, %v1772
    %v2157 = vpack.c.b16 %v1789, %v1781
    %v2158 = vpack.c.b16 %v1790, %v1782
    %v2159 = vpack.c.b16 %v1791, %v1783
    %v2160 = vpack.c.b16 %v1792, %v1784
    %v2161 = vpack.c.b16 %v1793, %v1785
    %v2162 = vpack.c.b16 %v1794, %v1786
    %v2163 = vpack.c.b16 %v1795, %v1787
    %v2164 = vpack.c.b16 %v1796, %v1788
    %v2165 = vpack.c.b16 %v1805, %v1797
    %v2166 = vpack.c.b16 %v1806, %v1798
    %v2167 = vpack.c.b16 %v1807, %v1799
    %v2168 = vpack.c.b16 %v1808, %v1800
    %v2169 = vpack.c.b16 %v1809, %v1801
    %v2170 = vpack.c.b16 %v1810, %v1802
    %v2171 = vpack.c.b16 %v1811, %v1803
    %v2172 = vpack.c.b16 %v1812, %v1804
    %v2173 = vpack.c.b16 %v1821, %v1813
    %v2174 = vpack.c.b16 %v1822, %v1814
    %v2175 = vpack.c.b16 %v1823, %v1815
    %v2176 = vpack.c.b16 %v1824, %v1816
    %v2177 = vpack.c.b16 %v1825, %v1817
    %v2178 = vpack.c.b16 %v1826, %v1818
    %v2179 = vpack.c.b16 %v1827, %v1819
    %v2180 = vpack.c.b16 %v1828, %v1820
    %v2181 = vpack.c.b16 %v1837, %v1829
    %v2182 = vpack.c.b16 %v1838, %v1830
    %v2183 = vpack.c.b16 %v1839, %v1831
    %v2184 = vpack.c.b16 %v1840, %v1832
    %v2185 = vpack.c.b16 %v1841, %v1833
    %v2186 = vpack.c.b16 %v1842, %v1834
    %v2187 = vpack.c.b16 %v1843, %v1835
    %v2188 = vpack.c.b16 %v1844, %v1836
    %v2189 = vpack.c.b16 %v1853, %v1845
    %v2190 = vpack.c.b16 %v1854, %v1846
    %v2191 = vpack.c.b16 %v1855, %v1847
    %v2192 = vpack.c.b16 %v1856, %v1848
    %v2193 = vpack.c.b16 %v1857, %v1849
    %v2194 = vpack.c.b16 %v1858, %v1850
    %v2195 = vpack.c.b16 %v1859, %v1851
    %v2196 = vpack.c.b16 %v1860, %v1852
    %v2197 = vpack.c.b16 %v1869, %v1861
    %v2198 = vpack.c.b16 %v1870, %v1862
    %v2199 = vpack.c.b16 %v1871, %v1863
    %v2200 = vpack.c.b16 %v1872, %v1864
    %v2201 = vpack.c.b16 %v1873, %v1865
    %v2202 = vpack.c.b16 %v1874, %v1866
    %v2203 = vpack.c.b16 %v1875, %v1867
    %v2204 = vpack.c.b16 %v1876, %v1868
    %v2205 = vpack.c.b16 %v1885, %v1877
    %v2206 = vpack.c.b16 %v1886, %v1878
    %v2207 = vpack.c.b16 %v1887, %v1879
    %v2208 = vpack.c.b16 %v1888, %v1880
    %v2209 = vpack.c.b16 %v1889, %v1881
    %v2210 = vpack.c.b16 %v1890, %v1882
    %v2211 = vpack.c.b16 %v1891, %v1883
    %v2212 = vpack.c.b16 %v1892, %v1884
    %v2213 = vpack.c.b16 %v1901, %v1893
    %v2214 = vpack.c.b16 %v1902, %v1894
    %v2215 = vpack.c.b16 %v1903, %v1895
    %v2216 = vpack.c.b16 %v1904, %v1896
    %v2217 = vpack.c.b16 %v1905, %v1897
    %v2218 = vpack.c.b16 %v1906, %v1898
    %v2219 = vpack.c.b16 %v1907, %v1899
    %v2220 = vpack.c.b16 %v1908, %v1900
    %v2221 = vpack.c.b16 %v1917, %v1909
    %v2222 = vpack.c.b16 %v1918, %v1910
    %v2223 = vpack.c.b16 %v1919, %v1911
    %v2224 = vpack.c.b16 %v1920, %v1912
    %v2225 = vpack.c.b16 %v1921, %v1913
    %v2226 = vpack.c.b16 %v1922, %v1914
    %v2227 = vpack.c.b16 %v1923, %v1915
    %v2228 = vpack.c.b16 %v1924, %v1916
    %v2229 = vpack.c.b16 %v1933, %v1925
    %v2230 = vpack.c.b16 %v1934, %v1926
    %v2231 = vpack.c.b16 %v1935, %v1927
    %v2232 = vpack.c.b16 %v1936, %v1928
    %v2233 = vpack.c.b16 %v1937, %v1929
    %v2234 = vpack.c.b16 %v1938, %v1930
    %v2235 = vpack.c.b16 %v1939, %v1931
    %v2236 = vpack.c.b16 %v1940, %v1932
    %v2237 = vpack.c.b16 %v1949, %v1941
    %v2238 = vpack.c.b16 %v1950, %v1942
    %v2239 = vpack.c.b16 %v1951, %v1943
    %v2240 = vpack.c.b16 %v1952, %v1944
    %v2241 = vpack.c.b16 %v1953, %v1945
    %v2242 = vpack.c.b16 %v1954, %v1946
    %v2243 = vpack.c.b16 %v1955, %v1947
    %v2244 = vpack.c.b16 %v1956, %v1948
    %v2245 = vpack.c.b16 %v1965, %v1957
    %v2246 = vpack.c.b16 %v1966, %v1958
    %v2247 = vpack.c.b16 %v1967, %v1959
    %v2248 = vpack.c.b16 %v1968, %v1960
    %v2249 = vpack.c.b16 %v1969, %v1961
    %v2250 = vpack.c.b16 %v1970, %v1962
    %v2251 = vpack.c.b16 %v1971, %v1963
    %v2252 = vpack.c.b16 %v1972, %v1964
    %v2253 = vpack.c.b16 %v1981, %v1973
    %v2254 = vpack.c.b16 %v1982, %v1974
    %v2255 = vpack.c.b16 %v1983, %v1975
    %v2256 = vpack.c.b16 %v1984, %v1976
    %v2257 = vpack.c.b16 %v1985, %v1977
    %v2258 = vpack.c.b16 %v1986, %v1978
    %v2259 = vpack.c.b16 %v1987, %v1979
    %v2260 = vpack.c.b16 %v1988, %v1980
    %v2261 = vpack.c.b16 %v1997, %v1989
    %v2262 = vpack.c.b16 %v1998, %v1990
    %v2263 = vpack.c.b16 %v1999, %v1991
    %v2264 = vpack.c.b16 %v2000, %v1992
    %v2265 = vpack.c.b16 %v2001, %v1993
    %v2266 = vpack.c.b16 %v2002, %v1994
    %v2267 = vpack.c.b16 %v2003, %v1995
    %v2268 = vpack.c.b16 %v2004, %v1996
    %v2269 = vpack.c.b16 %v2013, %v2005
    %v2270 = vpack.c.b16 %v2014, %v2006
    %v2271 = vpack.c.b16 %v2015, %v2007
    %v2272 = vpack.c.b16 %v2016, %v2008
    %v2273 = vpack.c.b16 %v2017, %v2009
    %v2274 = vpack.c.b16 %v2018, %v2010
    %v2275 = vpack.c.b16 %v2019, %v2011
    %v2276 = vpack.c.b16 %v2020, %v2012
    %2533 = vmatprep.subr.bf16.mxu0 %v2022
    %2534 = vmatpush1.bf16.msra.mxu0 %v2021
    %2535 = vmatprep.subr.bf16.mxu0 %v2030
    %2536 = vmatpush1.bf16.msra.mxu0 %v2029
    %2537 = vmatprep.subr.bf16.mxu0 %v2038
    %2538 = vmatpush1.bf16.msra.mxu0 %v2037
    %2539 = vmatprep.subr.bf16.mxu0 %v2046
    %2540 = vmatpush1.bf16.msra.mxu0 %v2045
    %2541 = vmatprep.subr.bf16.mxu0 %v2054
    %2542 = vmatpush1.bf16.msra.mxu0 %v2053
    %2543 = vmatprep.subr.bf16.mxu0 %v2062
    %2544 = vmatpush1.bf16.msra.mxu0 %v2061
    %2545 = vmatprep.subr.bf16.mxu0 %v2070
    %2546 = vmatpush1.bf16.msra.mxu0 %v2069
    %2547 = vmatprep.subr.bf16.mxu0 %v2078
    %2548 = vmatpush1.bf16.msra.mxu0 %v2077
    %2549 = vmatprep.subr.bf16.mxu0 %v2086
    %2550 = vmatpush1.bf16.msra.mxu0 %v2085
    %2551 = vmatprep.subr.bf16.mxu0 %v2094
    %2552 = vmatpush1.bf16.msra.mxu0 %v2093
    %2553 = vmatprep.subr.bf16.mxu0 %v2102
    %2554 = vmatpush1.bf16.msra.mxu0 %v2101
    %2555 = vmatprep.subr.bf16.mxu0 %v2110
    %2556 = vmatpush1.bf16.msra.mxu0 %v2109
    %2557 = vmatprep.subr.bf16.mxu0 %v2118
    %2558 = vmatpush1.bf16.msra.mxu0 %v2117
    %2559 = vmatprep.subr.bf16.mxu0 %v2126
    %2560 = vmatpush1.bf16.msra.mxu0 %v2125
    %2561 = vmatprep.subr.bf16.mxu0 %v2134
    %2562 = vmatpush1.bf16.msra.mxu0 %v2133
    %2563 = vmatprep.subr.bf16.mxu0 %v2142
    %2564 = vmatpush1.bf16.msra.mxu0 %v2141
    %2565 = vmatprep.mubr.bf16.mxu0 %v952
    %2566 = vmatmul.mubr.bf16.gmra.mrb[0].mxu0 %v951
    %v2567 = vpop.f32.mrb[0].mxu0
    %v2568 = vadd.f32 %v1216, %v2567
    %v2569 = vpop.f32.mrb[0].mxu0
    %v2570 = vadd.f32 %v1220, %v2569
    %v2571 = vpop.f32.mrb[0].mxu0
    %v2572 = vpop.f32.mrb[0].mxu0
    %2573 = vdwg.mxu0
    %2574 = vmatprep.subr.bf16.mxu0 %v2150
    %2575 = vmatpush1.bf16.msra.mxu0 %v2149
    %2576 = vmatprep.subr.bf16.mxu0 %v2158
    %2577 = vmatpush1.bf16.msra.mxu0 %v2157
    %2578 = vmatprep.subr.bf16.mxu0 %v2166
    %2579 = vmatpush1.bf16.msra.mxu0 %v2165
    %2580 = vmatprep.subr.bf16.mxu0 %v2174
    %2581 = vmatpush1.bf16.msra.mxu0 %v2173
    %2582 = vmatprep.subr.bf16.mxu0 %v2182
    %2583 = vmatpush1.bf16.msra.mxu0 %v2181
    %2584 = vmatprep.subr.bf16.mxu0 %v2190
    %2585 = vmatpush1.bf16.msra.mxu0 %v2189
    %2586 = vmatprep.subr.bf16.mxu0 %v2198
    %2587 = vmatpush1.bf16.msra.mxu0 %v2197
    %2588 = vmatprep.subr.bf16.mxu0 %v2206
    %2589 = vmatpush1.bf16.msra.mxu0 %v2205
    %2590 = vmatprep.subr.bf16.mxu0 %v2214
    %2591 = vmatpush1.bf16.msra.mxu0 %v2213
    %2592 = vmatprep.subr.bf16.mxu0 %v2222
    %2593 = vmatpush1.bf16.msra.mxu0 %v2221
    %2594 = vmatprep.subr.bf16.mxu0 %v2230
    %2595 = vmatpush1.bf16.msra.mxu0 %v2229
    %2596 = vmatprep.subr.bf16.mxu0 %v2238
    %2597 = vmatpush1.bf16.msra.mxu0 %v2237
    %2598 = vmatprep.subr.bf16.mxu0 %v2246
    %2599 = vmatpush1.bf16.msra.mxu0 %v2245
    %2600 = vmatprep.subr.bf16.mxu0 %v2254
    %2601 = vmatpush1.bf16.msra.mxu0 %v2253
    %2602 = vmatprep.subr.bf16.mxu0 %v2262
    %2603 = vmatpush1.bf16.msra.mxu0 %v2261
    %2604 = vmatprep.subr.bf16.mxu0 %v2270
    %2605 = vmatpush1.bf16.msra.mxu0 %v2269
    %2606 = vmatprep.mubr.bf16.mxu0 %v954
    %2607 = vmatmul.mubr.bf16.gmra.mrb[0].mxu0 %v953
    %v2608 = vpop.f32.mrb[0].mxu0
    %v2609 = vadd.f32 %v2568, %v2608
    %v2610 = vpop.f32.mrb[0].mxu0
    %v2611 = vadd.f32 %v2570, %v2610
    %v2612 = vpop.f32.mrb[0].mxu0
    %v2613 = vpop.f32.mrb[0].mxu0
    %2614 = vdwg.mxu0
    %2615 = vmatprep.subr.bf16.mxu0 %v2024
    %2616 = vmatpush1.bf16.msra.mxu0 %v2023
    %2617 = vmatprep.subr.bf16.mxu0 %v2032
    %2618 = vmatpush1.bf16.msra.mxu0 %v2031
    %2619 = vmatprep.subr.bf16.mxu0 %v2040
    %2620 = vmatpush1.bf16.msra.mxu0 %v2039
    %2621 = vmatprep.subr.bf16.mxu0 %v2048
    %2622 = vmatpush1.bf16.msra.mxu0 %v2047
    %2623 = vmatprep.subr.bf16.mxu0 %v2056
    %2624 = vmatpush1.bf16.msra.mxu0 %v2055
    %2625 = vmatprep.subr.bf16.mxu0 %v2064
    %2626 = vmatpush1.bf16.msra.mxu0 %v2063
    %2627 = vmatprep.subr.bf16.mxu0 %v2072
    %2628 = vmatpush1.bf16.msra.mxu0 %v2071
    %2629 = vmatprep.subr.bf16.mxu0 %v2080
    %2630 = vmatpush1.bf16.msra.mxu0 %v2079
    %2631 = vmatprep.subr.bf16.mxu0 %v2088
    %2632 = vmatpush1.bf16.msra.mxu0 %v2087
    %2633 = vmatprep.subr.bf16.mxu0 %v2096
    %2634 = vmatpush1.bf16.msra.mxu0 %v2095
    %2635 = vmatprep.subr.bf16.mxu0 %v2104
    %2636 = vmatpush1.bf16.msra.mxu0 %v2103
    %2637 = vmatprep.subr.bf16.mxu0 %v2112
    %2638 = vmatpush1.bf16.msra.mxu0 %v2111
    %2639 = vmatprep.subr.bf16.mxu0 %v2120
    %2640 = vmatpush1.bf16.msra.mxu0 %v2119
    %2641 = vmatprep.subr.bf16.mxu0 %v2128
    %2642 = vmatpush1.bf16.msra.mxu0 %v2127
    %2643 = vmatprep.subr.bf16.mxu0 %v2136
    %2644 = vmatpush1.bf16.msra.mxu0 %v2135
    %2645 = vmatprep.subr.bf16.mxu0 %v2144
    %2646 = vmatpush1.bf16.msra.mxu0 %v2143
    %2647 = vmatprep.mubr.bf16.mxu0 %v952
    %2648 = vmatmul.mubr.bf16.gmra.mrb[0].mxu0 %v951
    %v2649 = vpop.f32.mrb[0].mxu0
    %v2650 = vadd.f32 %v1224, %v2649
    %v2651 = vpop.f32.mrb[0].mxu0
    %v2652 = vadd.f32 %v1228, %v2651
    %v2653 = vpop.f32.mrb[0].mxu0
    %v2654 = vpop.f32.mrb[0].mxu0
    %2655 = vdwg.mxu0
    %2656 = vmatprep.subr.bf16.mxu0 %v2152
    %2657 = vmatpush1.bf16.msra.mxu0 %v2151
    %2658 = vmatprep.subr.bf16.mxu0 %v2160
    %2659 = vmatpush1.bf16.msra.mxu0 %v2159
    %2660 = vmatprep.subr.bf16.mxu0 %v2168
    %2661 = vmatpush1.bf16.msra.mxu0 %v2167
    %2662 = vmatprep.subr.bf16.mxu0 %v2176
    %2663 = vmatpush1.bf16.msra.mxu0 %v2175
    %2664 = vmatprep.subr.bf16.mxu0 %v2184
    %2665 = vmatpush1.bf16.msra.mxu0 %v2183
    %2666 = vmatprep.subr.bf16.mxu0 %v2192
    %2667 = vmatpush1.bf16.msra.mxu0 %v2191
    %2668 = vmatprep.subr.bf16.mxu0 %v2200
    %2669 = vmatpush1.bf16.msra.mxu0 %v2199
    %2670 = vmatprep.subr.bf16.mxu0 %v2208
    %2671 = vmatpush1.bf16.msra.mxu0 %v2207
    %2672 = vmatprep.subr.bf16.mxu0 %v2216
    %2673 = vmatpush1.bf16.msra.mxu0 %v2215
    %2674 = vmatprep.subr.bf16.mxu0 %v2224
    %2675 = vmatpush1.bf16.msra.mxu0 %v2223
    %2676 = vmatprep.subr.bf16.mxu0 %v2232
    %2677 = vmatpush1.bf16.msra.mxu0 %v2231
    %2678 = vmatprep.subr.bf16.mxu0 %v2240
    %2679 = vmatpush1.bf16.msra.mxu0 %v2239
    %2680 = vmatprep.subr.bf16.mxu0 %v2248
    %2681 = vmatpush1.bf16.msra.mxu0 %v2247
    %2682 = vmatprep.subr.bf16.mxu0 %v2256
    %2683 = vmatpush1.bf16.msra.mxu0 %v2255
    %2684 = vmatprep.subr.bf16.mxu0 %v2264
    %2685 = vmatpush1.bf16.msra.mxu0 %v2263
    %2686 = vmatprep.subr.bf16.mxu0 %v2272
    %2687 = vmatpush1.bf16.msra.mxu0 %v2271
    %2688 = vmatprep.mubr.bf16.mxu0 %v954
    %2689 = vmatmul.mubr.bf16.gmra.mrb[0].mxu0 %v953
    %v2690 = vpop.f32.mrb[0].mxu0
    %v2691 = vadd.f32 %v2650, %v2690
    %v2692 = vpop.f32.mrb[0].mxu0
    %v2693 = vadd.f32 %v2652, %v2692
    %v2694 = vpop.f32.mrb[0].mxu0
    %v2695 = vpop.f32.mrb[0].mxu0
    %2696 = vdwg.mxu0
    %2697 = vmatprep.subr.bf16.mxu0 %v2026
    %2698 = vmatpush1.bf16.msra.mxu0 %v2025
    %2699 = vmatprep.subr.bf16.mxu0 %v2034
    %2700 = vmatpush1.bf16.msra.mxu0 %v2033
    %2701 = vmatprep.subr.bf16.mxu0 %v2042
    %2702 = vmatpush1.bf16.msra.mxu0 %v2041
    %2703 = vmatprep.subr.bf16.mxu0 %v2050
    %2704 = vmatpush1.bf16.msra.mxu0 %v2049
    %2705 = vmatprep.subr.bf16.mxu0 %v2058
    %2706 = vmatpush1.bf16.msra.mxu0 %v2057
    %2707 = vmatprep.subr.bf16.mxu0 %v2066
    %2708 = vmatpush1.bf16.msra.mxu0 %v2065
    %2709 = vmatprep.subr.bf16.mxu0 %v2074
    %2710 = vmatpush1.bf16.msra.mxu0 %v2073
    %2711 = vmatprep.subr.bf16.mxu0 %v2082
    %2712 = vmatpush1.bf16.msra.mxu0 %v2081
    %2713 = vmatprep.subr.bf16.mxu0 %v2090
    %2714 = vmatpush1.bf16.msra.mxu0 %v2089
    %2715 = vmatprep.subr.bf16.mxu0 %v2098
    %2716 = vmatpush1.bf16.msra.mxu0 %v2097
    %2717 = vmatprep.subr.bf16.mxu0 %v2106
    %2718 = vmatpush1.bf16.msra.mxu0 %v2105
    %2719 = vmatprep.subr.bf16.mxu0 %v2114
    %2720 = vmatpush1.bf16.msra.mxu0 %v2113
    %2721 = vmatprep.subr.bf16.mxu0 %v2122
    %2722 = vmatpush1.bf16.msra.mxu0 %v2121
    %2723 = vmatprep.subr.bf16.mxu0 %v2130
    %2724 = vmatpush1.bf16.msra.mxu0 %v2129
    %2725 = vmatprep.subr.bf16.mxu0 %v2138
    %2726 = vmatpush1.bf16.msra.mxu0 %v2137
    %2727 = vmatprep.subr.bf16.mxu0 %v2146
    %2728 = vmatpush1.bf16.msra.mxu0 %v2145
    %2729 = vmatprep.mubr.bf16.mxu0 %v952
    %2730 = vmatmul.mubr.bf16.gmra.mrb[0].mxu0 %v951
    %v2731 = vpop.f32.mrb[0].mxu0
    %v2732 = vadd.f32 %v1232, %v2731
    %v2733 = vpop.f32.mrb[0].mxu0
    %v2734 = vadd.f32 %v1236, %v2733
    %v2735 = vpop.f32.mrb[0].mxu0
    %v2736 = vpop.f32.mrb[0].mxu0
    %2737 = vdwg.mxu0
    %2738 = vmatprep.subr.bf16.mxu0 %v2154
    %2739 = vmatpush1.bf16.msra.mxu0 %v2153
    %2740 = vmatprep.subr.bf16.mxu0 %v2162
    %2741 = vmatpush1.bf16.msra.mxu0 %v2161
    %2742 = vmatprep.subr.bf16.mxu0 %v2170
    %2743 = vmatpush1.bf16.msra.mxu0 %v2169
    %2744 = vmatprep.subr.bf16.mxu0 %v2178
    %2745 = vmatpush1.bf16.msra.mxu0 %v2177
    %2746 = vmatprep.subr.bf16.mxu0 %v2186
    %2747 = vmatpush1.bf16.msra.mxu0 %v2185
    %2748 = vmatprep.subr.bf16.mxu0 %v2194
    %2749 = vmatpush1.bf16.msra.mxu0 %v2193
    %2750 = vmatprep.subr.bf16.mxu0 %v2202
    %2751 = vmatpush1.bf16.msra.mxu0 %v2201
    %2752 = vmatprep.subr.bf16.mxu0 %v2210
    %2753 = vmatpush1.bf16.msra.mxu0 %v2209
    %2754 = vmatprep.subr.bf16.mxu0 %v2218
    %2755 = vmatpush1.bf16.msra.mxu0 %v2217
    %2756 = vmatprep.subr.bf16.mxu0 %v2226
    %2757 = vmatpush1.bf16.msra.mxu0 %v2225
    %2758 = vmatprep.subr.bf16.mxu0 %v2234
    %2759 = vmatpush1.bf16.msra.mxu0 %v2233
    %2760 = vmatprep.subr.bf16.mxu0 %v2242
    %2761 = vmatpush1.bf16.msra.mxu0 %v2241
    %2762 = vmatprep.subr.bf16.mxu0 %v2250
    %2763 = vmatpush1.bf16.msra.mxu0 %v2249
    %2764 = vmatprep.subr.bf16.mxu0 %v2258
    %2765 = vmatpush1.bf16.msra.mxu0 %v2257
    %2766 = vmatprep.subr.bf16.mxu0 %v2266
    %2767 = vmatpush1.bf16.msra.mxu0 %v2265
    %2768 = vmatprep.subr.bf16.mxu0 %v2274
    %2769 = vmatpush1.bf16.msra.mxu0 %v2273
    %2770 = vmatprep.mubr.bf16.mxu0 %v954
    %2771 = vmatmul.mubr.bf16.gmra.mrb[0].mxu0 %v953
    %v2772 = vpop.f32.mrb[0].mxu0
    %v2773 = vadd.f32 %v2732, %v2772
    %v2774 = vpop.f32.mrb[0].mxu0
    %v2775 = vadd.f32 %v2734, %v2774
    %v2776 = vpop.f32.mrb[0].mxu0
    %v2777 = vpop.f32.mrb[0].mxu0
    %2778 = vdwg.mxu0
    %2779 = vmatprep.subr.bf16.mxu0 %v2028
    %2780 = vmatpush1.bf16.msra.mxu0 %v2027
    %2781 = vmatprep.subr.bf16.mxu0 %v2036
    %2782 = vmatpush1.bf16.msra.mxu0 %v2035
    %2783 = vmatprep.subr.bf16.mxu0 %v2044
    %2784 = vmatpush1.bf16.msra.mxu0 %v2043
    %2785 = vmatprep.subr.bf16.mxu0 %v2052
    %2786 = vmatpush1.bf16.msra.mxu0 %v2051
    %2787 = vmatprep.subr.bf16.mxu0 %v2060
    %2788 = vmatpush1.bf16.msra.mxu0 %v2059
    %2789 = vmatprep.subr.bf16.mxu0 %v2068
    %2790 = vmatpush1.bf16.msra.mxu0 %v2067
    %2791 = vmatprep.subr.bf16.mxu0 %v2076
    %2792 = vmatpush1.bf16.msra.mxu0 %v2075
    %2793 = vmatprep.subr.bf16.mxu0 %v2084
    %2794 = vmatpush1.bf16.msra.mxu0 %v2083
    %2795 = vmatprep.subr.bf16.mxu0 %v2092
    %2796 = vmatpush1.bf16.msra.mxu0 %v2091
    %2797 = vmatprep.subr.bf16.mxu0 %v2100
    %2798 = vmatpush1.bf16.msra.mxu0 %v2099
    %2799 = vmatprep.subr.bf16.mxu0 %v2108
    %2800 = vmatpush1.bf16.msra.mxu0 %v2107
    %2801 = vmatprep.subr.bf16.mxu0 %v2116
    %2802 = vmatpush1.bf16.msra.mxu0 %v2115
    %2803 = vmatprep.subr.bf16.mxu0 %v2124
    %2804 = vmatpush1.bf16.msra.mxu0 %v2123
    %2805 = vmatprep.subr.bf16.mxu0 %v2132
    %2806 = vmatpush1.bf16.msra.mxu0 %v2131
    %2807 = vmatprep.subr.bf16.mxu0 %v2140
    %2808 = vmatpush1.bf16.msra.mxu0 %v2139
    %2809 = vmatprep.subr.bf16.mxu0 %v2148
    %2810 = vmatpush1.bf16.msra.mxu0 %v2147
    %2811 = vmatprep.mubr.bf16.mxu0 %v952
    %2812 = vmatmul.mubr.bf16.gmra.mrb[0].mxu0 %v951
    %v2813 = vpop.f32.mrb[0].mxu0
    %v2814 = vadd.f32 %v1240, %v2813
    %v2815 = vpop.f32.mrb[0].mxu0
    %v2816 = vadd.f32 %v1244, %v2815
    %v2817 = vpop.f32.mrb[0].mxu0
    %v2818 = vpop.f32.mrb[0].mxu0
    %2819 = vdwg.mxu0
    %2820 = vmatprep.subr.bf16.mxu0 %v2156
    %2821 = vmatpush1.bf16.msra.mxu0 %v2155
    %2822 = vmatprep.subr.bf16.mxu0 %v2164
    %2823 = vmatpush1.bf16.msra.mxu0 %v2163
    %2824 = vmatprep.subr.bf16.mxu0 %v2172
    %2825 = vmatpush1.bf16.msra.mxu0 %v2171
    %2826 = vmatprep.subr.bf16.mxu0 %v2180
    %2827 = vmatpush1.bf16.msra.mxu0 %v2179
    %2828 = vmatprep.subr.bf16.mxu0 %v2188
    %2829 = vmatpush1.bf16.msra.mxu0 %v2187
    %2830 = vmatprep.subr.bf16.mxu0 %v2196
    %2831 = vmatpush1.bf16.msra.mxu0 %v2195
    %2832 = vmatprep.subr.bf16.mxu0 %v2204
    %2833 = vmatpush1.bf16.msra.mxu0 %v2203
    %2834 = vmatprep.subr.bf16.mxu0 %v2212
    %2835 = vmatpush1.bf16.msra.mxu0 %v2211
    %2836 = vmatprep.subr.bf16.mxu0 %v2220
    %2837 = vmatpush1.bf16.msra.mxu0 %v2219
    %2838 = vmatprep.subr.bf16.mxu0 %v2228
    %2839 = vmatpush1.bf16.msra.mxu0 %v2227
    %2840 = vmatprep.subr.bf16.mxu0 %v2236
    %2841 = vmatpush1.bf16.msra.mxu0 %v2235
    %2842 = vmatprep.subr.bf16.mxu0 %v2244
    %2843 = vmatpush1.bf16.msra.mxu0 %v2243
    %2844 = vmatprep.subr.bf16.mxu0 %v2252
    %2845 = vmatpush1.bf16.msra.mxu0 %v2251
    %2846 = vmatprep.subr.bf16.mxu0 %v2260
    %2847 = vmatpush1.bf16.msra.mxu0 %v2259
    %2848 = vmatprep.subr.bf16.mxu0 %v2268
    %2849 = vmatpush1.bf16.msra.mxu0 %v2267
    %2850 = vmatprep.subr.bf16.mxu0 %v2276
    %2851 = vmatpush1.bf16.msra.mxu0 %v2275
    %2852 = vmatprep.mubr.bf16.mxu0 %v954
    %2853 = vmatmul.mubr.bf16.gmra.mrb[0].mxu0 %v953
    %v2854 = vpop.f32.mrb[0].mxu0
    %v2855 = vadd.f32 %v2814, %v2854
    %v2856 = vpop.f32.mrb[0].mxu0
    %v2857 = vadd.f32 %v2816, %v2856
    %v2858 = vpop.f32.mrb[0].mxu0
    %v2859 = vpop.f32.mrb[0].mxu0
    %2860 = vdwg.mxu0
    %vm2861 = vcmp.gt.f32.partialorder %v2609, 0.0
    %vm2862 = vcmp.gt.f32.partialorder %v2611, 0.0
    %vm2863 = vcmp.gt.f32.partialorder %v2691, 0.0
    %vm2864 = vcmp.gt.f32.partialorder %v2693, 0.0
    %vm2865 = vcmp.gt.f32.partialorder %v2773, 0.0
    %vm2866 = vcmp.gt.f32.partialorder %v2775, 0.0
    %vm2867 = vcmp.gt.f32.partialorder %v2855, 0.0
    %vm2868 = vcmp.gt.f32.partialorder %v2857, 0.0
    %v2869 = vmul.f32 %v2609, 0.2
    %v2870 = vmul.f32 %v2611, 0.2
    %v2871 = vmul.f32 %v2691, 0.2
    %v2872 = vmul.f32 %v2693, 0.2
    %v2873 = vmul.f32 %v2773, 0.2
    %v2874 = vmul.f32 %v2775, 0.2
    %v2875 = vmul.f32 %v2855, 0.2
    %v2876 = vmul.f32 %v2857, 0.2
    %v2877 = vsel %vm2861, %v2609, %v2869
    %v2878 = vsel %vm2862, %v2611, %v2870
    %v2879 = vsel %vm2863, %v2691, %v2871
    %v2880 = vsel %vm2864, %v2693, %v2872
    %v2881 = vsel %vm2865, %v2773, %v2873
    %v2882 = vsel %vm2866, %v2775, %v2874
    %v2883 = vsel %vm2867, %v2855, %v2875
    %v2884 = vsel %vm2868, %v2857, %v2876
    %v2885 = vpack.c.bf16 %v2877, %v2877
    %v2886 = vpack.c.bf16 %v2878, %v2878
    %v2887 = vpack.c.bf16 %v2879, %v2879
    %v2888 = vpack.c.bf16 %v2880, %v2880
    %v2889 = vpack.c.bf16 %v2881, %v2881
    %v2890 = vpack.c.bf16 %v2882, %v2882
    %v2891 = vpack.c.bf16 %v2883, %v2883
    %v2892 = vpack.c.bf16 %v2884, %v2884
    %v2893 = vld [vmem:[#allocation17] sm:$0xff]
    %v2894 = vld [vmem:[#allocation17 + $0x8] sm:$0xff]
    %v2895 = vld [vmem:[#allocation17 + $0x10] sm:$0xff]
    %v2896 = vld [vmem:[#allocation17 + $0x18] sm:$0xf]
    %v2897 = vld [vmem:[#allocation17 + $0x1c] sm:$0xff]
    %v2898 = vld [vmem:[#allocation17 + $0x24] sm:$0xff]
    %v2899 = vld [vmem:[#allocation17 + $0x2c] sm:$0xff]
    %v2900 = vld [vmem:[#allocation17 + $0x34] sm:$0xf]
    %v2901 = vld [vmem:[#allocation17 + $0x38] sm:$0xff]
    %v2902 = vld [vmem:[#allocation17 + $0x40] sm:$0xff]
    %v2903 = vld [vmem:[#allocation17 + $0x48] sm:$0xff]
    %v2904 = vld [vmem:[#allocation17 + $0x50] sm:$0xf]
    %v2905 = vld [vmem:[#allocation17 + $0x54] sm:$0xff]
    %v2906 = vld [vmem:[#allocation17 + $0x5c] sm:$0xff]
    %v2907 = vld [vmem:[#allocation17 + $0x64] sm:$0xff]
    %v2908 = vld [vmem:[#allocation17 + $0x6c] sm:$0xf]
    %v2909 = vld [vmem:[#allocation17 + $0x70] sm:$0xff]
    %v2910 = vld [vmem:[#allocation17 + $0x78] sm:$0xff]
    %v2911 = vld [vmem:[#allocation17 + $0x80] sm:$0xff]
    %v2912 = vld [vmem:[#allocation17 + $0x88] sm:$0xf]
    %v2913 = vld [vmem:[#allocation17 + $0x8c] sm:$0xff]
    %v2914 = vld [vmem:[#allocation17 + $0x94] sm:$0xff]
    %v2915 = vld [vmem:[#allocation17 + $0x9c] sm:$0xff]
    %v2916 = vld [vmem:[#allocation17 + $0xa4] sm:$0xf]
    %v2917 = vld [vmem:[#allocation17 + $0xa8] sm:$0xff]
    %v2918 = vld [vmem:[#allocation17 + $0xb0] sm:$0xff]
    %v2919 = vld [vmem:[#allocation17 + $0xb8] sm:$0xff]
    %v2920 = vld [vmem:[#allocation17 + $0xc0] sm:$0xf]
    %v2921 = vld [vmem:[#allocation17 + $0xc4] sm:$0xff]
    %v2922 = vld [vmem:[#allocation17 + $0xcc] sm:$0xff]
    %v2923 = vld [vmem:[#allocation17 + $0xd4] sm:$0xff]
    %v2924 = vld [vmem:[#allocation17 + $0xdc] sm:$0xf]
    %v2925 = vld [vmem:[#allocation17 + $0xe0] sm:$0xff]
    %v2926 = vld [vmem:[#allocation17 + $0xe8] sm:$0xff]
    %v2927 = vld [vmem:[#allocation17 + $0xf0] sm:$0xff]
    %v2928 = vld [vmem:[#allocation17 + $0xf8] sm:$0xf]
    %v2929 = vld [vmem:[#allocation17 + $0xfc] sm:$0xff]
    %v2930 = vld [vmem:[#allocation17 + $0x104] sm:$0xff]
    %v2931 = vld [vmem:[#allocation17 + $0x10c] sm:$0xff]
    %v2932 = vld [vmem:[#allocation17 + $0x114] sm:$0xf]
    %v2933 = vld [vmem:[#allocation17 + $0x118] sm:$0xff]
    %v2934 = vld [vmem:[#allocation17 + $0x120] sm:$0xff]
    %v2935 = vld [vmem:[#allocation17 + $0x128] sm:$0xff]
    %v2936 = vld [vmem:[#allocation17 + $0x130] sm:$0xf]
    %v2937 = vld [vmem:[#allocation17 + $0x134] sm:$0xff]
    %v2938 = vld [vmem:[#allocation17 + $0x13c] sm:$0xff]
    %v2939 = vld [vmem:[#allocation17 + $0x144] sm:$0xff]
    %v2940 = vld [vmem:[#allocation17 + $0x14c] sm:$0xf]
    %v2941 = vld [vmem:[#allocation17 + $0x150] sm:$0xff]
    %v2942 = vld [vmem:[#allocation17 + $0x158] sm:$0xff]
    %v2943 = vld [vmem:[#allocation17 + $0x160] sm:$0xff]
    %v2944 = vld [vmem:[#allocation17 + $0x168] sm:$0xf]
    %v2945 = vld [vmem:[#allocation17 + $0x16c] sm:$0xff]
    %v2946 = vld [vmem:[#allocation17 + $0x174] sm:$0xff]
    %v2947 = vld [vmem:[#allocation17 + $0x17c] sm:$0xff]
    %v2948 = vld [vmem:[#allocation17 + $0x184] sm:$0xf]
    %v2949 = vld [vmem:[#allocation17 + $0x188] sm:$0xff]
    %v2950 = vld [vmem:[#allocation17 + $0x190] sm:$0xff]
    %v2951 = vld [vmem:[#allocation17 + $0x198] sm:$0xff]
    %v2952 = vld [vmem:[#allocation17 + $0x1a0] sm:$0xf]
    %v2953 = vld [vmem:[#allocation17 + $0x1a4] sm:$0xff]
    %v2954 = vld [vmem:[#allocation17 + $0x1ac] sm:$0xff]
    %v2955 = vld [vmem:[#allocation17 + $0x1b4] sm:$0xff]
    %v2956 = vld [vmem:[#allocation17 + $0x1bc] sm:$0xf]
    %v2957 = vld [vmem:[#allocation17 + $0x1c0] sm:$0xff]
    %v2958 = vld [vmem:[#allocation17 + $0x1c8] sm:$0xff]
    %v2959 = vld [vmem:[#allocation17 + $0x1d0] sm:$0xff]
    %v2960 = vld [vmem:[#allocation17 + $0x1d8] sm:$0xf]
    %v2961 = vld [vmem:[#allocation17 + $0x1dc] sm:$0xff]
    %v2962 = vld [vmem:[#allocation17 + $0x1e4] sm:$0xff]
    %v2963 = vld [vmem:[#allocation17 + $0x1ec] sm:$0xff]
    %v2964 = vld [vmem:[#allocation17 + $0x1f4] sm:$0xf]
    %v2965 = vld [vmem:[#allocation17 + $0x1f8] sm:$0xff]
    %v2966 = vld [vmem:[#allocation17 + $0x200] sm:$0xff]
    %v2967 = vld [vmem:[#allocation17 + $0x208] sm:$0xff]
    %v2968 = vld [vmem:[#allocation17 + $0x210] sm:$0xf]
    %v2969 = vld [vmem:[#allocation17 + $0x214] sm:$0xff]
    %v2970 = vld [vmem:[#allocation17 + $0x21c] sm:$0xff]
    %v2971 = vld [vmem:[#allocation17 + $0x224] sm:$0xff]
    %v2972 = vld [vmem:[#allocation17 + $0x22c] sm:$0xf]
    %v2973 = vld [vmem:[#allocation17 + $0x230] sm:$0xff]
    %v2974 = vld [vmem:[#allocation17 + $0x238] sm:$0xff]
    %v2975 = vld [vmem:[#allocation17 + $0x240] sm:$0xff]
    %v2976 = vld [vmem:[#allocation17 + $0x248] sm:$0xf]
    %v2977 = vld [vmem:[#allocation17 + $0x24c] sm:$0xff]
    %v2978 = vld [vmem:[#allocation17 + $0x254] sm:$0xff]
    %v2979 = vld [vmem:[#allocation17 + $0x25c] sm:$0xff]
    %v2980 = vld [vmem:[#allocation17 + $0x264] sm:$0xf]
    %v2981 = vld [vmem:[#allocation17 + $0x268] sm:$0xff]
    %v2982 = vld [vmem:[#allocation17 + $0x270] sm:$0xff]
    %v2983 = vld [vmem:[#allocation17 + $0x278] sm:$0xff]
    %v2984 = vld [vmem:[#allocation17 + $0x280] sm:$0xf]
    %v2985 = vld [vmem:[#allocation17 + $0x284] sm:$0xff]
    %v2986 = vld [vmem:[#allocation17 + $0x28c] sm:$0xff]
    %v2987 = vld [vmem:[#allocation17 + $0x294] sm:$0xff]
    %v2988 = vld [vmem:[#allocation17 + $0x29c] sm:$0xf]
    %v2989 = vld [vmem:[#allocation17 + $0x2a0] sm:$0xff]
    %v2990 = vld [vmem:[#allocation17 + $0x2a8] sm:$0xff]
    %v2991 = vld [vmem:[#allocation17 + $0x2b0] sm:$0xff]
    %v2992 = vld [vmem:[#allocation17 + $0x2b8] sm:$0xf]
    %v2993 = vld [vmem:[#allocation17 + $0x2bc] sm:$0xff]
    %v2994 = vld [vmem:[#allocation17 + $0x2c4] sm:$0xff]
    %v2995 = vld [vmem:[#allocation17 + $0x2cc] sm:$0xff]
    %v2996 = vld [vmem:[#allocation17 + $0x2d4] sm:$0xf]
    %v2997 = vld [vmem:[#allocation17 + $0x2d8] sm:$0xff]
    %v2998 = vld [vmem:[#allocation17 + $0x2e0] sm:$0xff]
    %v2999 = vld [vmem:[#allocation17 + $0x2e8] sm:$0xff]
    %v3000 = vld [vmem:[#allocation17 + $0x2f0] sm:$0xf]
    %v3001 = vld [vmem:[#allocation17 + $0x2f4] sm:$0xff]
    %v3002 = vld [vmem:[#allocation17 + $0x2fc] sm:$0xff]
    %v3003 = vld [vmem:[#allocation17 + $0x304] sm:$0xff]
    %v3004 = vld [vmem:[#allocation17 + $0x30c] sm:$0xf]
    %v3005 = vld [vmem:[#allocation17 + $0x310] sm:$0xff]
    %v3006 = vld [vmem:[#allocation17 + $0x318] sm:$0xff]
    %v3007 = vld [vmem:[#allocation17 + $0x320] sm:$0xff]
    %v3008 = vld [vmem:[#allocation17 + $0x328] sm:$0xf]
    %v3009 = vld [vmem:[#allocation17 + $0x32c] sm:$0xff]
    %v3010 = vld [vmem:[#allocation17 + $0x334] sm:$0xff]
    %v3011 = vld [vmem:[#allocation17 + $0x33c] sm:$0xff]
    %v3012 = vld [vmem:[#allocation17 + $0x344] sm:$0xf]
    %v3013 = vld [vmem:[#allocation17 + $0x348] sm:$0xff]
    %v3014 = vld [vmem:[#allocation17 + $0x350] sm:$0xff]
    %v3015 = vld [vmem:[#allocation17 + $0x358] sm:$0xff]
    %v3016 = vld [vmem:[#allocation17 + $0x360] sm:$0xf]
    %v3017 = vld [vmem:[#allocation17 + $0x364] sm:$0xff]
    %v3018 = vld [vmem:[#allocation17 + $0x36c] sm:$0xff]
    %v3019 = vld [vmem:[#allocation17 + $0x374] sm:$0xff]
    %v3020 = vld [vmem:[#allocation17 + $0x37c] sm:$0xf]
    %v3021 = vld [vmem:[#allocation17 + $0x380] sm:$0xff]
    %v3022 = vld [vmem:[#allocation17 + $0x388] sm:$0xff]
    %v3023 = vld [vmem:[#allocation17 + $0x390] sm:$0xff]
    %v3024 = vld [vmem:[#allocation17 + $0x398] sm:$0xf]
    %v3025 = vld [vmem:[#allocation17 + $0x39c] sm:$0xff]
    %v3026 = vld [vmem:[#allocation17 + $0x3a4] sm:$0xff]
    %v3027 = vld [vmem:[#allocation17 + $0x3ac] sm:$0xff]
    %v3028 = vld [vmem:[#allocation17 + $0x3b4] sm:$0xf]
    %v3029 = vld [vmem:[#allocation17 + $0x3b8] sm:$0xff]
    %v3030 = vld [vmem:[#allocation17 + $0x3c0] sm:$0xff]
    %v3031 = vld [vmem:[#allocation17 + $0x3c8] sm:$0xff]
    %v3032 = vld [vmem:[#allocation17 + $0x3d0] sm:$0xf]
    %v3033 = vld [vmem:[#allocation17 + $0x3d4] sm:$0xff]
    %v3034 = vld [vmem:[#allocation17 + $0x3dc] sm:$0xff]
    %v3035 = vld [vmem:[#allocation17 + $0x3e4] sm:$0xff]
    %v3036 = vld [vmem:[#allocation17 + $0x3ec] sm:$0xf]
    %v3037 = vld [vmem:[#allocation17 + $0x3f0] sm:$0xff]
    %v3038 = vld [vmem:[#allocation17 + $0x3f8] sm:$0xff]
    %v3039 = vld [vmem:[#allocation17 + $0x400] sm:$0xff]
    %v3040 = vld [vmem:[#allocation17 + $0x408] sm:$0xf]
    %v3041 = vld [vmem:[#allocation17 + $0x40c] sm:$0xff]
    %v3042 = vld [vmem:[#allocation17 + $0x414] sm:$0xff]
    %v3043 = vld [vmem:[#allocation17 + $0x41c] sm:$0xff]
    %v3044 = vld [vmem:[#allocation17 + $0x424] sm:$0xf]
    %v3045 = vld [vmem:[#allocation17 + $0x428] sm:$0xff]
    %v3046 = vld [vmem:[#allocation17 + $0x430] sm:$0xff]
    %v3047 = vld [vmem:[#allocation17 + $0x438] sm:$0xff]
    %v3048 = vld [vmem:[#allocation17 + $0x440] sm:$0xf]
    %v3049 = vld [vmem:[#allocation17 + $0x444] sm:$0xff]
    %v3050 = vld [vmem:[#allocation17 + $0x44c] sm:$0xff]
    %v3051 = vld [vmem:[#allocation17 + $0x454] sm:$0xff]
    %v3052 = vld [vmem:[#allocation17 + $0x45c] sm:$0xf]
    %v3053 = vld [vmem:[#allocation17 + $0x460] sm:$0xff]
    %v3054 = vld [vmem:[#allocation17 + $0x468] sm:$0xff]
    %v3055 = vld [vmem:[#allocation17 + $0x470] sm:$0xff]
    %v3056 = vld [vmem:[#allocation17 + $0x478] sm:$0xf]
    %v3057 = vld [vmem:[#allocation17 + $0x47c] sm:$0xff]
    %v3058 = vld [vmem:[#allocation17 + $0x484] sm:$0xff]
    %v3059 = vld [vmem:[#allocation17 + $0x48c] sm:$0xff]
    %v3060 = vld [vmem:[#allocation17 + $0x494] sm:$0xf]
    %v3061 = vld [vmem:[#allocation17 + $0x498] sm:$0xff]
    %v3062 = vld [vmem:[#allocation17 + $0x4a0] sm:$0xff]
    %v3063 = vld [vmem:[#allocation17 + $0x4a8] sm:$0xff]
    %v3064 = vld [vmem:[#allocation17 + $0x4b0] sm:$0xf]
    %v3065 = vld [vmem:[#allocation17 + $0x4b4] sm:$0xff]
    %v3066 = vld [vmem:[#allocation17 + $0x4bc] sm:$0xff]
    %v3067 = vld [vmem:[#allocation17 + $0x4c4] sm:$0xff]
    %v3068 = vld [vmem:[#allocation17 + $0x4cc] sm:$0xf]
    %v3069 = vld [vmem:[#allocation17 + $0x4d0] sm:$0xff]
    %v3070 = vld [vmem:[#allocation17 + $0x4d8] sm:$0xff]
    %v3071 = vld [vmem:[#allocation17 + $0x4e0] sm:$0xff]
    %v3072 = vld [vmem:[#allocation17 + $0x4e8] sm:$0xf]
    %v3073 = vld [vmem:[#allocation17 + $0x4ec] sm:$0xff]
    %v3074 = vld [vmem:[#allocation17 + $0x4f4] sm:$0xff]
    %v3075 = vld [vmem:[#allocation17 + $0x4fc] sm:$0xff]
    %v3076 = vld [vmem:[#allocation17 + $0x504] sm:$0xf]
    %v3077 = vld [vmem:[#allocation17 + $0x508] sm:$0xff]
    %v3078 = vld [vmem:[#allocation17 + $0x510] sm:$0xff]
    %v3079 = vld [vmem:[#allocation17 + $0x518] sm:$0xff]
    %v3080 = vld [vmem:[#allocation17 + $0x520] sm:$0xf]
    %v3081 = vld [vmem:[#allocation17 + $0x524] sm:$0xff]
    %v3082 = vld [vmem:[#allocation17 + $0x52c] sm:$0xff]
    %v3083 = vld [vmem:[#allocation17 + $0x534] sm:$0xff]
    %v3084 = vld [vmem:[#allocation17 + $0x53c] sm:$0xf]
    %v3085 = vld [vmem:[#allocation17 + $0x540] sm:$0xff]
    %v3086 = vld [vmem:[#allocation17 + $0x548] sm:$0xff]
    %v3087 = vld [vmem:[#allocation17 + $0x550] sm:$0xff]
    %v3088 = vld [vmem:[#allocation17 + $0x558] sm:$0xf]
    %v3089 = vld [vmem:[#allocation17 + $0x55c] sm:$0xff]
    %v3090 = vld [vmem:[#allocation17 + $0x564] sm:$0xff]
    %v3091 = vld [vmem:[#allocation17 + $0x56c] sm:$0xff]
    %v3092 = vld [vmem:[#allocation17 + $0x574] sm:$0xf]
    %v3093 = vld [vmem:[#allocation17 + $0x578] sm:$0xff]
    %v3094 = vld [vmem:[#allocation17 + $0x580] sm:$0xff]
    %v3095 = vld [vmem:[#allocation17 + $0x588] sm:$0xff]
    %v3096 = vld [vmem:[#allocation17 + $0x590] sm:$0xf]
    %v3097 = vld [vmem:[#allocation17 + $0x594] sm:$0xff]
    %v3098 = vld [vmem:[#allocation17 + $0x59c] sm:$0xff]
    %v3099 = vld [vmem:[#allocation17 + $0x5a4] sm:$0xff]
    %v3100 = vld [vmem:[#allocation17 + $0x5ac] sm:$0xf]
    %v3101 = vld [vmem:[#allocation17 + $0x5b0] sm:$0xff]
    %v3102 = vld [vmem:[#allocation17 + $0x5b8] sm:$0xff]
    %v3103 = vld [vmem:[#allocation17 + $0x5c0] sm:$0xff]
    %v3104 = vld [vmem:[#allocation17 + $0x5c8] sm:$0xf]
    %v3105 = vld [vmem:[#allocation17 + $0x5cc] sm:$0xff]
    %v3106 = vld [vmem:[#allocation17 + $0x5d4] sm:$0xff]
    %v3107 = vld [vmem:[#allocation17 + $0x5dc] sm:$0xff]
    %v3108 = vld [vmem:[#allocation17 + $0x5e4] sm:$0xf]
    %v3109 = vld [vmem:[#allocation17 + $0x5e8] sm:$0xff]
    %v3110 = vld [vmem:[#allocation17 + $0x5f0] sm:$0xff]
    %v3111 = vld [vmem:[#allocation17 + $0x5f8] sm:$0xff]
    %v3112 = vld [vmem:[#allocation17 + $0x600] sm:$0xf]
    %v3113 = vld [vmem:[#allocation17 + $0x604] sm:$0xff]
    %v3114 = vld [vmem:[#allocation17 + $0x60c] sm:$0xff]
    %v3115 = vld [vmem:[#allocation17 + $0x614] sm:$0xff]
    %v3116 = vld [vmem:[#allocation17 + $0x61c] sm:$0xf]
    %v3117 = vld [vmem:[#allocation17 + $0x620] sm:$0xff]
    %v3118 = vld [vmem:[#allocation17 + $0x628] sm:$0xff]
    %v3119 = vld [vmem:[#allocation17 + $0x630] sm:$0xff]
    %v3120 = vld [vmem:[#allocation17 + $0x638] sm:$0xf]
    %v3121 = vld [vmem:[#allocation17 + $0x63c] sm:$0xff]
    %v3122 = vld [vmem:[#allocation17 + $0x644] sm:$0xff]
    %v3123 = vld [vmem:[#allocation17 + $0x64c] sm:$0xff]
    %v3124 = vld [vmem:[#allocation17 + $0x654] sm:$0xf]
    %v3125 = vld [vmem:[#allocation17 + $0x658] sm:$0xff]
    %v3126 = vld [vmem:[#allocation17 + $0x660] sm:$0xff]
    %v3127 = vld [vmem:[#allocation17 + $0x668] sm:$0xff]
    %v3128 = vld [vmem:[#allocation17 + $0x670] sm:$0xf]
    %v3129 = vld [vmem:[#allocation17 + $0x674] sm:$0xff]
    %v3130 = vld [vmem:[#allocation17 + $0x67c] sm:$0xff]
    %v3131 = vld [vmem:[#allocation17 + $0x684] sm:$0xff]
    %v3132 = vld [vmem:[#allocation17 + $0x68c] sm:$0xf]
    %v3133 = vld [vmem:[#allocation17 + $0x690] sm:$0xff]
    %v3134 = vld [vmem:[#allocation17 + $0x698] sm:$0xff]
    %v3135 = vld [vmem:[#allocation17 + $0x6a0] sm:$0xff]
    %v3136 = vld [vmem:[#allocation17 + $0x6a8] sm:$0xf]
    %v3137 = vld [vmem:[#allocation17 + $0x6ac] sm:$0xff]
    %v3138 = vld [vmem:[#allocation17 + $0x6b4] sm:$0xff]
    %v3139 = vld [vmem:[#allocation17 + $0x6bc] sm:$0xff]
    %v3140 = vld [vmem:[#allocation17 + $0x6c4] sm:$0xf]
    %v3141 = vld [vmem:[#allocation17 + $0x6c8] sm:$0xff]
    %v3142 = vld [vmem:[#allocation17 + $0x6d0] sm:$0xff]
    %v3143 = vld [vmem:[#allocation17 + $0x6d8] sm:$0xff]
    %v3144 = vld [vmem:[#allocation17 + $0x6e0] sm:$0xf]
    %v3145 = vld [vmem:[#allocation17 + $0x6e4] sm:$0xff]
    %v3146 = vld [vmem:[#allocation17 + $0x6ec] sm:$0xff]
    %v3147 = vld [vmem:[#allocation17 + $0x6f4] sm:$0xff]
    %v3148 = vld [vmem:[#allocation17 + $0x6fc] sm:$0xf]
    %v3149 = vld [vmem:[#allocation17 + $0x700] sm:$0xff]
    %v3150 = vld [vmem:[#allocation17 + $0x708] sm:$0xff]
    %v3151 = vld [vmem:[#allocation17 + $0x710] sm:$0xff]
    %v3152 = vld [vmem:[#allocation17 + $0x718] sm:$0xf]
    %v3153 = vld [vmem:[#allocation17 + $0x71c] sm:$0xff]
    %v3154 = vld [vmem:[#allocation17 + $0x724] sm:$0xff]
    %v3155 = vld [vmem:[#allocation17 + $0x72c] sm:$0xff]
    %v3156 = vld [vmem:[#allocation17 + $0x734] sm:$0xf]
    %v3157 = vld [vmem:[#allocation17 + $0x738] sm:$0xff]
    %v3158 = vld [vmem:[#allocation17 + $0x740] sm:$0xff]
    %v3159 = vld [vmem:[#allocation17 + $0x748] sm:$0xff]
    %v3160 = vld [vmem:[#allocation17 + $0x750] sm:$0xf]
    %v3161 = vld [vmem:[#allocation17 + $0x754] sm:$0xff]
    %v3162 = vld [vmem:[#allocation17 + $0x75c] sm:$0xff]
    %v3163 = vld [vmem:[#allocation17 + $0x764] sm:$0xff]
    %v3164 = vld [vmem:[#allocation17 + $0x76c] sm:$0xf]
    %v3165 = vld [vmem:[#allocation17 + $0x770] sm:$0xff]
    %v3166 = vld [vmem:[#allocation17 + $0x778] sm:$0xff]
    %v3167 = vld [vmem:[#allocation17 + $0x780] sm:$0xff]
    %v3168 = vld [vmem:[#allocation17 + $0x788] sm:$0xf]
    %v3169 = vld [vmem:[#allocation17 + $0x78c] sm:$0xff]
    %v3170 = vld [vmem:[#allocation17 + $0x794] sm:$0xff]
    %v3171 = vld [vmem:[#allocation17 + $0x79c] sm:$0xff]
    %v3172 = vld [vmem:[#allocation17 + $0x7a4] sm:$0xf]
    %v3173 = vld [vmem:[#allocation17 + $0x7a8] sm:$0xff]
    %v3174 = vld [vmem:[#allocation17 + $0x7b0] sm:$0xff]
    %v3175 = vld [vmem:[#allocation17 + $0x7b8] sm:$0xff]
    %v3176 = vld [vmem:[#allocation17 + $0x7c0] sm:$0xf]
    %v3177 = vld [vmem:[#allocation17 + $0x7c4] sm:$0xff]
    %v3178 = vld [vmem:[#allocation17 + $0x7cc] sm:$0xff]
    %v3179 = vld [vmem:[#allocation17 + $0x7d4] sm:$0xff]
    %v3180 = vld [vmem:[#allocation17 + $0x7dc] sm:$0xf]
    %v3181 = vld [vmem:[#allocation17 + $0x7e0] sm:$0xff]
    %v3182 = vld [vmem:[#allocation17 + $0x7e8] sm:$0xff]
    %v3183 = vld [vmem:[#allocation17 + $0x7f0] sm:$0xff]
    %v3184 = vld [vmem:[#allocation17 + $0x7f8] sm:$0xf]
    %v3185 = vld [vmem:[#allocation17 + $0x7fc] sm:$0xff]
    %v3186 = vld [vmem:[#allocation17 + $0x804] sm:$0xff]
    %v3187 = vld [vmem:[#allocation17 + $0x80c] sm:$0xff]
    %v3188 = vld [vmem:[#allocation17 + $0x814] sm:$0xf]
    %v3189 = vld [vmem:[#allocation17 + $0x818] sm:$0xff]
    %v3190 = vld [vmem:[#allocation17 + $0x820] sm:$0xff]
    %v3191 = vld [vmem:[#allocation17 + $0x828] sm:$0xff]
    %v3192 = vld [vmem:[#allocation17 + $0x830] sm:$0xf]
    %v3193 = vld [vmem:[#allocation17 + $0x834] sm:$0xff]
    %v3194 = vld [vmem:[#allocation17 + $0x83c] sm:$0xff]
    %v3195 = vld [vmem:[#allocation17 + $0x844] sm:$0xff]
    %v3196 = vld [vmem:[#allocation17 + $0x84c] sm:$0xf]
    %v3197 = vld [vmem:[#allocation17 + $0x850] sm:$0xff]
    %v3198 = vld [vmem:[#allocation17 + $0x858] sm:$0xff]
    %v3199 = vld [vmem:[#allocation17 + $0x860] sm:$0xff]
    %v3200 = vld [vmem:[#allocation17 + $0x868] sm:$0xf]
    %v3201 = vld [vmem:[#allocation17 + $0x86c] sm:$0xff]
    %v3202 = vld [vmem:[#allocation17 + $0x874] sm:$0xff]
    %v3203 = vld [vmem:[#allocation17 + $0x87c] sm:$0xff]
    %v3204 = vld [vmem:[#allocation17 + $0x884] sm:$0xf]
    %v3205 = vld [vmem:[#allocation17 + $0x888] sm:$0xff]
    %v3206 = vld [vmem:[#allocation17 + $0x890] sm:$0xff]
    %v3207 = vld [vmem:[#allocation17 + $0x898] sm:$0xff]
    %v3208 = vld [vmem:[#allocation17 + $0x8a0] sm:$0xf]
    %v3209 = vld [vmem:[#allocation17 + $0x8a4] sm:$0xff]
    %v3210 = vld [vmem:[#allocation17 + $0x8ac] sm:$0xff]
    %v3211 = vld [vmem:[#allocation17 + $0x8b4] sm:$0xff]
    %v3212 = vld [vmem:[#allocation17 + $0x8bc] sm:$0xf]
    %v3213 = vld [vmem:[#allocation17 + $0x8c0] sm:$0xff]
    %v3214 = vld [vmem:[#allocation17 + $0x8c8] sm:$0xff]
    %v3215 = vld [vmem:[#allocation17 + $0x8d0] sm:$0xff]
    %v3216 = vld [vmem:[#allocation17 + $0x8d8] sm:$0xf]
    %v3217 = vld [vmem:[#allocation17 + $0x8dc] sm:$0xff]
    %v3218 = vld [vmem:[#allocation17 + $0x8e4] sm:$0xff]
    %v3219 = vld [vmem:[#allocation17 + $0x8ec] sm:$0xff]
    %v3220 = vld [vmem:[#allocation17 + $0x8f4] sm:$0xf]
    %v3221 = vld [vmem:[#allocation17 + $0x8f8] sm:$0xff]
    %v3222 = vld [vmem:[#allocation17 + $0x900] sm:$0xff]
    %v3223 = vld [vmem:[#allocation17 + $0x908] sm:$0xff]
    %v3224 = vld [vmem:[#allocation17 + $0x910] sm:$0xf]
    %v3225 = vld [vmem:[#allocation17 + $0x914] sm:$0xff]
    %v3226 = vld [vmem:[#allocation17 + $0x91c] sm:$0xff]
    %v3227 = vld [vmem:[#allocation17 + $0x924] sm:$0xff]
    %v3228 = vld [vmem:[#allocation17 + $0x92c] sm:$0xf]
    %v3229 = vld [vmem:[#allocation17 + $0x930] sm:$0xff]
    %v3230 = vld [vmem:[#allocation17 + $0x938] sm:$0xff]
    %v3231 = vld [vmem:[#allocation17 + $0x940] sm:$0xff]
    %v3232 = vld [vmem:[#allocation17 + $0x948] sm:$0xf]
    %v3233 = vld [vmem:[#allocation17 + $0x94c] sm:$0xff]
    %v3234 = vld [vmem:[#allocation17 + $0x954] sm:$0xff]
    %v3235 = vld [vmem:[#allocation17 + $0x95c] sm:$0xff]
    %v3236 = vld [vmem:[#allocation17 + $0x964] sm:$0xf]
    %v3237 = vld [vmem:[#allocation17 + $0x968] sm:$0xff]
    %v3238 = vld [vmem:[#allocation17 + $0x970] sm:$0xff]
    %v3239 = vld [vmem:[#allocation17 + $0x978] sm:$0xff]
    %v3240 = vld [vmem:[#allocation17 + $0x980] sm:$0xf]
    %v3241 = vld [vmem:[#allocation17 + $0x984] sm:$0xff]
    %v3242 = vld [vmem:[#allocation17 + $0x98c] sm:$0xff]
    %v3243 = vld [vmem:[#allocation17 + $0x994] sm:$0xff]
    %v3244 = vld [vmem:[#allocation17 + $0x99c] sm:$0xf]
    %v3245 = vld [vmem:[#allocation17 + $0x9a0] sm:$0xff]
    %v3246 = vld [vmem:[#allocation17 + $0x9a8] sm:$0xff]
    %v3247 = vld [vmem:[#allocation17 + $0x9b0] sm:$0xff]
    %v3248 = vld [vmem:[#allocation17 + $0x9b8] sm:$0xf]
    %v3249 = vld [vmem:[#allocation17 + $0x9bc] sm:$0xff]
    %v3250 = vld [vmem:[#allocation17 + $0x9c4] sm:$0xff]
    %v3251 = vld [vmem:[#allocation17 + $0x9cc] sm:$0xff]
    %v3252 = vld [vmem:[#allocation17 + $0x9d4] sm:$0xf]
    %v3253 = vld [vmem:[#allocation17 + $0x9d8] sm:$0xff]
    %v3254 = vld [vmem:[#allocation17 + $0x9e0] sm:$0xff]
    %v3255 = vld [vmem:[#allocation17 + $0x9e8] sm:$0xff]
    %v3256 = vld [vmem:[#allocation17 + $0x9f0] sm:$0xf]
    %v3257 = vld [vmem:[#allocation17 + $0x9f4] sm:$0xff]
    %v3258 = vld [vmem:[#allocation17 + $0x9fc] sm:$0xff]
    %v3259 = vld [vmem:[#allocation17 + $0xa04] sm:$0xff]
    %v3260 = vld [vmem:[#allocation17 + $0xa0c] sm:$0xf]
    %v3261 = vld [vmem:[#allocation17 + $0xa10] sm:$0xff]
    %v3262 = vld [vmem:[#allocation17 + $0xa18] sm:$0xff]
    %v3263 = vld [vmem:[#allocation17 + $0xa20] sm:$0xff]
    %v3264 = vld [vmem:[#allocation17 + $0xa28] sm:$0xf]
    %v3265 = vld [vmem:[#allocation17 + $0xa2c] sm:$0xff]
    %v3266 = vld [vmem:[#allocation17 + $0xa34] sm:$0xff]
    %v3267 = vld [vmem:[#allocation17 + $0xa3c] sm:$0xff]
    %v3268 = vld [vmem:[#allocation17 + $0xa44] sm:$0xf]
    %v3269 = vld [vmem:[#allocation17 + $0xa48] sm:$0xff]
    %v3270 = vld [vmem:[#allocation17 + $0xa50] sm:$0xff]
    %v3271 = vld [vmem:[#allocation17 + $0xa58] sm:$0xff]
    %v3272 = vld [vmem:[#allocation17 + $0xa60] sm:$0xf]
    %v3273 = vld [vmem:[#allocation17 + $0xa64] sm:$0xff]
    %v3274 = vld [vmem:[#allocation17 + $0xa6c] sm:$0xff]
    %v3275 = vld [vmem:[#allocation17 + $0xa74] sm:$0xff]
    %v3276 = vld [vmem:[#allocation17 + $0xa7c] sm:$0xf]
    %v3277 = vld [vmem:[#allocation17 + $0xa80] sm:$0xff]
    %v3278 = vld [vmem:[#allocation17 + $0xa88] sm:$0xff]
    %v3279 = vld [vmem:[#allocation17 + $0xa90] sm:$0xff]
    %v3280 = vld [vmem:[#allocation17 + $0xa98] sm:$0xf]
    %v3281 = vld [vmem:[#allocation17 + $0xa9c] sm:$0xff]
    %v3282 = vld [vmem:[#allocation17 + $0xaa4] sm:$0xff]
    %v3283 = vld [vmem:[#allocation17 + $0xaac] sm:$0xff]
    %v3284 = vld [vmem:[#allocation17 + $0xab4] sm:$0xf]
    %v3285 = vld [vmem:[#allocation17 + $0xab8] sm:$0xff]
    %v3286 = vld [vmem:[#allocation17 + $0xac0] sm:$0xff]
    %v3287 = vld [vmem:[#allocation17 + $0xac8] sm:$0xff]
    %v3288 = vld [vmem:[#allocation17 + $0xad0] sm:$0xf]
    %v3289 = vld [vmem:[#allocation17 + $0xad4] sm:$0xff]
    %v3290 = vld [vmem:[#allocation17 + $0xadc] sm:$0xff]
    %v3291 = vld [vmem:[#allocation17 + $0xae4] sm:$0xff]
    %v3292 = vld [vmem:[#allocation17 + $0xaec] sm:$0xf]
    %v3293 = vld [vmem:[#allocation17 + $0xaf0] sm:$0xff]
    %v3294 = vld [vmem:[#allocation17 + $0xaf8] sm:$0xff]
    %v3295 = vld [vmem:[#allocation17 + $0xb00] sm:$0xff]
    %v3296 = vld [vmem:[#allocation17 + $0xb08] sm:$0xf]
    %v3297 = vld [vmem:[#allocation17 + $0xb0c] sm:$0xff]
    %v3298 = vld [vmem:[#allocation17 + $0xb14] sm:$0xff]
    %v3299 = vld [vmem:[#allocation17 + $0xb1c] sm:$0xff]
    %v3300 = vld [vmem:[#allocation17 + $0xb24] sm:$0xf]
    %v3301 = vld [vmem:[#allocation17 + $0xb28] sm:$0xff]
    %v3302 = vld [vmem:[#allocation17 + $0xb30] sm:$0xff]
    %v3303 = vld [vmem:[#allocation17 + $0xb38] sm:$0xff]
    %v3304 = vld [vmem:[#allocation17 + $0xb40] sm:$0xf]
    %v3305 = vld [vmem:[#allocation17 + $0xb44] sm:$0xff]
    %v3306 = vld [vmem:[#allocation17 + $0xb4c] sm:$0xff]
    %v3307 = vld [vmem:[#allocation17 + $0xb54] sm:$0xff]
    %v3308 = vld [vmem:[#allocation17 + $0xb5c] sm:$0xf]
    %v3309 = vld [vmem:[#allocation17 + $0xb60] sm:$0xff]
    %v3310 = vld [vmem:[#allocation17 + $0xb68] sm:$0xff]
    %v3311 = vld [vmem:[#allocation17 + $0xb70] sm:$0xff]
    %v3312 = vld [vmem:[#allocation17 + $0xb78] sm:$0xf]
    %v3313 = vld [vmem:[#allocation17 + $0xb7c] sm:$0xff]
    %v3314 = vld [vmem:[#allocation17 + $0xb84] sm:$0xff]
    %v3315 = vld [vmem:[#allocation17 + $0xb8c] sm:$0xff]
    %v3316 = vld [vmem:[#allocation17 + $0xb94] sm:$0xf]
    %v3317 = vld [vmem:[#allocation17 + $0xb98] sm:$0xff]
    %v3318 = vld [vmem:[#allocation17 + $0xba0] sm:$0xff]
    %v3319 = vld [vmem:[#allocation17 + $0xba8] sm:$0xff]
    %v3320 = vld [vmem:[#allocation17 + $0xbb0] sm:$0xf]
    %v3321 = vld [vmem:[#allocation17 + $0xbb4] sm:$0xff]
    %v3322 = vld [vmem:[#allocation17 + $0xbbc] sm:$0xff]
    %v3323 = vld [vmem:[#allocation17 + $0xbc4] sm:$0xff]
    %v3324 = vld [vmem:[#allocation17 + $0xbcc] sm:$0xf]
    %v3325 = vld [vmem:[#allocation17 + $0xbd0] sm:$0xff]
    %v3326 = vld [vmem:[#allocation17 + $0xbd8] sm:$0xff]
    %v3327 = vld [vmem:[#allocation17 + $0xbe0] sm:$0xff]
    %v3328 = vld [vmem:[#allocation17 + $0xbe8] sm:$0xf]
    %v3329 = vld [vmem:[#allocation17 + $0xbec] sm:$0xff]
    %v3330 = vld [vmem:[#allocation17 + $0xbf4] sm:$0xff]
    %v3331 = vld [vmem:[#allocation17 + $0xbfc] sm:$0xff]
    %v3332 = vld [vmem:[#allocation17 + $0xc04] sm:$0xf]
    %v3333 = vld [vmem:[#allocation17 + $0xc08] sm:$0xff]
    %v3334 = vld [vmem:[#allocation17 + $0xc10] sm:$0xff]
    %v3335 = vld [vmem:[#allocation17 + $0xc18] sm:$0xff]
    %v3336 = vld [vmem:[#allocation17 + $0xc20] sm:$0xf]
    %v3337 = vld [vmem:[#allocation17 + $0xc24] sm:$0xff]
    %v3338 = vld [vmem:[#allocation17 + $0xc2c] sm:$0xff]
    %v3339 = vld [vmem:[#allocation17 + $0xc34] sm:$0xff]
    %v3340 = vld [vmem:[#allocation17 + $0xc3c] sm:$0xf]
    %v3341 = vld [vmem:[#allocation17 + $0xc40] sm:$0xff]
    %v3342 = vld [vmem:[#allocation17 + $0xc48] sm:$0xff]
    %v3343 = vld [vmem:[#allocation17 + $0xc50] sm:$0xff]
    %v3344 = vld [vmem:[#allocation17 + $0xc58] sm:$0xf]
    %v3345 = vld [vmem:[#allocation17 + $0xc5c] sm:$0xff]
    %v3346 = vld [vmem:[#allocation17 + $0xc64] sm:$0xff]
    %v3347 = vld [vmem:[#allocation17 + $0xc6c] sm:$0xff]
    %v3348 = vld [vmem:[#allocation17 + $0xc74] sm:$0xf]
    %v3349 = vld [vmem:[#allocation17 + $0xc78] sm:$0xff]
    %v3350 = vld [vmem:[#allocation17 + $0xc80] sm:$0xff]
    %v3351 = vld [vmem:[#allocation17 + $0xc88] sm:$0xff]
    %v3352 = vld [vmem:[#allocation17 + $0xc90] sm:$0xf]
    %v3353 = vld [vmem:[#allocation17 + $0xc94] sm:$0xff]
    %v3354 = vld [vmem:[#allocation17 + $0xc9c] sm:$0xff]
    %v3355 = vld [vmem:[#allocation17 + $0xca4] sm:$0xff]
    %v3356 = vld [vmem:[#allocation17 + $0xcac] sm:$0xf]
    %v3357 = vld [vmem:[#allocation17 + $0xcb0] sm:$0xff]
    %v3358 = vld [vmem:[#allocation17 + $0xcb8] sm:$0xff]
    %v3359 = vld [vmem:[#allocation17 + $0xcc0] sm:$0xff]
    %v3360 = vld [vmem:[#allocation17 + $0xcc8] sm:$0xf]
    %v3361 = vld [vmem:[#allocation17 + $0xccc] sm:$0xff]
    %v3362 = vld [vmem:[#allocation17 + $0xcd4] sm:$0xff]
    %v3363 = vld [vmem:[#allocation17 + $0xcdc] sm:$0xff]
    %v3364 = vld [vmem:[#allocation17 + $0xce4] sm:$0xf]
    %v3365 = vld [vmem:[#allocation17 + $0xce8] sm:$0xff]
    %v3366 = vld [vmem:[#allocation17 + $0xcf0] sm:$0xff]
    %v3367 = vld [vmem:[#allocation17 + $0xcf8] sm:$0xff]
    %v3368 = vld [vmem:[#allocation17 + $0xd00] sm:$0xf]
    %v3369 = vld [vmem:[#allocation17 + $0xd04] sm:$0xff]
    %v3370 = vld [vmem:[#allocation17 + $0xd0c] sm:$0xff]
    %v3371 = vld [vmem:[#allocation17 + $0xd14] sm:$0xff]
    %v3372 = vld [vmem:[#allocation17 + $0xd1c] sm:$0xf]
    %v3373 = vld [vmem:[#allocation17 + $0xd20] sm:$0xff]
    %v3374 = vld [vmem:[#allocation17 + $0xd28] sm:$0xff]
    %v3375 = vld [vmem:[#allocation17 + $0xd30] sm:$0xff]
    %v3376 = vld [vmem:[#allocation17 + $0xd38] sm:$0xf]
    %v3377 = vld [vmem:[#allocation17 + $0xd3c] sm:$0xff]
    %v3378 = vld [vmem:[#allocation17 + $0xd44] sm:$0xff]
    %v3379 = vld [vmem:[#allocation17 + $0xd4c] sm:$0xff]
    %v3380 = vld [vmem:[#allocation17 + $0xd54] sm:$0xf]
    %v3381 = vld [vmem:[#allocation17 + $0xd58] sm:$0xff]
    %v3382 = vld [vmem:[#allocation17 + $0xd60] sm:$0xff]
    %v3383 = vld [vmem:[#allocation17 + $0xd68] sm:$0xff]
    %v3384 = vld [vmem:[#allocation17 + $0xd70] sm:$0xf]
    %v3385 = vld [vmem:[#allocation17 + $0xd74] sm:$0xff]
    %v3386 = vld [vmem:[#allocation17 + $0xd7c] sm:$0xff]
    %v3387 = vld [vmem:[#allocation17 + $0xd84] sm:$0xff]
    %v3388 = vld [vmem:[#allocation17 + $0xd8c] sm:$0xf]
    %v3389 = vld [vmem:[#allocation17 + $0xd90] sm:$0xff]
    %v3390 = vld [vmem:[#allocation17 + $0xd98] sm:$0xff]
    %v3391 = vld [vmem:[#allocation17 + $0xda0] sm:$0xff]
    %v3392 = vld [vmem:[#allocation17 + $0xda8] sm:$0xf]
    %v3393 = vld [vmem:[#allocation17 + $0xdac] sm:$0xff]
    %v3394 = vld [vmem:[#allocation17 + $0xdb4] sm:$0xff]
    %v3395 = vld [vmem:[#allocation17 + $0xdbc] sm:$0xff]
    %v3396 = vld [vmem:[#allocation17 + $0xdc4] sm:$0xf]
    %v3397 = vld [vmem:[#allocation17 + $0xdc8] sm:$0xff]
    %v3398 = vld [vmem:[#allocation17 + $0xdd0] sm:$0xff]
    %v3399 = vld [vmem:[#allocation17 + $0xdd8] sm:$0xff]
    %v3400 = vld [vmem:[#allocation17 + $0xde0] sm:$0xf]
    %v3401 = vld [vmem:[#allocation17 + $0xde4] sm:$0xff]
    %v3402 = vld [vmem:[#allocation17 + $0xdec] sm:$0xff]
    %v3403 = vld [vmem:[#allocation17 + $0xdf4] sm:$0xff]
    %v3404 = vld [vmem:[#allocation17 + $0xdfc] sm:$0xf]
    %v3405 = vld [vmem:[#allocation19] sm:$0xff]
    %v3407 = vlaneseq
    %v3408 = vshrl.u32 %v3407, 7
    %v3409 = vsub.s32 0, %v3408
    %v3410 = vrot.slane %v3405, %v3409
    %v3411 = vlaneseq
    %v3412 = vshrl.u32 %v3411, 7
    %v3413 = vsub.s32 1, %v3412
    %v3414 = vrot.slane %v3405, %v3413
    %v3415 = vlaneseq
    %v3416 = vshrl.u32 %v3415, 7
    %v3417 = vsub.s32 2, %v3416
    %v3418 = vrot.slane %v3405, %v3417
    %v3419 = vlaneseq
    %v3420 = vshrl.u32 %v3419, 7
    %v3421 = vsub.s32 3, %v3420
    %v3422 = vrot.slane %v3405, %v3421
    %v3423 = vlaneseq
    %v3424 = vshrl.u32 %v3423, 7
    %v3425 = vsub.s32 4, %v3424
    %v3426 = vrot.slane %v3405, %v3425
    %v3427 = vlaneseq
    %v3428 = vshrl.u32 %v3427, 7
    %v3429 = vsub.s32 5, %v3428
    %v3430 = vrot.slane %v3405, %v3429
    %v3431 = vlaneseq
    %v3432 = vshrl.u32 %v3431, 7
    %v3433 = vsub.s32 6, %v3432
    %v3434 = vrot.slane %v3405, %v3433
    %v3954 = vunpack.c.l.b16 %v2893
    %v3955 = vunpack.c.h.b16 %v2893
    %v3956 = vunpack.c.l.b16 %v2894
    %v3957 = vunpack.c.h.b16 %v2894
    %v3958 = vunpack.c.l.b16 %v2895
    %v3959 = vunpack.c.h.b16 %v2895
    %v3960 = vunpack.c.l.b16 %v2896
    %v3961 = vunpack.c.l.b16 %v2897
    %v3962 = vunpack.c.h.b16 %v2897
    %v3963 = vunpack.c.l.b16 %v2898
    %v3964 = vunpack.c.h.b16 %v2898
    %v3965 = vunpack.c.l.b16 %v2899
    %v3966 = vunpack.c.h.b16 %v2899
    %v3967 = vunpack.c.l.b16 %v2900
    %v3968 = vunpack.c.l.b16 %v2901
    %v3969 = vunpack.c.h.b16 %v2901
    %v3970 = vunpack.c.l.b16 %v2902
    %v3971 = vunpack.c.h.b16 %v2902
    %v3972 = vunpack.c.l.b16 %v2903
    %v3973 = vunpack.c.h.b16 %v2903
    %v3974 = vunpack.c.l.b16 %v2904
    %v3975 = vunpack.c.l.b16 %v2905
    %v3976 = vunpack.c.h.b16 %v2905
    %v3977 = vunpack.c.l.b16 %v2906
    %v3978 = vunpack.c.h.b16 %v2906
    %v3979 = vunpack.c.l.b16 %v2907
    %v3980 = vunpack.c.h.b16 %v2907
    %v3981 = vunpack.c.l.b16 %v2908
    %v3982 = vunpack.c.l.b16 %v2909
    %v3983 = vunpack.c.h.b16 %v2909
    %v3984 = vunpack.c.l.b16 %v2910
    %v3985 = vunpack.c.h.b16 %v2910
    %v3986 = vunpack.c.l.b16 %v2911
    %v3987 = vunpack.c.h.b16 %v2911
    %v3988 = vunpack.c.l.b16 %v2912
    %v3989 = vunpack.c.l.b16 %v2913
    %v3990 = vunpack.c.h.b16 %v2913
    %v3991 = vunpack.c.l.b16 %v2914
    %v3992 = vunpack.c.h.b16 %v2914
    %v3993 = vunpack.c.l.b16 %v2915
    %v3994 = vunpack.c.h.b16 %v2915
    %v3995 = vunpack.c.l.b16 %v2916
    %v3996 = vunpack.c.l.b16 %v2917
    %v3997 = vunpack.c.h.b16 %v2917
    %v3998 = vunpack.c.l.b16 %v2918
    %v3999 = vunpack.c.h.b16 %v2918
    %v4000 = vunpack.c.l.b16 %v2919
    %v4001 = vunpack.c.h.b16 %v2919
    %v4002 = vunpack.c.l.b16 %v2920
    %v4003 = vunpack.c.l.b16 %v2921
    %v4004 = vunpack.c.h.b16 %v2921
    %v4005 = vunpack.c.l.b16 %v2922
    %v4006 = vunpack.c.h.b16 %v2922
    %v4007 = vunpack.c.l.b16 %v2923
    %v4008 = vunpack.c.h.b16 %v2923
    %v4009 = vunpack.c.l.b16 %v2924
    %v4010 = vunpack.c.l.b16 %v2925
    %v4011 = vunpack.c.h.b16 %v2925
    %v4012 = vunpack.c.l.b16 %v2926
    %v4013 = vunpack.c.h.b16 %v2926
    %v4014 = vunpack.c.l.b16 %v2927
    %v4015 = vunpack.c.h.b16 %v2927
    %v4016 = vunpack.c.l.b16 %v2928
    %v4017 = vunpack.c.l.b16 %v2929
    %v4018 = vunpack.c.h.b16 %v2929
    %v4019 = vunpack.c.l.b16 %v2930
    %v4020 = vunpack.c.h.b16 %v2930
    %v4021 = vunpack.c.l.b16 %v2931
    %v4022 = vunpack.c.h.b16 %v2931
    %v4023 = vunpack.c.l.b16 %v2932
    %v4024 = vunpack.c.l.b16 %v2933
    %v4025 = vunpack.c.h.b16 %v2933
    %v4026 = vunpack.c.l.b16 %v2934
    %v4027 = vunpack.c.h.b16 %v2934
    %v4028 = vunpack.c.l.b16 %v2935
    %v4029 = vunpack.c.h.b16 %v2935
    %v4030 = vunpack.c.l.b16 %v2936
    %v4031 = vunpack.c.l.b16 %v2937
    %v4032 = vunpack.c.h.b16 %v2937
    %v4033 = vunpack.c.l.b16 %v2938
    %v4034 = vunpack.c.h.b16 %v2938
    %v4035 = vunpack.c.l.b16 %v2939
    %v4036 = vunpack.c.h.b16 %v2939
    %v4037 = vunpack.c.l.b16 %v2940
    %v4038 = vunpack.c.l.b16 %v2941
    %v4039 = vunpack.c.h.b16 %v2941
    %v4040 = vunpack.c.l.b16 %v2942
    %v4041 = vunpack.c.h.b16 %v2942
    %v4042 = vunpack.c.l.b16 %v2943
    %v4043 = vunpack.c.h.b16 %v2943
    %v4044 = vunpack.c.l.b16 %v2944
    %v4045 = vunpack.c.l.b16 %v2945
    %v4046 = vunpack.c.h.b16 %v2945
    %v4047 = vunpack.c.l.b16 %v2946
    %v4048 = vunpack.c.h.b16 %v2946
    %v4049 = vunpack.c.l.b16 %v2947
    %v4050 = vunpack.c.h.b16 %v2947
    %v4051 = vunpack.c.l.b16 %v2948
    %v4052 = vunpack.c.l.b16 %v2949
    %v4053 = vunpack.c.h.b16 %v2949
    %v4054 = vunpack.c.l.b16 %v2950
    %v4055 = vunpack.c.h.b16 %v2950
    %v4056 = vunpack.c.l.b16 %v2951
    %v4057 = vunpack.c.h.b16 %v2951
    %v4058 = vunpack.c.l.b16 %v2952
    %v4059 = vunpack.c.l.b16 %v2953
    %v4060 = vunpack.c.h.b16 %v2953
    %v4061 = vunpack.c.l.b16 %v2954
    %v4062 = vunpack.c.h.b16 %v2954
    %v4063 = vunpack.c.l.b16 %v2955
    %v4064 = vunpack.c.h.b16 %v2955
    %v4065 = vunpack.c.l.b16 %v2956
    %v4066 = vunpack.c.l.b16 %v2957
    %v4067 = vunpack.c.h.b16 %v2957
    %v4068 = vunpack.c.l.b16 %v2958
    %v4069 = vunpack.c.h.b16 %v2958
    %v4070 = vunpack.c.l.b16 %v2959
    %v4071 = vunpack.c.h.b16 %v2959
    %v4072 = vunpack.c.l.b16 %v2960
    %v4073 = vunpack.c.l.b16 %v2961
    %v4074 = vunpack.c.h.b16 %v2961
    %v4075 = vunpack.c.l.b16 %v2962
    %v4076 = vunpack.c.h.b16 %v2962
    %v4077 = vunpack.c.l.b16 %v2963
    %v4078 = vunpack.c.h.b16 %v2963
    %v4079 = vunpack.c.l.b16 %v2964
    %v4080 = vunpack.c.l.b16 %v2965
    %v4081 = vunpack.c.h.b16 %v2965
    %v4082 = vunpack.c.l.b16 %v2966
    %v4083 = vunpack.c.h.b16 %v2966
    %v4084 = vunpack.c.l.b16 %v2967
    %v4085 = vunpack.c.h.b16 %v2967
    %v4086 = vunpack.c.l.b16 %v2968
    %v4087 = vunpack.c.l.b16 %v2969
    %v4088 = vunpack.c.h.b16 %v2969
    %v4089 = vunpack.c.l.b16 %v2970
    %v4090 = vunpack.c.h.b16 %v2970
    %v4091 = vunpack.c.l.b16 %v2971
    %v4092 = vunpack.c.h.b16 %v2971
    %v4093 = vunpack.c.l.b16 %v2972
    %v4094 = vunpack.c.l.b16 %v2973
    %v4095 = vunpack.c.h.b16 %v2973
    %v4096 = vunpack.c.l.b16 %v2974
    %v4097 = vunpack.c.h.b16 %v2974
    %v4098 = vunpack.c.l.b16 %v2975
    %v4099 = vunpack.c.h.b16 %v2975
    %v4100 = vunpack.c.l.b16 %v2976
    %v4101 = vunpack.c.l.b16 %v2977
    %v4102 = vunpack.c.h.b16 %v2977
    %v4103 = vunpack.c.l.b16 %v2978
    %v4104 = vunpack.c.h.b16 %v2978
    %v4105 = vunpack.c.l.b16 %v2979
    %v4106 = vunpack.c.h.b16 %v2979
    %v4107 = vunpack.c.l.b16 %v2980
    %v4108 = vunpack.c.l.b16 %v2981
    %v4109 = vunpack.c.h.b16 %v2981
    %v4110 = vunpack.c.l.b16 %v2982
    %v4111 = vunpack.c.h.b16 %v2982
    %v4112 = vunpack.c.l.b16 %v2983
    %v4113 = vunpack.c.h.b16 %v2983
    %v4114 = vunpack.c.l.b16 %v2984
    %v4115 = vunpack.c.l.b16 %v2985
    %v4116 = vunpack.c.h.b16 %v2985
    %v4117 = vunpack.c.l.b16 %v2986
    %v4118 = vunpack.c.h.b16 %v2986
    %v4119 = vunpack.c.l.b16 %v2987
    %v4120 = vunpack.c.h.b16 %v2987
    %v4121 = vunpack.c.l.b16 %v2988
    %v4122 = vunpack.c.l.b16 %v2989
    %v4123 = vunpack.c.h.b16 %v2989
    %v4124 = vunpack.c.l.b16 %v2990
    %v4125 = vunpack.c.h.b16 %v2990
    %v4126 = vunpack.c.l.b16 %v2991
    %v4127 = vunpack.c.h.b16 %v2991
    %v4128 = vunpack.c.l.b16 %v2992
    %v4129 = vunpack.c.l.b16 %v2993
    %v4130 = vunpack.c.h.b16 %v2993
    %v4131 = vunpack.c.l.b16 %v2994
    %v4132 = vunpack.c.h.b16 %v2994
    %v4133 = vunpack.c.l.b16 %v2995
    %v4134 = vunpack.c.h.b16 %v2995
    %v4135 = vunpack.c.l.b16 %v2996
    %v4136 = vunpack.c.l.b16 %v2997
    %v4137 = vunpack.c.h.b16 %v2997
    %v4138 = vunpack.c.l.b16 %v2998
    %v4139 = vunpack.c.h.b16 %v2998
    %v4140 = vunpack.c.l.b16 %v2999
    %v4141 = vunpack.c.h.b16 %v2999
    %v4142 = vunpack.c.l.b16 %v3000
    %v4143 = vunpack.c.l.b16 %v3001
    %v4144 = vunpack.c.h.b16 %v3001
    %v4145 = vunpack.c.l.b16 %v3002
    %v4146 = vunpack.c.h.b16 %v3002
    %v4147 = vunpack.c.l.b16 %v3003
    %v4148 = vunpack.c.h.b16 %v3003
    %v4149 = vunpack.c.l.b16 %v3004
    %v4150 = vunpack.c.l.b16 %v3005
    %v4151 = vunpack.c.h.b16 %v3005
    %v4152 = vunpack.c.l.b16 %v3006
    %v4153 = vunpack.c.h.b16 %v3006
    %v4154 = vunpack.c.l.b16 %v3007
    %v4155 = vunpack.c.h.b16 %v3007
    %v4156 = vunpack.c.l.b16 %v3008
    %v4157 = vunpack.c.l.b16 %v3009
    %v4158 = vunpack.c.h.b16 %v3009
    %v4159 = vunpack.c.l.b16 %v3010
    %v4160 = vunpack.c.h.b16 %v3010
    %v4161 = vunpack.c.l.b16 %v3011
    %v4162 = vunpack.c.h.b16 %v3011
    %v4163 = vunpack.c.l.b16 %v3012
    %v4164 = vunpack.c.l.b16 %v3013
    %v4165 = vunpack.c.h.b16 %v3013
    %v4166 = vunpack.c.l.b16 %v3014
    %v4167 = vunpack.c.h.b16 %v3014
    %v4168 = vunpack.c.l.b16 %v3015
    %v4169 = vunpack.c.h.b16 %v3015
    %v4170 = vunpack.c.l.b16 %v3016
    %v4171 = vunpack.c.l.b16 %v3017
    %v4172 = vunpack.c.h.b16 %v3017
    %v4173 = vunpack.c.l.b16 %v3018
    %v4174 = vunpack.c.h.b16 %v3018
    %v4175 = vunpack.c.l.b16 %v3019
    %v4176 = vunpack.c.h.b16 %v3019
    %v4177 = vunpack.c.l.b16 %v3020
    %v4178 = vunpack.c.l.b16 %v3021
    %v4179 = vunpack.c.h.b16 %v3021
    %v4180 = vunpack.c.l.b16 %v3022
    %v4181 = vunpack.c.h.b16 %v3022
    %v4182 = vunpack.c.l.b16 %v3023
    %v4183 = vunpack.c.h.b16 %v3023
    %v4184 = vunpack.c.l.b16 %v3024
    %v4185 = vunpack.c.l.b16 %v3025
    %v4186 = vunpack.c.h.b16 %v3025
    %v4187 = vunpack.c.l.b16 %v3026
    %v4188 = vunpack.c.h.b16 %v3026
    %v4189 = vunpack.c.l.b16 %v3027
    %v4190 = vunpack.c.h.b16 %v3027
    %v4191 = vunpack.c.l.b16 %v3028
    %v4192 = vunpack.c.l.b16 %v3029
    %v4193 = vunpack.c.h.b16 %v3029
    %v4194 = vunpack.c.l.b16 %v3030
    %v4195 = vunpack.c.h.b16 %v3030
    %v4196 = vunpack.c.l.b16 %v3031
    %v4197 = vunpack.c.h.b16 %v3031
    %v4198 = vunpack.c.l.b16 %v3032
    %v4199 = vunpack.c.l.b16 %v3033
    %v4200 = vunpack.c.h.b16 %v3033
    %v4201 = vunpack.c.l.b16 %v3034
    %v4202 = vunpack.c.h.b16 %v3034
    %v4203 = vunpack.c.l.b16 %v3035
    %v4204 = vunpack.c.h.b16 %v3035
    %v4205 = vunpack.c.l.b16 %v3036
    %v4206 = vunpack.c.l.b16 %v3037
    %v4207 = vunpack.c.h.b16 %v3037
    %v4208 = vunpack.c.l.b16 %v3038
    %v4209 = vunpack.c.h.b16 %v3038
    %v4210 = vunpack.c.l.b16 %v3039
    %v4211 = vunpack.c.h.b16 %v3039
    %v4212 = vunpack.c.l.b16 %v3040
    %v4213 = vunpack.c.l.b16 %v3041
    %v4214 = vunpack.c.h.b16 %v3041
    %v4215 = vunpack.c.l.b16 %v3042
    %v4216 = vunpack.c.h.b16 %v3042
    %v4217 = vunpack.c.l.b16 %v3043
    %v4218 = vunpack.c.h.b16 %v3043
    %v4219 = vunpack.c.l.b16 %v3044
    %v4220 = vunpack.c.l.b16 %v3045
    %v4221 = vunpack.c.h.b16 %v3045
    %v4222 = vunpack.c.l.b16 %v3046
    %v4223 = vunpack.c.h.b16 %v3046
    %v4224 = vunpack.c.l.b16 %v3047
    %v4225 = vunpack.c.h.b16 %v3047
    %v4226 = vunpack.c.l.b16 %v3048
    %v4227 = vunpack.c.l.b16 %v3049
    %v4228 = vunpack.c.h.b16 %v3049
    %v4229 = vunpack.c.l.b16 %v3050
    %v4230 = vunpack.c.h.b16 %v3050
    %v4231 = vunpack.c.l.b16 %v3051
    %v4232 = vunpack.c.h.b16 %v3051
    %v4233 = vunpack.c.l.b16 %v3052
    %v4234 = vunpack.c.l.b16 %v3053
    %v4235 = vunpack.c.h.b16 %v3053
    %v4236 = vunpack.c.l.b16 %v3054
    %v4237 = vunpack.c.h.b16 %v3054
    %v4238 = vunpack.c.l.b16 %v3055
    %v4239 = vunpack.c.h.b16 %v3055
    %v4240 = vunpack.c.l.b16 %v3056
    %v4241 = vunpack.c.l.b16 %v3057
    %v4242 = vunpack.c.h.b16 %v3057
    %v4243 = vunpack.c.l.b16 %v3058
    %v4244 = vunpack.c.h.b16 %v3058
    %v4245 = vunpack.c.l.b16 %v3059
    %v4246 = vunpack.c.h.b16 %v3059
    %v4247 = vunpack.c.l.b16 %v3060
    %v4248 = vunpack.c.l.b16 %v3061
    %v4249 = vunpack.c.h.b16 %v3061
    %v4250 = vunpack.c.l.b16 %v3062
    %v4251 = vunpack.c.h.b16 %v3062
    %v4252 = vunpack.c.l.b16 %v3063
    %v4253 = vunpack.c.h.b16 %v3063
    %v4254 = vunpack.c.l.b16 %v3064
    %v4255 = vunpack.c.l.b16 %v3065
    %v4256 = vunpack.c.h.b16 %v3065
    %v4257 = vunpack.c.l.b16 %v3066
    %v4258 = vunpack.c.h.b16 %v3066
    %v4259 = vunpack.c.l.b16 %v3067
    %v4260 = vunpack.c.h.b16 %v3067
    %v4261 = vunpack.c.l.b16 %v3068
    %v4262 = vunpack.c.l.b16 %v3069
    %v4263 = vunpack.c.h.b16 %v3069
    %v4264 = vunpack.c.l.b16 %v3070
    %v4265 = vunpack.c.h.b16 %v3070
    %v4266 = vunpack.c.l.b16 %v3071
    %v4267 = vunpack.c.h.b16 %v3071
    %v4268 = vunpack.c.l.b16 %v3072
    %v4269 = vunpack.c.l.b16 %v3073
    %v4270 = vunpack.c.h.b16 %v3073
    %v4271 = vunpack.c.l.b16 %v3074
    %v4272 = vunpack.c.h.b16 %v3074
    %v4273 = vunpack.c.l.b16 %v3075
    %v4274 = vunpack.c.h.b16 %v3075
    %v4275 = vunpack.c.l.b16 %v3076
    %v4276 = vunpack.c.l.b16 %v3077
    %v4277 = vunpack.c.h.b16 %v3077
    %v4278 = vunpack.c.l.b16 %v3078
    %v4279 = vunpack.c.h.b16 %v3078
    %v4280 = vunpack.c.l.b16 %v3079
    %v4281 = vunpack.c.h.b16 %v3079
    %v4282 = vunpack.c.l.b16 %v3080
    %v4283 = vunpack.c.l.b16 %v3081
    %v4284 = vunpack.c.h.b16 %v3081
    %v4285 = vunpack.c.l.b16 %v3082
    %v4286 = vunpack.c.h.b16 %v3082
    %v4287 = vunpack.c.l.b16 %v3083
    %v4288 = vunpack.c.h.b16 %v3083
    %v4289 = vunpack.c.l.b16 %v3084
    %v4290 = vunpack.c.l.b16 %v3085
    %v4291 = vunpack.c.h.b16 %v3085
    %v4292 = vunpack.c.l.b16 %v3086
    %v4293 = vunpack.c.h.b16 %v3086
    %v4294 = vunpack.c.l.b16 %v3087
    %v4295 = vunpack.c.h.b16 %v3087
    %v4296 = vunpack.c.l.b16 %v3088
    %v4297 = vunpack.c.l.b16 %v3089
    %v4298 = vunpack.c.h.b16 %v3089
    %v4299 = vunpack.c.l.b16 %v3090
    %v4300 = vunpack.c.h.b16 %v3090
    %v4301 = vunpack.c.l.b16 %v3091
    %v4302 = vunpack.c.h.b16 %v3091
    %v4303 = vunpack.c.l.b16 %v3092
    %v4304 = vunpack.c.l.b16 %v3093
    %v4305 = vunpack.c.h.b16 %v3093
    %v4306 = vunpack.c.l.b16 %v3094
    %v4307 = vunpack.c.h.b16 %v3094
    %v4308 = vunpack.c.l.b16 %v3095
    %v4309 = vunpack.c.h.b16 %v3095
    %v4310 = vunpack.c.l.b16 %v3096
    %v4311 = vunpack.c.l.b16 %v3097
    %v4312 = vunpack.c.h.b16 %v3097
    %v4313 = vunpack.c.l.b16 %v3098
    %v4314 = vunpack.c.h.b16 %v3098
    %v4315 = vunpack.c.l.b16 %v3099
    %v4316 = vunpack.c.h.b16 %v3099
    %v4317 = vunpack.c.l.b16 %v3100
    %v4318 = vunpack.c.l.b16 %v3101
    %v4319 = vunpack.c.h.b16 %v3101
    %v4320 = vunpack.c.l.b16 %v3102
    %v4321 = vunpack.c.h.b16 %v3102
    %v4322 = vunpack.c.l.b16 %v3103
    %v4323 = vunpack.c.h.b16 %v3103
    %v4324 = vunpack.c.l.b16 %v3104
    %v4325 = vunpack.c.l.b16 %v3105
    %v4326 = vunpack.c.h.b16 %v3105
    %v4327 = vunpack.c.l.b16 %v3106
    %v4328 = vunpack.c.h.b16 %v3106
    %v4329 = vunpack.c.l.b16 %v3107
    %v4330 = vunpack.c.h.b16 %v3107
    %v4331 = vunpack.c.l.b16 %v3108
    %v4332 = vunpack.c.l.b16 %v3109
    %v4333 = vunpack.c.h.b16 %v3109
    %v4334 = vunpack.c.l.b16 %v3110
    %v4335 = vunpack.c.h.b16 %v3110
    %v4336 = vunpack.c.l.b16 %v3111
    %v4337 = vunpack.c.h.b16 %v3111
    %v4338 = vunpack.c.l.b16 %v3112
    %v4339 = vunpack.c.l.b16 %v3113
    %v4340 = vunpack.c.h.b16 %v3113
    %v4341 = vunpack.c.l.b16 %v3114
    %v4342 = vunpack.c.h.b16 %v3114
    %v4343 = vunpack.c.l.b16 %v3115
    %v4344 = vunpack.c.h.b16 %v3115
    %v4345 = vunpack.c.l.b16 %v3116
    %v4346 = vunpack.c.l.b16 %v3117
    %v4347 = vunpack.c.h.b16 %v3117
    %v4348 = vunpack.c.l.b16 %v3118
    %v4349 = vunpack.c.h.b16 %v3118
    %v4350 = vunpack.c.l.b16 %v3119
    %v4351 = vunpack.c.h.b16 %v3119
    %v4352 = vunpack.c.l.b16 %v3120
    %v4353 = vunpack.c.l.b16 %v3121
    %v4354 = vunpack.c.h.b16 %v3121
    %v4355 = vunpack.c.l.b16 %v3122
    %v4356 = vunpack.c.h.b16 %v3122
    %v4357 = vunpack.c.l.b16 %v3123
    %v4358 = vunpack.c.h.b16 %v3123
    %v4359 = vunpack.c.l.b16 %v3124
    %v4360 = vunpack.c.l.b16 %v3125
    %v4361 = vunpack.c.h.b16 %v3125
    %v4362 = vunpack.c.l.b16 %v3126
    %v4363 = vunpack.c.h.b16 %v3126
    %v4364 = vunpack.c.l.b16 %v3127
    %v4365 = vunpack.c.h.b16 %v3127
    %v4366 = vunpack.c.l.b16 %v3128
    %v4367 = vunpack.c.l.b16 %v3129
    %v4368 = vunpack.c.h.b16 %v3129
    %v4369 = vunpack.c.l.b16 %v3130
    %v4370 = vunpack.c.h.b16 %v3130
    %v4371 = vunpack.c.l.b16 %v3131
    %v4372 = vunpack.c.h.b16 %v3131
    %v4373 = vunpack.c.l.b16 %v3132
    %v4374 = vunpack.c.l.b16 %v3133
    %v4375 = vunpack.c.h.b16 %v3133
    %v4376 = vunpack.c.l.b16 %v3134
    %v4377 = vunpack.c.h.b16 %v3134
    %v4378 = vunpack.c.l.b16 %v3135
    %v4379 = vunpack.c.h.b16 %v3135
    %v4380 = vunpack.c.l.b16 %v3136
    %v4381 = vunpack.c.l.b16 %v3137
    %v4382 = vunpack.c.h.b16 %v3137
    %v4383 = vunpack.c.l.b16 %v3138
    %v4384 = vunpack.c.h.b16 %v3138
    %v4385 = vunpack.c.l.b16 %v3139
    %v4386 = vunpack.c.h.b16 %v3139
    %v4387 = vunpack.c.l.b16 %v3140
    %v4388 = vunpack.c.l.b16 %v3141
    %v4389 = vunpack.c.h.b16 %v3141
    %v4390 = vunpack.c.l.b16 %v3142
    %v4391 = vunpack.c.h.b16 %v3142
    %v4392 = vunpack.c.l.b16 %v3143
    %v4393 = vunpack.c.h.b16 %v3143
    %v4394 = vunpack.c.l.b16 %v3144
    %v4395 = vunpack.c.l.b16 %v3145
    %v4396 = vunpack.c.h.b16 %v3145
    %v4397 = vunpack.c.l.b16 %v3146
    %v4398 = vunpack.c.h.b16 %v3146
    %v4399 = vunpack.c.l.b16 %v3147
    %v4400 = vunpack.c.h.b16 %v3147
    %v4401 = vunpack.c.l.b16 %v3148
    %v4402 = vunpack.c.l.b16 %v3149
    %v4403 = vunpack.c.h.b16 %v3149
    %v4404 = vunpack.c.l.b16 %v3150
    %v4405 = vunpack.c.h.b16 %v3150
    %v4406 = vunpack.c.l.b16 %v3151
    %v4407 = vunpack.c.h.b16 %v3151
    %v4408 = vunpack.c.l.b16 %v3152
    %v4409 = vunpack.c.l.b16 %v3153
    %v4410 = vunpack.c.h.b16 %v3153
    %v4411 = vunpack.c.l.b16 %v3154
    %v4412 = vunpack.c.h.b16 %v3154
    %v4413 = vunpack.c.l.b16 %v3155
    %v4414 = vunpack.c.h.b16 %v3155
    %v4415 = vunpack.c.l.b16 %v3156
    %v4416 = vunpack.c.l.b16 %v3157
    %v4417 = vunpack.c.h.b16 %v3157
    %v4418 = vunpack.c.l.b16 %v3158
    %v4419 = vunpack.c.h.b16 %v3158
    %v4420 = vunpack.c.l.b16 %v3159
    %v4421 = vunpack.c.h.b16 %v3159
    %v4422 = vunpack.c.l.b16 %v3160
    %v4423 = vunpack.c.l.b16 %v3161
    %v4424 = vunpack.c.h.b16 %v3161
    %v4425 = vunpack.c.l.b16 %v3162
    %v4426 = vunpack.c.h.b16 %v3162
    %v4427 = vunpack.c.l.b16 %v3163
    %v4428 = vunpack.c.h.b16 %v3163
    %v4429 = vunpack.c.l.b16 %v3164
    %v4430 = vunpack.c.l.b16 %v3165
    %v4431 = vunpack.c.h.b16 %v3165
    %v4432 = vunpack.c.l.b16 %v3166
    %v4433 = vunpack.c.h.b16 %v3166
    %v4434 = vunpack.c.l.b16 %v3167
    %v4435 = vunpack.c.h.b16 %v3167
    %v4436 = vunpack.c.l.b16 %v3168
    %v4437 = vunpack.c.l.b16 %v3169
    %v4438 = vunpack.c.h.b16 %v3169
    %v4439 = vunpack.c.l.b16 %v3170
    %v4440 = vunpack.c.h.b16 %v3170
    %v4441 = vunpack.c.l.b16 %v3171
    %v4442 = vunpack.c.h.b16 %v3171
    %v4443 = vunpack.c.l.b16 %v3172
    %v4444 = vunpack.c.l.b16 %v3173
    %v4445 = vunpack.c.h.b16 %v3173
    %v4446 = vunpack.c.l.b16 %v3174
    %v4447 = vunpack.c.h.b16 %v3174
    %v4448 = vunpack.c.l.b16 %v3175
    %v4449 = vunpack.c.h.b16 %v3175
    %v4450 = vunpack.c.l.b16 %v3176
    %v4451 = vunpack.c.l.b16 %v3177
    %v4452 = vunpack.c.h.b16 %v3177
    %v4453 = vunpack.c.l.b16 %v3178
    %v4454 = vunpack.c.h.b16 %v3178
    %v4455 = vunpack.c.l.b16 %v3179
    %v4456 = vunpack.c.h.b16 %v3179
    %v4457 = vunpack.c.l.b16 %v3180
    %v4458 = vunpack.c.l.b16 %v3181
    %v4459 = vunpack.c.h.b16 %v3181
    %v4460 = vunpack.c.l.b16 %v3182
    %v4461 = vunpack.c.h.b16 %v3182
    %v4462 = vunpack.c.l.b16 %v3183
    %v4463 = vunpack.c.h.b16 %v3183
    %v4464 = vunpack.c.l.b16 %v3184
    %v4465 = vunpack.c.l.b16 %v3185
    %v4466 = vunpack.c.h.b16 %v3185
    %v4467 = vunpack.c.l.b16 %v3186
    %v4468 = vunpack.c.h.b16 %v3186
    %v4469 = vunpack.c.l.b16 %v3187
    %v4470 = vunpack.c.h.b16 %v3187
    %v4471 = vunpack.c.l.b16 %v3188
    %v4472 = vunpack.c.l.b16 %v3189
    %v4473 = vunpack.c.h.b16 %v3189
    %v4474 = vunpack.c.l.b16 %v3190
    %v4475 = vunpack.c.h.b16 %v3190
    %v4476 = vunpack.c.l.b16 %v3191
    %v4477 = vunpack.c.h.b16 %v3191
    %v4478 = vunpack.c.l.b16 %v3192
    %v4479 = vunpack.c.l.b16 %v3193
    %v4480 = vunpack.c.h.b16 %v3193
    %v4481 = vunpack.c.l.b16 %v3194
    %v4482 = vunpack.c.h.b16 %v3194
    %v4483 = vunpack.c.l.b16 %v3195
    %v4484 = vunpack.c.h.b16 %v3195
    %v4485 = vunpack.c.l.b16 %v3196
    %v4486 = vunpack.c.l.b16 %v3197
    %v4487 = vunpack.c.h.b16 %v3197
    %v4488 = vunpack.c.l.b16 %v3198
    %v4489 = vunpack.c.h.b16 %v3198
    %v4490 = vunpack.c.l.b16 %v3199
    %v4491 = vunpack.c.h.b16 %v3199
    %v4492 = vunpack.c.l.b16 %v3200
    %v4493 = vunpack.c.l.b16 %v3201
    %v4494 = vunpack.c.h.b16 %v3201
    %v4495 = vunpack.c.l.b16 %v3202
    %v4496 = vunpack.c.h.b16 %v3202
    %v4497 = vunpack.c.l.b16 %v3203
    %v4498 = vunpack.c.h.b16 %v3203
    %v4499 = vunpack.c.l.b16 %v3204
    %v4500 = vunpack.c.l.b16 %v3205
    %v4501 = vunpack.c.h.b16 %v3205
    %v4502 = vunpack.c.l.b16 %v3206
    %v4503 = vunpack.c.h.b16 %v3206
    %v4504 = vunpack.c.l.b16 %v3207
    %v4505 = vunpack.c.h.b16 %v3207
    %v4506 = vunpack.c.l.b16 %v3208
    %v4507 = vunpack.c.l.b16 %v3209
    %v4508 = vunpack.c.h.b16 %v3209
    %v4509 = vunpack.c.l.b16 %v3210
    %v4510 = vunpack.c.h.b16 %v3210
    %v4511 = vunpack.c.l.b16 %v3211
    %v4512 = vunpack.c.h.b16 %v3211
    %v4513 = vunpack.c.l.b16 %v3212
    %v4514 = vunpack.c.l.b16 %v3213
    %v4515 = vunpack.c.h.b16 %v3213
    %v4516 = vunpack.c.l.b16 %v3214
    %v4517 = vunpack.c.h.b16 %v3214
    %v4518 = vunpack.c.l.b16 %v3215
    %v4519 = vunpack.c.h.b16 %v3215
    %v4520 = vunpack.c.l.b16 %v3216
    %v4521 = vunpack.c.l.b16 %v3217
    %v4522 = vunpack.c.h.b16 %v3217
    %v4523 = vunpack.c.l.b16 %v3218
    %v4524 = vunpack.c.h.b16 %v3218
    %v4525 = vunpack.c.l.b16 %v3219
    %v4526 = vunpack.c.h.b16 %v3219
    %v4527 = vunpack.c.l.b16 %v3220
    %v4528 = vunpack.c.l.b16 %v3221
    %v4529 = vunpack.c.h.b16 %v3221
    %v4530 = vunpack.c.l.b16 %v3222
    %v4531 = vunpack.c.h.b16 %v3222
    %v4532 = vunpack.c.l.b16 %v3223
    %v4533 = vunpack.c.h.b16 %v3223
    %v4534 = vunpack.c.l.b16 %v3224
    %v4535 = vunpack.c.l.b16 %v3225
    %v4536 = vunpack.c.h.b16 %v3225
    %v4537 = vunpack.c.l.b16 %v3226
    %v4538 = vunpack.c.h.b16 %v3226
    %v4539 = vunpack.c.l.b16 %v3227
    %v4540 = vunpack.c.h.b16 %v3227
    %v4541 = vunpack.c.l.b16 %v3228
    %v4542 = vunpack.c.l.b16 %v3229
    %v4543 = vunpack.c.h.b16 %v3229
    %v4544 = vunpack.c.l.b16 %v3230
    %v4545 = vunpack.c.h.b16 %v3230
    %v4546 = vunpack.c.l.b16 %v3231
    %v4547 = vunpack.c.h.b16 %v3231
    %v4548 = vunpack.c.l.b16 %v3232
    %v4549 = vunpack.c.l.b16 %v3233
    %v4550 = vunpack.c.h.b16 %v3233
    %v4551 = vunpack.c.l.b16 %v3234
    %v4552 = vunpack.c.h.b16 %v3234
    %v4553 = vunpack.c.l.b16 %v3235
    %v4554 = vunpack.c.h.b16 %v3235
    %v4555 = vunpack.c.l.b16 %v3236
    %v4556 = vunpack.c.l.b16 %v3237
    %v4557 = vunpack.c.h.b16 %v3237
    %v4558 = vunpack.c.l.b16 %v3238
    %v4559 = vunpack.c.h.b16 %v3238
    %v4560 = vunpack.c.l.b16 %v3239
    %v4561 = vunpack.c.h.b16 %v3239
    %v4562 = vunpack.c.l.b16 %v3240
    %v4563 = vunpack.c.l.b16 %v3241
    %v4564 = vunpack.c.h.b16 %v3241
    %v4565 = vunpack.c.l.b16 %v3242
    %v4566 = vunpack.c.h.b16 %v3242
    %v4567 = vunpack.c.l.b16 %v3243
    %v4568 = vunpack.c.h.b16 %v3243
    %v4569 = vunpack.c.l.b16 %v3244
    %v4570 = vunpack.c.l.b16 %v3245
    %v4571 = vunpack.c.h.b16 %v3245
    %v4572 = vunpack.c.l.b16 %v3246
    %v4573 = vunpack.c.h.b16 %v3246
    %v4574 = vunpack.c.l.b16 %v3247
    %v4575 = vunpack.c.h.b16 %v3247
    %v4576 = vunpack.c.l.b16 %v3248
    %v4577 = vunpack.c.l.b16 %v3249
    %v4578 = vunpack.c.h.b16 %v3249
    %v4579 = vunpack.c.l.b16 %v3250
    %v4580 = vunpack.c.h.b16 %v3250
    %v4581 = vunpack.c.l.b16 %v3251
    %v4582 = vunpack.c.h.b16 %v3251
    %v4583 = vunpack.c.l.b16 %v3252
    %v4584 = vunpack.c.l.b16 %v3253
    %v4585 = vunpack.c.h.b16 %v3253
    %v4586 = vunpack.c.l.b16 %v3254
    %v4587 = vunpack.c.h.b16 %v3254
    %v4588 = vunpack.c.l.b16 %v3255
    %v4589 = vunpack.c.h.b16 %v3255
    %v4590 = vunpack.c.l.b16 %v3256
    %v4591 = vunpack.c.l.b16 %v3257
    %v4592 = vunpack.c.h.b16 %v3257
    %v4593 = vunpack.c.l.b16 %v3258
    %v4594 = vunpack.c.h.b16 %v3258
    %v4595 = vunpack.c.l.b16 %v3259
    %v4596 = vunpack.c.h.b16 %v3259
    %v4597 = vunpack.c.l.b16 %v3260
    %v4598 = vunpack.c.l.b16 %v3261
    %v4599 = vunpack.c.h.b16 %v3261
    %v4600 = vunpack.c.l.b16 %v3262
    %v4601 = vunpack.c.h.b16 %v3262
    %v4602 = vunpack.c.l.b16 %v3263
    %v4603 = vunpack.c.h.b16 %v3263
    %v4604 = vunpack.c.l.b16 %v3264
    %v4605 = vunpack.c.l.b16 %v3265
    %v4606 = vunpack.c.h.b16 %v3265
    %v4607 = vunpack.c.l.b16 %v3266
    %v4608 = vunpack.c.h.b16 %v3266
    %v4609 = vunpack.c.l.b16 %v3267
    %v4610 = vunpack.c.h.b16 %v3267
    %v4611 = vunpack.c.l.b16 %v3268
    %v4612 = vunpack.c.l.b16 %v3269
    %v4613 = vunpack.c.h.b16 %v3269
    %v4614 = vunpack.c.l.b16 %v3270
    %v4615 = vunpack.c.h.b16 %v3270
    %v4616 = vunpack.c.l.b16 %v3271
    %v4617 = vunpack.c.h.b16 %v3271
    %v4618 = vunpack.c.l.b16 %v3272
    %v4619 = vunpack.c.l.b16 %v3273
    %v4620 = vunpack.c.h.b16 %v3273
    %v4621 = vunpack.c.l.b16 %v3274
    %v4622 = vunpack.c.h.b16 %v3274
    %v4623 = vunpack.c.l.b16 %v3275
    %v4624 = vunpack.c.h.b16 %v3275
    %v4625 = vunpack.c.l.b16 %v3276
    %v4626 = vunpack.c.l.b16 %v3277
    %v4627 = vunpack.c.h.b16 %v3277
    %v4628 = vunpack.c.l.b16 %v3278
    %v4629 = vunpack.c.h.b16 %v3278
    %v4630 = vunpack.c.l.b16 %v3279
    %v4631 = vunpack.c.h.b16 %v3279
    %v4632 = vunpack.c.l.b16 %v3280
    %v4633 = vunpack.c.l.b16 %v3281
    %v4634 = vunpack.c.h.b16 %v3281
    %v4635 = vunpack.c.l.b16 %v3282
    %v4636 = vunpack.c.h.b16 %v3282
    %v4637 = vunpack.c.l.b16 %v3283
    %v4638 = vunpack.c.h.b16 %v3283
    %v4639 = vunpack.c.l.b16 %v3284
    %v4640 = vunpack.c.l.b16 %v3285
    %v4641 = vunpack.c.h.b16 %v3285
    %v4642 = vunpack.c.l.b16 %v3286
    %v4643 = vunpack.c.h.b16 %v3286
    %v4644 = vunpack.c.l.b16 %v3287
    %v4645 = vunpack.c.h.b16 %v3287
    %v4646 = vunpack.c.l.b16 %v3288
    %v4647 = vunpack.c.l.b16 %v3289
    %v4648 = vunpack.c.h.b16 %v3289
    %v4649 = vunpack.c.l.b16 %v3290
    %v4650 = vunpack.c.h.b16 %v3290
    %v4651 = vunpack.c.l.b16 %v3291
    %v4652 = vunpack.c.h.b16 %v3291
    %v4653 = vunpack.c.l.b16 %v3292
    %v4654 = vunpack.c.l.b16 %v3293
    %v4655 = vunpack.c.h.b16 %v3293
    %v4656 = vunpack.c.l.b16 %v3294
    %v4657 = vunpack.c.h.b16 %v3294
    %v4658 = vunpack.c.l.b16 %v3295
    %v4659 = vunpack.c.h.b16 %v3295
    %v4660 = vunpack.c.l.b16 %v3296
    %v4661 = vunpack.c.l.b16 %v3297
    %v4662 = vunpack.c.h.b16 %v3297
    %v4663 = vunpack.c.l.b16 %v3298
    %v4664 = vunpack.c.h.b16 %v3298
    %v4665 = vunpack.c.l.b16 %v3299
    %v4666 = vunpack.c.h.b16 %v3299
    %v4667 = vunpack.c.l.b16 %v3300
    %v4668 = vunpack.c.l.b16 %v3301
    %v4669 = vunpack.c.h.b16 %v3301
    %v4670 = vunpack.c.l.b16 %v3302
    %v4671 = vunpack.c.h.b16 %v3302
    %v4672 = vunpack.c.l.b16 %v3303
    %v4673 = vunpack.c.h.b16 %v3303
    %v4674 = vunpack.c.l.b16 %v3304
    %v4675 = vunpack.c.l.b16 %v3305
    %v4676 = vunpack.c.h.b16 %v3305
    %v4677 = vunpack.c.l.b16 %v3306
    %v4678 = vunpack.c.h.b16 %v3306
    %v4679 = vunpack.c.l.b16 %v3307
    %v4680 = vunpack.c.h.b16 %v3307
    %v4681 = vunpack.c.l.b16 %v3308
    %v4682 = vunpack.c.l.b16 %v3309
    %v4683 = vunpack.c.h.b16 %v3309
    %v4684 = vunpack.c.l.b16 %v3310
    %v4685 = vunpack.c.h.b16 %v3310
    %v4686 = vunpack.c.l.b16 %v3311
    %v4687 = vunpack.c.h.b16 %v3311
    %v4688 = vunpack.c.l.b16 %v3312
    %v4689 = vunpack.c.l.b16 %v3313
    %v4690 = vunpack.c.h.b16 %v3313
    %v4691 = vunpack.c.l.b16 %v3314
    %v4692 = vunpack.c.h.b16 %v3314
    %v4693 = vunpack.c.l.b16 %v3315
    %v4694 = vunpack.c.h.b16 %v3315
    %v4695 = vunpack.c.l.b16 %v3316
    %v4696 = vunpack.c.l.b16 %v3317
    %v4697 = vunpack.c.h.b16 %v3317
    %v4698 = vunpack.c.l.b16 %v3318
    %v4699 = vunpack.c.h.b16 %v3318
    %v4700 = vunpack.c.l.b16 %v3319
    %v4701 = vunpack.c.h.b16 %v3319
    %v4702 = vunpack.c.l.b16 %v3320
    %v4703 = vunpack.c.l.b16 %v3321
    %v4704 = vunpack.c.h.b16 %v3321
    %v4705 = vunpack.c.l.b16 %v3322
    %v4706 = vunpack.c.h.b16 %v3322
    %v4707 = vunpack.c.l.b16 %v3323
    %v4708 = vunpack.c.h.b16 %v3323
    %v4709 = vunpack.c.l.b16 %v3324
    %v4710 = vunpack.c.l.b16 %v3325
    %v4711 = vunpack.c.h.b16 %v3325
    %v4712 = vunpack.c.l.b16 %v3326
    %v4713 = vunpack.c.h.b16 %v3326
    %v4714 = vunpack.c.l.b16 %v3327
    %v4715 = vunpack.c.h.b16 %v3327
    %v4716 = vunpack.c.l.b16 %v3328
    %v4717 = vunpack.c.l.b16 %v3329
    %v4718 = vunpack.c.h.b16 %v3329
    %v4719 = vunpack.c.l.b16 %v3330
    %v4720 = vunpack.c.h.b16 %v3330
    %v4721 = vunpack.c.l.b16 %v3331
    %v4722 = vunpack.c.h.b16 %v3331
    %v4723 = vunpack.c.l.b16 %v3332
    %v4724 = vunpack.c.l.b16 %v3333
    %v4725 = vunpack.c.h.b16 %v3333
    %v4726 = vunpack.c.l.b16 %v3334
    %v4727 = vunpack.c.h.b16 %v3334
    %v4728 = vunpack.c.l.b16 %v3335
    %v4729 = vunpack.c.h.b16 %v3335
    %v4730 = vunpack.c.l.b16 %v3336
    %v4731 = vunpack.c.l.b16 %v3337
    %v4732 = vunpack.c.h.b16 %v3337
    %v4733 = vunpack.c.l.b16 %v3338
    %v4734 = vunpack.c.h.b16 %v3338
    %v4735 = vunpack.c.l.b16 %v3339
    %v4736 = vunpack.c.h.b16 %v3339
    %v4737 = vunpack.c.l.b16 %v3340
    %v4738 = vunpack.c.l.b16 %v3341
    %v4739 = vunpack.c.h.b16 %v3341
    %v4740 = vunpack.c.l.b16 %v3342
    %v4741 = vunpack.c.h.b16 %v3342
    %v4742 = vunpack.c.l.b16 %v3343
    %v4743 = vunpack.c.h.b16 %v3343
    %v4744 = vunpack.c.l.b16 %v3344
    %v4745 = vunpack.c.l.b16 %v3345
    %v4746 = vunpack.c.h.b16 %v3345
    %v4747 = vunpack.c.l.b16 %v3346
    %v4748 = vunpack.c.h.b16 %v3346
    %v4749 = vunpack.c.l.b16 %v3347
    %v4750 = vunpack.c.h.b16 %v3347
    %v4751 = vunpack.c.l.b16 %v3348
    %v4752 = vunpack.c.l.b16 %v3349
    %v4753 = vunpack.c.h.b16 %v3349
    %v4754 = vunpack.c.l.b16 %v3350
    %v4755 = vunpack.c.h.b16 %v3350
    %v4756 = vunpack.c.l.b16 %v3351
    %v4757 = vunpack.c.h.b16 %v3351
    %v4758 = vunpack.c.l.b16 %v3352
    %v4759 = vunpack.c.l.b16 %v3353
    %v4760 = vunpack.c.h.b16 %v3353
    %v4761 = vunpack.c.l.b16 %v3354
    %v4762 = vunpack.c.h.b16 %v3354
    %v4763 = vunpack.c.l.b16 %v3355
    %v4764 = vunpack.c.h.b16 %v3355
    %v4765 = vunpack.c.l.b16 %v3356
    %v4766 = vunpack.c.l.b16 %v3357
    %v4767 = vunpack.c.h.b16 %v3357
    %v4768 = vunpack.c.l.b16 %v3358
    %v4769 = vunpack.c.h.b16 %v3358
    %v4770 = vunpack.c.l.b16 %v3359
    %v4771 = vunpack.c.h.b16 %v3359
    %v4772 = vunpack.c.l.b16 %v3360
    %v4773 = vunpack.c.l.b16 %v3361
    %v4774 = vunpack.c.h.b16 %v3361
    %v4775 = vunpack.c.l.b16 %v3362
    %v4776 = vunpack.c.h.b16 %v3362
    %v4777 = vunpack.c.l.b16 %v3363
    %v4778 = vunpack.c.h.b16 %v3363
    %v4779 = vunpack.c.l.b16 %v3364
    %v4780 = vunpack.c.l.b16 %v3365
    %v4781 = vunpack.c.h.b16 %v3365
    %v4782 = vunpack.c.l.b16 %v3366
    %v4783 = vunpack.c.h.b16 %v3366
    %v4784 = vunpack.c.l.b16 %v3367
    %v4785 = vunpack.c.h.b16 %v3367
    %v4786 = vunpack.c.l.b16 %v3368
    %v4787 = vunpack.c.l.b16 %v3369
    %v4788 = vunpack.c.h.b16 %v3369
    %v4789 = vunpack.c.l.b16 %v3370
    %v4790 = vunpack.c.h.b16 %v3370
    %v4791 = vunpack.c.l.b16 %v3371
    %v4792 = vunpack.c.h.b16 %v3371
    %v4793 = vunpack.c.l.b16 %v3372
    %v4794 = vunpack.c.l.b16 %v3373
    %v4795 = vunpack.c.h.b16 %v3373
    %v4796 = vunpack.c.l.b16 %v3374
    %v4797 = vunpack.c.h.b16 %v3374
    %v4798 = vunpack.c.l.b16 %v3375
    %v4799 = vunpack.c.h.b16 %v3375
    %v4800 = vunpack.c.l.b16 %v3376
    %v4801 = vunpack.c.l.b16 %v3377
    %v4802 = vunpack.c.h.b16 %v3377
    %v4803 = vunpack.c.l.b16 %v3378
    %v4804 = vunpack.c.h.b16 %v3378
    %v4805 = vunpack.c.l.b16 %v3379
    %v4806 = vunpack.c.h.b16 %v3379
    %v4807 = vunpack.c.l.b16 %v3380
    %v4808 = vunpack.c.l.b16 %v3381
    %v4809 = vunpack.c.h.b16 %v3381
    %v4810 = vunpack.c.l.b16 %v3382
    %v4811 = vunpack.c.h.b16 %v3382
    %v4812 = vunpack.c.l.b16 %v3383
    %v4813 = vunpack.c.h.b16 %v3383
    %v4814 = vunpack.c.l.b16 %v3384
    %v4815 = vunpack.c.l.b16 %v3385
    %v4816 = vunpack.c.h.b16 %v3385
    %v4817 = vunpack.c.l.b16 %v3386
    %v4818 = vunpack.c.h.b16 %v3386
    %v4819 = vunpack.c.l.b16 %v3387
    %v4820 = vunpack.c.h.b16 %v3387
    %v4821 = vunpack.c.l.b16 %v3388
    %v4822 = vunpack.c.l.b16 %v3389
    %v4823 = vunpack.c.h.b16 %v3389
    %v4824 = vunpack.c.l.b16 %v3390
    %v4825 = vunpack.c.h.b16 %v3390
    %v4826 = vunpack.c.l.b16 %v3391
    %v4827 = vunpack.c.h.b16 %v3391
    %v4828 = vunpack.c.l.b16 %v3392
    %v4829 = vunpack.c.l.b16 %v3393
    %v4830 = vunpack.c.h.b16 %v3393
    %v4831 = vunpack.c.l.b16 %v3394
    %v4832 = vunpack.c.h.b16 %v3394
    %v4833 = vunpack.c.l.b16 %v3395
    %v4834 = vunpack.c.h.b16 %v3395
    %v4835 = vunpack.c.l.b16 %v3396
    %v4836 = vunpack.c.l.b16 %v3397
    %v4837 = vunpack.c.h.b16 %v3397
    %v4838 = vunpack.c.l.b16 %v3398
    %v4839 = vunpack.c.h.b16 %v3398
    %v4840 = vunpack.c.l.b16 %v3399
    %v4841 = vunpack.c.h.b16 %v3399
    %v4842 = vunpack.c.l.b16 %v3400
    %v4843 = vunpack.c.l.b16 %v3401
    %v4844 = vunpack.c.h.b16 %v3401
    %v4845 = vunpack.c.l.b16 %v3402
    %v4846 = vunpack.c.h.b16 %v3402
    %v4847 = vunpack.c.l.b16 %v3403
    %v4848 = vunpack.c.h.b16 %v3403
    %v4849 = vunpack.c.l.b16 %v3404
    %v4850 = vpack.c.b16 %v3961, %v3954
    %v4851 = vpack.c.b16 %v3962, %v3955
    %v4852 = vpack.c.b16 %v3963, %v3956
    %v4853 = vpack.c.b16 %v3964, %v3957
    %v4854 = vpack.c.b16 %v3965, %v3958
    %v4855 = vpack.c.b16 %v3966, %v3959
    %v4856 = vpack.c.b16 %v3967, %v3960
    %v4857 = vpack.c.b16 %v3975, %v3968
    %v4858 = vpack.c.b16 %v3976, %v3969
    %v4859 = vpack.c.b16 %v3977, %v3970
    %v4860 = vpack.c.b16 %v3978, %v3971
    %v4861 = vpack.c.b16 %v3979, %v3972
    %v4862 = vpack.c.b16 %v3980, %v3973
    %v4863 = vpack.c.b16 %v3981, %v3974
    %v4864 = vpack.c.b16 %v3989, %v3982
    %v4865 = vpack.c.b16 %v3990, %v3983
    %v4866 = vpack.c.b16 %v3991, %v3984
    %v4867 = vpack.c.b16 %v3992, %v3985
    %v4868 = vpack.c.b16 %v3993, %v3986
    %v4869 = vpack.c.b16 %v3994, %v3987
    %v4870 = vpack.c.b16 %v3995, %v3988
    %v4871 = vpack.c.b16 %v4003, %v3996
    %v4872 = vpack.c.b16 %v4004, %v3997
    %v4873 = vpack.c.b16 %v4005, %v3998
    %v4874 = vpack.c.b16 %v4006, %v3999
    %v4875 = vpack.c.b16 %v4007, %v4000
    %v4876 = vpack.c.b16 %v4008, %v4001
    %v4877 = vpack.c.b16 %v4009, %v4002
    %v4878 = vpack.c.b16 %v4017, %v4010
    %v4879 = vpack.c.b16 %v4018, %v4011
    %v4880 = vpack.c.b16 %v4019, %v4012
    %v4881 = vpack.c.b16 %v4020, %v4013
    %v4882 = vpack.c.b16 %v4021, %v4014
    %v4883 = vpack.c.b16 %v4022, %v4015
    %v4884 = vpack.c.b16 %v4023, %v4016
    %v4885 = vpack.c.b16 %v4031, %v4024
    %v4886 = vpack.c.b16 %v4032, %v4025
    %v4887 = vpack.c.b16 %v4033, %v4026
    %v4888 = vpack.c.b16 %v4034, %v4027
    %v4889 = vpack.c.b16 %v4035, %v4028
    %v4890 = vpack.c.b16 %v4036, %v4029
    %v4891 = vpack.c.b16 %v4037, %v4030
    %v4892 = vpack.c.b16 %v4045, %v4038
    %v4893 = vpack.c.b16 %v4046, %v4039
    %v4894 = vpack.c.b16 %v4047, %v4040
    %v4895 = vpack.c.b16 %v4048, %v4041
    %v4896 = vpack.c.b16 %v4049, %v4042
    %v4897 = vpack.c.b16 %v4050, %v4043
    %v4898 = vpack.c.b16 %v4051, %v4044
    %v4899 = vpack.c.b16 %v4059, %v4052
    %v4900 = vpack.c.b16 %v4060, %v4053
    %v4901 = vpack.c.b16 %v4061, %v4054
    %v4902 = vpack.c.b16 %v4062, %v4055
    %v4903 = vpack.c.b16 %v4063, %v4056
    %v4904 = vpack.c.b16 %v4064, %v4057
    %v4905 = vpack.c.b16 %v4065, %v4058
    %v4906 = vpack.c.b16 %v4073, %v4066
    %v4907 = vpack.c.b16 %v4074, %v4067
    %v4908 = vpack.c.b16 %v4075, %v4068
    %v4909 = vpack.c.b16 %v4076, %v4069
    %v4910 = vpack.c.b16 %v4077, %v4070
    %v4911 = vpack.c.b16 %v4078, %v4071
    %v4912 = vpack.c.b16 %v4079, %v4072
    %v4913 = vpack.c.b16 %v4087, %v4080
    %v4914 = vpack.c.b16 %v4088, %v4081
    %v4915 = vpack.c.b16 %v4089, %v4082
    %v4916 = vpack.c.b16 %v4090, %v4083
    %v4917 = vpack.c.b16 %v4091, %v4084
    %v4918 = vpack.c.b16 %v4092, %v4085
    %v4919 = vpack.c.b16 %v4093, %v4086
    %v4920 = vpack.c.b16 %v4101, %v4094
    %v4921 = vpack.c.b16 %v4102, %v4095
    %v4922 = vpack.c.b16 %v4103, %v4096
    %v4923 = vpack.c.b16 %v4104, %v4097
    %v4924 = vpack.c.b16 %v4105, %v4098
    %v4925 = vpack.c.b16 %v4106, %v4099
    %v4926 = vpack.c.b16 %v4107, %v4100
    %v4927 = vpack.c.b16 %v4115, %v4108
    %v4928 = vpack.c.b16 %v4116, %v4109
    %v4929 = vpack.c.b16 %v4117, %v4110
    %v4930 = vpack.c.b16 %v4118, %v4111
    %v4931 = vpack.c.b16 %v4119, %v4112
    %v4932 = vpack.c.b16 %v4120, %v4113
    %v4933 = vpack.c.b16 %v4121, %v4114
    %v4934 = vpack.c.b16 %v4129, %v4122
    %v4935 = vpack.c.b16 %v4130, %v4123
    %v4936 = vpack.c.b16 %v4131, %v4124
    %v4937 = vpack.c.b16 %v4132, %v4125
    %v4938 = vpack.c.b16 %v4133, %v4126
    %v4939 = vpack.c.b16 %v4134, %v4127
    %v4940 = vpack.c.b16 %v4135, %v4128
    %v4941 = vpack.c.b16 %v4143, %v4136
    %v4942 = vpack.c.b16 %v4144, %v4137
    %v4943 = vpack.c.b16 %v4145, %v4138
    %v4944 = vpack.c.b16 %v4146, %v4139
    %v4945 = vpack.c.b16 %v4147, %v4140
    %v4946 = vpack.c.b16 %v4148, %v4141
    %v4947 = vpack.c.b16 %v4149, %v4142
    %v4948 = vpack.c.b16 %v4157, %v4150
    %v4949 = vpack.c.b16 %v4158, %v4151
    %v4950 = vpack.c.b16 %v4159, %v4152
    %v4951 = vpack.c.b16 %v4160, %v4153
    %v4952 = vpack.c.b16 %v4161, %v4154
    %v4953 = vpack.c.b16 %v4162, %v4155
    %v4954 = vpack.c.b16 %v4163, %v4156
    %v4955 = vpack.c.b16 %v4171, %v4164
    %v4956 = vpack.c.b16 %v4172, %v4165
    %v4957 = vpack.c.b16 %v4173, %v4166
    %v4958 = vpack.c.b16 %v4174, %v4167
    %v4959 = vpack.c.b16 %v4175, %v4168
    %v4960 = vpack.c.b16 %v4176, %v4169
    %v4961 = vpack.c.b16 %v4177, %v4170
    %v4962 = vpack.c.b16 %v4185, %v4178
    %v4963 = vpack.c.b16 %v4186, %v4179
    %v4964 = vpack.c.b16 %v4187, %v4180
    %v4965 = vpack.c.b16 %v4188, %v4181
    %v4966 = vpack.c.b16 %v4189, %v4182
    %v4967 = vpack.c.b16 %v4190, %v4183
    %v4968 = vpack.c.b16 %v4191, %v4184
    %v4969 = vpack.c.b16 %v4199, %v4192
    %v4970 = vpack.c.b16 %v4200, %v4193
    %v4971 = vpack.c.b16 %v4201, %v4194
    %v4972 = vpack.c.b16 %v4202, %v4195
    %v4973 = vpack.c.b16 %v4203, %v4196
    %v4974 = vpack.c.b16 %v4204, %v4197
    %v4975 = vpack.c.b16 %v4205, %v4198
    %v4976 = vpack.c.b16 %v4213, %v4206
    %v4977 = vpack.c.b16 %v4214, %v4207
    %v4978 = vpack.c.b16 %v4215, %v4208
    %v4979 = vpack.c.b16 %v4216, %v4209
    %v4980 = vpack.c.b16 %v4217, %v4210
    %v4981 = vpack.c.b16 %v4218, %v4211
    %v4982 = vpack.c.b16 %v4219, %v4212
    %v4983 = vpack.c.b16 %v4227, %v4220
    %v4984 = vpack.c.b16 %v4228, %v4221
    %v4985 = vpack.c.b16 %v4229, %v4222
    %v4986 = vpack.c.b16 %v4230, %v4223
    %v4987 = vpack.c.b16 %v4231, %v4224
    %v4988 = vpack.c.b16 %v4232, %v4225
    %v4989 = vpack.c.b16 %v4233, %v4226
    %v4990 = vpack.c.b16 %v4241, %v4234
    %v4991 = vpack.c.b16 %v4242, %v4235
    %v4992 = vpack.c.b16 %v4243, %v4236
    %v4993 = vpack.c.b16 %v4244, %v4237
    %v4994 = vpack.c.b16 %v4245, %v4238
    %v4995 = vpack.c.b16 %v4246, %v4239
    %v4996 = vpack.c.b16 %v4247, %v4240
    %v4997 = vpack.c.b16 %v4255, %v4248
    %v4998 = vpack.c.b16 %v4256, %v4249
    %v4999 = vpack.c.b16 %v4257, %v4250
    %v5000 = vpack.c.b16 %v4258, %v4251
    %v5001 = vpack.c.b16 %v4259, %v4252
    %v5002 = vpack.c.b16 %v4260, %v4253
    %v5003 = vpack.c.b16 %v4261, %v4254
    %v5004 = vpack.c.b16 %v4269, %v4262
    %v5005 = vpack.c.b16 %v4270, %v4263
    %v5006 = vpack.c.b16 %v4271, %v4264
    %v5007 = vpack.c.b16 %v4272, %v4265
    %v5008 = vpack.c.b16 %v4273, %v4266
    %v5009 = vpack.c.b16 %v4274, %v4267
    %v5010 = vpack.c.b16 %v4275, %v4268
    %v5011 = vpack.c.b16 %v4283, %v4276
    %v5012 = vpack.c.b16 %v4284, %v4277
    %v5013 = vpack.c.b16 %v4285, %v4278
    %v5014 = vpack.c.b16 %v4286, %v4279
    %v5015 = vpack.c.b16 %v4287, %v4280
    %v5016 = vpack.c.b16 %v4288, %v4281
    %v5017 = vpack.c.b16 %v4289, %v4282
    %v5018 = vpack.c.b16 %v4297, %v4290
    %v5019 = vpack.c.b16 %v4298, %v4291
    %v5020 = vpack.c.b16 %v4299, %v4292
    %v5021 = vpack.c.b16 %v4300, %v4293
    %v5022 = vpack.c.b16 %v4301, %v4294
    %v5023 = vpack.c.b16 %v4302, %v4295
    %v5024 = vpack.c.b16 %v4303, %v4296
    %v5025 = vpack.c.b16 %v4311, %v4304
    %v5026 = vpack.c.b16 %v4312, %v4305
    %v5027 = vpack.c.b16 %v4313, %v4306
    %v5028 = vpack.c.b16 %v4314, %v4307
    %v5029 = vpack.c.b16 %v4315, %v4308
    %v5030 = vpack.c.b16 %v4316, %v4309
    %v5031 = vpack.c.b16 %v4317, %v4310
    %v5032 = vpack.c.b16 %v4325, %v4318
    %v5033 = vpack.c.b16 %v4326, %v4319
    %v5034 = vpack.c.b16 %v4327, %v4320
    %v5035 = vpack.c.b16 %v4328, %v4321
    %v5036 = vpack.c.b16 %v4329, %v4322
    %v5037 = vpack.c.b16 %v4330, %v4323
    %v5038 = vpack.c.b16 %v4331, %v4324
    %v5039 = vpack.c.b16 %v4339, %v4332
    %v5040 = vpack.c.b16 %v4340, %v4333
    %v5041 = vpack.c.b16 %v4341, %v4334
    %v5042 = vpack.c.b16 %v4342, %v4335
    %v5043 = vpack.c.b16 %v4343, %v4336
    %v5044 = vpack.c.b16 %v4344, %v4337
    %v5045 = vpack.c.b16 %v4345, %v4338
    %v5046 = vpack.c.b16 %v4353, %v4346
    %v5047 = vpack.c.b16 %v4354, %v4347
    %v5048 = vpack.c.b16 %v4355, %v4348
    %v5049 = vpack.c.b16 %v4356, %v4349
    %v5050 = vpack.c.b16 %v4357, %v4350
    %v5051 = vpack.c.b16 %v4358, %v4351
    %v5052 = vpack.c.b16 %v4359, %v4352
    %v5053 = vpack.c.b16 %v4367, %v4360
    %v5054 = vpack.c.b16 %v4368, %v4361
    %v5055 = vpack.c.b16 %v4369, %v4362
    %v5056 = vpack.c.b16 %v4370, %v4363
    %v5057 = vpack.c.b16 %v4371, %v4364
    %v5058 = vpack.c.b16 %v4372, %v4365
    %v5059 = vpack.c.b16 %v4373, %v4366
    %v5060 = vpack.c.b16 %v4381, %v4374
    %v5061 = vpack.c.b16 %v4382, %v4375
    %v5062 = vpack.c.b16 %v4383, %v4376
    %v5063 = vpack.c.b16 %v4384, %v4377
    %v5064 = vpack.c.b16 %v4385, %v4378
    %v5065 = vpack.c.b16 %v4386, %v4379
    %v5066 = vpack.c.b16 %v4387, %v4380
    %v5067 = vpack.c.b16 %v4395, %v4388
    %v5068 = vpack.c.b16 %v4396, %v4389
    %v5069 = vpack.c.b16 %v4397, %v4390
    %v5070 = vpack.c.b16 %v4398, %v4391
    %v5071 = vpack.c.b16 %v4399, %v4392
    %v5072 = vpack.c.b16 %v4400, %v4393
    %v5073 = vpack.c.b16 %v4401, %v4394
    %v5074 = vpack.c.b16 %v4409, %v4402
    %v5075 = vpack.c.b16 %v4410, %v4403
    %v5076 = vpack.c.b16 %v4411, %v4404
    %v5077 = vpack.c.b16 %v4412, %v4405
    %v5078 = vpack.c.b16 %v4413, %v4406
    %v5079 = vpack.c.b16 %v4414, %v4407
    %v5080 = vpack.c.b16 %v4415, %v4408
    %v5081 = vpack.c.b16 %v4423, %v4416
    %v5082 = vpack.c.b16 %v4424, %v4417
    %v5083 = vpack.c.b16 %v4425, %v4418
    %v5084 = vpack.c.b16 %v4426, %v4419
    %v5085 = vpack.c.b16 %v4427, %v4420
    %v5086 = vpack.c.b16 %v4428, %v4421
    %v5087 = vpack.c.b16 %v4429, %v4422
    %v5088 = vpack.c.b16 %v4437, %v4430
    %v5089 = vpack.c.b16 %v4438, %v4431
    %v5090 = vpack.c.b16 %v4439, %v4432
    %v5091 = vpack.c.b16 %v4440, %v4433
    %v5092 = vpack.c.b16 %v4441, %v4434
    %v5093 = vpack.c.b16 %v4442, %v4435
    %v5094 = vpack.c.b16 %v4443, %v4436
    %v5095 = vpack.c.b16 %v4451, %v4444
    %v5096 = vpack.c.b16 %v4452, %v4445
    %v5097 = vpack.c.b16 %v4453, %v4446
    %v5098 = vpack.c.b16 %v4454, %v4447
    %v5099 = vpack.c.b16 %v4455, %v4448
    %v5100 = vpack.c.b16 %v4456, %v4449
    %v5101 = vpack.c.b16 %v4457, %v4450
    %v5102 = vpack.c.b16 %v4465, %v4458
    %v5103 = vpack.c.b16 %v4466, %v4459
    %v5104 = vpack.c.b16 %v4467, %v4460
    %v5105 = vpack.c.b16 %v4468, %v4461
    %v5106 = vpack.c.b16 %v4469, %v4462
    %v5107 = vpack.c.b16 %v4470, %v4463
    %v5108 = vpack.c.b16 %v4471, %v4464
    %v5109 = vpack.c.b16 %v4479, %v4472
    %v5110 = vpack.c.b16 %v4480, %v4473
    %v5111 = vpack.c.b16 %v4481, %v4474
    %v5112 = vpack.c.b16 %v4482, %v4475
    %v5113 = vpack.c.b16 %v4483, %v4476
    %v5114 = vpack.c.b16 %v4484, %v4477
    %v5115 = vpack.c.b16 %v4485, %v4478
    %v5116 = vpack.c.b16 %v4493, %v4486
    %v5117 = vpack.c.b16 %v4494, %v4487
    %v5118 = vpack.c.b16 %v4495, %v4488
    %v5119 = vpack.c.b16 %v4496, %v4489
    %v5120 = vpack.c.b16 %v4497, %v4490
    %v5121 = vpack.c.b16 %v4498, %v4491
    %v5122 = vpack.c.b16 %v4499, %v4492
    %v5123 = vpack.c.b16 %v4507, %v4500
    %v5124 = vpack.c.b16 %v4508, %v4501
    %v5125 = vpack.c.b16 %v4509, %v4502
    %v5126 = vpack.c.b16 %v4510, %v4503
    %v5127 = vpack.c.b16 %v4511, %v4504
    %v5128 = vpack.c.b16 %v4512, %v4505
    %v5129 = vpack.c.b16 %v4513, %v4506
    %v5130 = vpack.c.b16 %v4521, %v4514
    %v5131 = vpack.c.b16 %v4522, %v4515
    %v5132 = vpack.c.b16 %v4523, %v4516
    %v5133 = vpack.c.b16 %v4524, %v4517
    %v5134 = vpack.c.b16 %v4525, %v4518
    %v5135 = vpack.c.b16 %v4526, %v4519
    %v5136 = vpack.c.b16 %v4527, %v4520
    %v5137 = vpack.c.b16 %v4535, %v4528
    %v5138 = vpack.c.b16 %v4536, %v4529
    %v5139 = vpack.c.b16 %v4537, %v4530
    %v5140 = vpack.c.b16 %v4538, %v4531
    %v5141 = vpack.c.b16 %v4539, %v4532
    %v5142 = vpack.c.b16 %v4540, %v4533
    %v5143 = vpack.c.b16 %v4541, %v4534
    %v5144 = vpack.c.b16 %v4549, %v4542
    %v5145 = vpack.c.b16 %v4550, %v4543
    %v5146 = vpack.c.b16 %v4551, %v4544
    %v5147 = vpack.c.b16 %v4552, %v4545
    %v5148 = vpack.c.b16 %v4553, %v4546
    %v5149 = vpack.c.b16 %v4554, %v4547
    %v5150 = vpack.c.b16 %v4555, %v4548
    %v5151 = vpack.c.b16 %v4563, %v4556
    %v5152 = vpack.c.b16 %v4564, %v4557
    %v5153 = vpack.c.b16 %v4565, %v4558
    %v5154 = vpack.c.b16 %v4566, %v4559
    %v5155 = vpack.c.b16 %v4567, %v4560
    %v5156 = vpack.c.b16 %v4568, %v4561
    %v5157 = vpack.c.b16 %v4569, %v4562
    %v5158 = vpack.c.b16 %v4577, %v4570
    %v5159 = vpack.c.b16 %v4578, %v4571
    %v5160 = vpack.c.b16 %v4579, %v4572
    %v5161 = vpack.c.b16 %v4580, %v4573
    %v5162 = vpack.c.b16 %v4581, %v4574
    %v5163 = vpack.c.b16 %v4582, %v4575
    %v5164 = vpack.c.b16 %v4583, %v4576
    %v5165 = vpack.c.b16 %v4591, %v4584
    %v5166 = vpack.c.b16 %v4592, %v4585
    %v5167 = vpack.c.b16 %v4593, %v4586
    %v5168 = vpack.c.b16 %v4594, %v4587
    %v5169 = vpack.c.b16 %v4595, %v4588
    %v5170 = vpack.c.b16 %v4596, %v4589
    %v5171 = vpack.c.b16 %v4597, %v4590
    %v5172 = vpack.c.b16 %v4605, %v4598
    %v5173 = vpack.c.b16 %v4606, %v4599
    %v5174 = vpack.c.b16 %v4607, %v4600
    %v5175 = vpack.c.b16 %v4608, %v4601
    %v5176 = vpack.c.b16 %v4609, %v4602
    %v5177 = vpack.c.b16 %v4610, %v4603
    %v5178 = vpack.c.b16 %v4611, %v4604
    %v5179 = vpack.c.b16 %v4619, %v4612
    %v5180 = vpack.c.b16 %v4620, %v4613
    %v5181 = vpack.c.b16 %v4621, %v4614
    %v5182 = vpack.c.b16 %v4622, %v4615
    %v5183 = vpack.c.b16 %v4623, %v4616
    %v5184 = vpack.c.b16 %v4624, %v4617
    %v5185 = vpack.c.b16 %v4625, %v4618
    %v5186 = vpack.c.b16 %v4633, %v4626
    %v5187 = vpack.c.b16 %v4634, %v4627
    %v5188 = vpack.c.b16 %v4635, %v4628
    %v5189 = vpack.c.b16 %v4636, %v4629
    %v5190 = vpack.c.b16 %v4637, %v4630
    %v5191 = vpack.c.b16 %v4638, %v4631
    %v5192 = vpack.c.b16 %v4639, %v4632
    %v5193 = vpack.c.b16 %v4647, %v4640
    %v5194 = vpack.c.b16 %v4648, %v4641
    %v5195 = vpack.c.b16 %v4649, %v4642
    %v5196 = vpack.c.b16 %v4650, %v4643
    %v5197 = vpack.c.b16 %v4651, %v4644
    %v5198 = vpack.c.b16 %v4652, %v4645
    %v5199 = vpack.c.b16 %v4653, %v4646
    %v5200 = vpack.c.b16 %v4661, %v4654
    %v5201 = vpack.c.b16 %v4662, %v4655
    %v5202 = vpack.c.b16 %v4663, %v4656
    %v5203 = vpack.c.b16 %v4664, %v4657
    %v5204 = vpack.c.b16 %v4665, %v4658
    %v5205 = vpack.c.b16 %v4666, %v4659
    %v5206 = vpack.c.b16 %v4667, %v4660
    %v5207 = vpack.c.b16 %v4675, %v4668
    %v5208 = vpack.c.b16 %v4676, %v4669
    %v5209 = vpack.c.b16 %v4677, %v4670
    %v5210 = vpack.c.b16 %v4678, %v4671
    %v5211 = vpack.c.b16 %v4679, %v4672
    %v5212 = vpack.c.b16 %v4680, %v4673
    %v5213 = vpack.c.b16 %v4681, %v4674
    %v5214 = vpack.c.b16 %v4689, %v4682
    %v5215 = vpack.c.b16 %v4690, %v4683
    %v5216 = vpack.c.b16 %v4691, %v4684
    %v5217 = vpack.c.b16 %v4692, %v4685
    %v5218 = vpack.c.b16 %v4693, %v4686
    %v5219 = vpack.c.b16 %v4694, %v4687
    %v5220 = vpack.c.b16 %v4695, %v4688
    %v5221 = vpack.c.b16 %v4703, %v4696
    %v5222 = vpack.c.b16 %v4704, %v4697
    %v5223 = vpack.c.b16 %v4705, %v4698
    %v5224 = vpack.c.b16 %v4706, %v4699
    %v5225 = vpack.c.b16 %v4707, %v4700
    %v5226 = vpack.c.b16 %v4708, %v4701
    %v5227 = vpack.c.b16 %v4709, %v4702
    %v5228 = vpack.c.b16 %v4717, %v4710
    %v5229 = vpack.c.b16 %v4718, %v4711
    %v5230 = vpack.c.b16 %v4719, %v4712
    %v5231 = vpack.c.b16 %v4720, %v4713
    %v5232 = vpack.c.b16 %v4721, %v4714
    %v5233 = vpack.c.b16 %v4722, %v4715
    %v5234 = vpack.c.b16 %v4723, %v4716
    %v5235 = vpack.c.b16 %v4731, %v4724
    %v5236 = vpack.c.b16 %v4732, %v4725
    %v5237 = vpack.c.b16 %v4733, %v4726
    %v5238 = vpack.c.b16 %v4734, %v4727
    %v5239 = vpack.c.b16 %v4735, %v4728
    %v5240 = vpack.c.b16 %v4736, %v4729
    %v5241 = vpack.c.b16 %v4737, %v4730
    %v5242 = vpack.c.b16 %v4745, %v4738
    %v5243 = vpack.c.b16 %v4746, %v4739
    %v5244 = vpack.c.b16 %v4747, %v4740
    %v5245 = vpack.c.b16 %v4748, %v4741
    %v5246 = vpack.c.b16 %v4749, %v4742
    %v5247 = vpack.c.b16 %v4750, %v4743
    %v5248 = vpack.c.b16 %v4751, %v4744
    %v5249 = vpack.c.b16 %v4759, %v4752
    %v5250 = vpack.c.b16 %v4760, %v4753
    %v5251 = vpack.c.b16 %v4761, %v4754
    %v5252 = vpack.c.b16 %v4762, %v4755
    %v5253 = vpack.c.b16 %v4763, %v4756
    %v5254 = vpack.c.b16 %v4764, %v4757
    %v5255 = vpack.c.b16 %v4765, %v4758
    %v5256 = vpack.c.b16 %v4773, %v4766
    %v5257 = vpack.c.b16 %v4774, %v4767
    %v5258 = vpack.c.b16 %v4775, %v4768
    %v5259 = vpack.c.b16 %v4776, %v4769
    %v5260 = vpack.c.b16 %v4777, %v4770
    %v5261 = vpack.c.b16 %v4778, %v4771
    %v5262 = vpack.c.b16 %v4779, %v4772
    %v5263 = vpack.c.b16 %v4787, %v4780
    %v5264 = vpack.c.b16 %v4788, %v4781
    %v5265 = vpack.c.b16 %v4789, %v4782
    %v5266 = vpack.c.b16 %v4790, %v4783
    %v5267 = vpack.c.b16 %v4791, %v4784
    %v5268 = vpack.c.b16 %v4792, %v4785
    %v5269 = vpack.c.b16 %v4793, %v4786
    %v5270 = vpack.c.b16 %v4801, %v4794
    %v5271 = vpack.c.b16 %v4802, %v4795
    %v5272 = vpack.c.b16 %v4803, %v4796
    %v5273 = vpack.c.b16 %v4804, %v4797
    %v5274 = vpack.c.b16 %v4805, %v4798
    %v5275 = vpack.c.b16 %v4806, %v4799
    %v5276 = vpack.c.b16 %v4807, %v4800
    %v5277 = vpack.c.b16 %v4815, %v4808
    %v5278 = vpack.c.b16 %v4816, %v4809
    %v5279 = vpack.c.b16 %v4817, %v4810
    %v5280 = vpack.c.b16 %v4818, %v4811
    %v5281 = vpack.c.b16 %v4819, %v4812
    %v5282 = vpack.c.b16 %v4820, %v4813
    %v5283 = vpack.c.b16 %v4821, %v4814
    %v5284 = vpack.c.b16 %v4829, %v4822
    %v5285 = vpack.c.b16 %v4830, %v4823
    %v5286 = vpack.c.b16 %v4831, %v4824
    %v5287 = vpack.c.b16 %v4832, %v4825
    %v5288 = vpack.c.b16 %v4833, %v4826
    %v5289 = vpack.c.b16 %v4834, %v4827
    %v5290 = vpack.c.b16 %v4835, %v4828
    %v5291 = vpack.c.b16 %v4843, %v4836
    %v5292 = vpack.c.b16 %v4844, %v4837
    %v5293 = vpack.c.b16 %v4845, %v4838
    %v5294 = vpack.c.b16 %v4846, %v4839
    %v5295 = vpack.c.b16 %v4847, %v4840
    %v5296 = vpack.c.b16 %v4848, %v4841
    %v5297 = vpack.c.b16 %v4849, %v4842
    %5746 = vmatprep.subr.bf16.mxu0 %v4851
    %5747 = vmatpush1.bf16.msra.mxu0 %v4850
    %5748 = vmatprep.subr.bf16.mxu0 %v4858
    %5749 = vmatpush1.bf16.msra.mxu0 %v4857
    %5750 = vmatprep.subr.bf16.mxu0 %v4865
    %5751 = vmatpush1.bf16.msra.mxu0 %v4864
    %5752 = vmatprep.subr.bf16.mxu0 %v4872
    %5753 = vmatpush1.bf16.msra.mxu0 %v4871
    %5754 = vmatprep.subr.bf16.mxu0 %v4879
    %5755 = vmatpush1.bf16.msra.mxu0 %v4878
    %5756 = vmatprep.subr.bf16.mxu0 %v4886
    %5757 = vmatpush1.bf16.msra.mxu0 %v4885
    %5758 = vmatprep.subr.bf16.mxu0 %v4893
    %5759 = vmatpush1.bf16.msra.mxu0 %v4892
    %5760 = vmatprep.subr.bf16.mxu0 %v4900
    %5761 = vmatpush1.bf16.msra.mxu0 %v4899
    %5762 = vmatprep.subr.bf16.mxu0 %v4907
    %5763 = vmatpush1.bf16.msra.mxu0 %v4906
    %5764 = vmatprep.subr.bf16.mxu0 %v4914
    %5765 = vmatpush1.bf16.msra.mxu0 %v4913
    %5766 = vmatprep.subr.bf16.mxu0 %v4921
    %5767 = vmatpush1.bf16.msra.mxu0 %v4920
    %5768 = vmatprep.subr.bf16.mxu0 %v4928
    %5769 = vmatpush1.bf16.msra.mxu0 %v4927
    %5770 = vmatprep.subr.bf16.mxu0 %v4935
    %5771 = vmatpush1.bf16.msra.mxu0 %v4934
    %5772 = vmatprep.subr.bf16.mxu0 %v4942
    %5773 = vmatpush1.bf16.msra.mxu0 %v4941
    %5774 = vmatprep.subr.bf16.mxu0 %v4949
    %5775 = vmatpush1.bf16.msra.mxu0 %v4948
    %5776 = vmatprep.subr.bf16.mxu0 %v4956
    %5777 = vmatpush1.bf16.msra.mxu0 %v4955
    %5778 = vmatprep.mubr.bf16.mxu0 %v2886
    %5779 = vmatmul.mubr.bf16.gmra.mrb[0].mxu0 %v2885
    %v5780 = vpop.f32.mrb[0].mxu0
    %v5781 = vadd.f32 %v3410, %v5780
    %v5782 = vpop.f32.mrb[0].mxu0
    %v5783 = vadd.f32 %v3414, %v5782
    %v5784 = vpop.f32.mrb[0].mxu0
    %v5785 = vpop.f32.mrb[0].mxu0
    %5786 = vdwg.mxu0
    %5787 = vmatprep.subr.bf16.mxu0 %v4963
    %5788 = vmatpush1.bf16.msra.mxu0 %v4962
    %5789 = vmatprep.subr.bf16.mxu0 %v4970
    %5790 = vmatpush1.bf16.msra.mxu0 %v4969
    %5791 = vmatprep.subr.bf16.mxu0 %v4977
    %5792 = vmatpush1.bf16.msra.mxu0 %v4976
    %5793 = vmatprep.subr.bf16.mxu0 %v4984
    %5794 = vmatpush1.bf16.msra.mxu0 %v4983
    %5795 = vmatprep.subr.bf16.mxu0 %v4991
    %5796 = vmatpush1.bf16.msra.mxu0 %v4990
    %5797 = vmatprep.subr.bf16.mxu0 %v4998
    %5798 = vmatpush1.bf16.msra.mxu0 %v4997
    %5799 = vmatprep.subr.bf16.mxu0 %v5005
    %5800 = vmatpush1.bf16.msra.mxu0 %v5004
    %5801 = vmatprep.subr.bf16.mxu0 %v5012
    %5802 = vmatpush1.bf16.msra.mxu0 %v5011
    %5803 = vmatprep.subr.bf16.mxu0 %v5019
    %5804 = vmatpush1.bf16.msra.mxu0 %v5018
    %5805 = vmatprep.subr.bf16.mxu0 %v5026
    %5806 = vmatpush1.bf16.msra.mxu0 %v5025
    %5807 = vmatprep.subr.bf16.mxu0 %v5033
    %5808 = vmatpush1.bf16.msra.mxu0 %v5032
    %5809 = vmatprep.subr.bf16.mxu0 %v5040
    %5810 = vmatpush1.bf16.msra.mxu0 %v5039
    %5811 = vmatprep.subr.bf16.mxu0 %v5047
    %5812 = vmatpush1.bf16.msra.mxu0 %v5046
    %5813 = vmatprep.subr.bf16.mxu0 %v5054
    %5814 = vmatpush1.bf16.msra.mxu0 %v5053
    %5815 = vmatprep.subr.bf16.mxu0 %v5061
    %5816 = vmatpush1.bf16.msra.mxu0 %v5060
    %5817 = vmatprep.subr.bf16.mxu0 %v5068
    %5818 = vmatpush1.bf16.msra.mxu0 %v5067
    %5819 = vmatprep.mubr.bf16.mxu0 %v2888
    %5820 = vmatmul.mubr.bf16.gmra.mrb[0].mxu0 %v2887
    %v5821 = vpop.f32.mrb[0].mxu0
    %v5822 = vadd.f32 %v5781, %v5821
    %v5823 = vpop.f32.mrb[0].mxu0
    %v5824 = vadd.f32 %v5783, %v5823
    %v5825 = vpop.f32.mrb[0].mxu0
    %v5826 = vpop.f32.mrb[0].mxu0
    %5827 = vdwg.mxu0
    %5828 = vmatprep.subr.bf16.mxu0 %v5075
    %5829 = vmatpush1.bf16.msra.mxu0 %v5074
    %5830 = vmatprep.subr.bf16.mxu0 %v5082
    %5831 = vmatpush1.bf16.msra.mxu0 %v5081
    %5832 = vmatprep.subr.bf16.mxu0 %v5089
    %5833 = vmatpush1.bf16.msra.mxu0 %v5088
    %5834 = vmatprep.subr.bf16.mxu0 %v5096
    %5835 = vmatpush1.bf16.msra.mxu0 %v5095
    %5836 = vmatprep.subr.bf16.mxu0 %v5103
    %5837 = vmatpush1.bf16.msra.mxu0 %v5102
    %5838 = vmatprep.subr.bf16.mxu0 %v5110
    %5839 = vmatpush1.bf16.msra.mxu0 %v5109
    %5840 = vmatprep.subr.bf16.mxu0 %v5117
    %5841 = vmatpush1.bf16.msra.mxu0 %v5116
    %5842 = vmatprep.subr.bf16.mxu0 %v5124
    %5843 = vmatpush1.bf16.msra.mxu0 %v5123
    %5844 = vmatprep.subr.bf16.mxu0 %v5131
    %5845 = vmatpush1.bf16.msra.mxu0 %v5130
    %5846 = vmatprep.subr.bf16.mxu0 %v5138
    %5847 = vmatpush1.bf16.msra.mxu0 %v5137
    %5848 = vmatprep.subr.bf16.mxu0 %v5145
    %5849 = vmatpush1.bf16.msra.mxu0 %v5144
    %5850 = vmatprep.subr.bf16.mxu0 %v5152
    %5851 = vmatpush1.bf16.msra.mxu0 %v5151
    %5852 = vmatprep.subr.bf16.mxu0 %v5159
    %5853 = vmatpush1.bf16.msra.mxu0 %v5158
    %5854 = vmatprep.subr.bf16.mxu0 %v5166
    %5855 = vmatpush1.bf16.msra.mxu0 %v5165
    %5856 = vmatprep.subr.bf16.mxu0 %v5173
    %5857 = vmatpush1.bf16.msra.mxu0 %v5172
    %5858 = vmatprep.subr.bf16.mxu0 %v5180
    %5859 = vmatpush1.bf16.msra.mxu0 %v5179
    %5860 = vmatprep.mubr.bf16.mxu0 %v2890
    %5861 = vmatmul.mubr.bf16.gmra.mrb[0].mxu0 %v2889
    %v5862 = vpop.f32.mrb[0].mxu0
    %v5863 = vadd.f32 %v5822, %v5862
    %v5864 = vpop.f32.mrb[0].mxu0
    %v5865 = vadd.f32 %v5824, %v5864
    %v5866 = vpop.f32.mrb[0].mxu0
    %v5867 = vpop.f32.mrb[0].mxu0
    %5868 = vdwg.mxu0
    %5869 = vmatprep.subr.bf16.mxu0 %v5187
    %5870 = vmatpush1.bf16.msra.mxu0 %v5186
    %5871 = vmatprep.subr.bf16.mxu0 %v5194
    %5872 = vmatpush1.bf16.msra.mxu0 %v5193
    %5873 = vmatprep.subr.bf16.mxu0 %v5201
    %5874 = vmatpush1.bf16.msra.mxu0 %v5200
    %5875 = vmatprep.subr.bf16.mxu0 %v5208
    %5876 = vmatpush1.bf16.msra.mxu0 %v5207
    %5877 = vmatprep.subr.bf16.mxu0 %v5215
    %5878 = vmatpush1.bf16.msra.mxu0 %v5214
    %5879 = vmatprep.subr.bf16.mxu0 %v5222
    %5880 = vmatpush1.bf16.msra.mxu0 %v5221
    %5881 = vmatprep.subr.bf16.mxu0 %v5229
    %5882 = vmatpush1.bf16.msra.mxu0 %v5228
    %5883 = vmatprep.subr.bf16.mxu0 %v5236
    %5884 = vmatpush1.bf16.msra.mxu0 %v5235
    %5885 = vmatprep.subr.bf16.mxu0 %v5243
    %5886 = vmatpush1.bf16.msra.mxu0 %v5242
    %5887 = vmatprep.subr.bf16.mxu0 %v5250
    %5888 = vmatpush1.bf16.msra.mxu0 %v5249
    %5889 = vmatprep.subr.bf16.mxu0 %v5257
    %5890 = vmatpush1.bf16.msra.mxu0 %v5256
    %5891 = vmatprep.subr.bf16.mxu0 %v5264
    %5892 = vmatpush1.bf16.msra.mxu0 %v5263
    %5893 = vmatprep.subr.bf16.mxu0 %v5271
    %5894 = vmatpush1.bf16.msra.mxu0 %v5270
    %5895 = vmatprep.subr.bf16.mxu0 %v5278
    %5896 = vmatpush1.bf16.msra.mxu0 %v5277
    %5897 = vmatprep.subr.bf16.mxu0 %v5285
    %5898 = vmatpush1.bf16.msra.mxu0 %v5284
    %5899 = vmatprep.subr.bf16.mxu0 %v5292
    %5900 = vmatpush1.bf16.msra.mxu0 %v5291
    %5901 = vmatprep.mubr.bf16.mxu0 %v2892
    %5902 = vmatmul.mubr.bf16.gmra.mrb[0].mxu0 %v2891
    %v5903 = vpop.f32.mrb[0].mxu0
    %v5904 = vadd.f32 %v5863, %v5903
    %v5905 = vpop.f32.mrb[0].mxu0
    %v5906 = vadd.f32 %v5865, %v5905
    %v5907 = vpop.f32.mrb[0].mxu0
    %v5908 = vpop.f32.mrb[0].mxu0
    %5909 = vdwg.mxu0
    %5910 = vmatprep.subr.bf16.mxu0 %v4853
    %5911 = vmatpush1.bf16.msra.mxu0 %v4852
    %5912 = vmatprep.subr.bf16.mxu0 %v4860
    %5913 = vmatpush1.bf16.msra.mxu0 %v4859
    %5914 = vmatprep.subr.bf16.mxu0 %v4867
    %5915 = vmatpush1.bf16.msra.mxu0 %v4866
    %5916 = vmatprep.subr.bf16.mxu0 %v4874
    %5917 = vmatpush1.bf16.msra.mxu0 %v4873
    %5918 = vmatprep.subr.bf16.mxu0 %v4881
    %5919 = vmatpush1.bf16.msra.mxu0 %v4880
    %5920 = vmatprep.subr.bf16.mxu0 %v4888
    %5921 = vmatpush1.bf16.msra.mxu0 %v4887
    %5922 = vmatprep.subr.bf16.mxu0 %v4895
    %5923 = vmatpush1.bf16.msra.mxu0 %v4894
    %5924 = vmatprep.subr.bf16.mxu0 %v4902
    %5925 = vmatpush1.bf16.msra.mxu0 %v4901
    %5926 = vmatprep.subr.bf16.mxu0 %v4909
    %5927 = vmatpush1.bf16.msra.mxu0 %v4908
    %5928 = vmatprep.subr.bf16.mxu0 %v4916
    %5929 = vmatpush1.bf16.msra.mxu0 %v4915
    %5930 = vmatprep.subr.bf16.mxu0 %v4923
    %5931 = vmatpush1.bf16.msra.mxu0 %v4922
    %5932 = vmatprep.subr.bf16.mxu0 %v4930
    %5933 = vmatpush1.bf16.msra.mxu0 %v4929
    %5934 = vmatprep.subr.bf16.mxu0 %v4937
    %5935 = vmatpush1.bf16.msra.mxu0 %v4936
    %5936 = vmatprep.subr.bf16.mxu0 %v4944
    %5937 = vmatpush1.bf16.msra.mxu0 %v4943
    %5938 = vmatprep.subr.bf16.mxu0 %v4951
    %5939 = vmatpush1.bf16.msra.mxu0 %v4950
    %5940 = vmatprep.subr.bf16.mxu0 %v4958
    %5941 = vmatpush1.bf16.msra.mxu0 %v4957
    %5942 = vmatprep.mubr.bf16.mxu0 %v2886
    %5943 = vmatmul.mubr.bf16.gmra.mrb[0].mxu0 %v2885
    %v5944 = vpop.f32.mrb[0].mxu0
    %v5945 = vadd.f32 %v3418, %v5944
    %v5946 = vpop.f32.mrb[0].mxu0
    %v5947 = vadd.f32 %v3422, %v5946
    %v5948 = vpop.f32.mrb[0].mxu0
    %v5949 = vpop.f32.mrb[0].mxu0
    %5950 = vdwg.mxu0
    %5951 = vmatprep.subr.bf16.mxu0 %v4965
    %5952 = vmatpush1.bf16.msra.mxu0 %v4964
    %5953 = vmatprep.subr.bf16.mxu0 %v4972
    %5954 = vmatpush1.bf16.msra.mxu0 %v4971
    %5955 = vmatprep.subr.bf16.mxu0 %v4979
    %5956 = vmatpush1.bf16.msra.mxu0 %v4978
    %5957 = vmatprep.subr.bf16.mxu0 %v4986
    %5958 = vmatpush1.bf16.msra.mxu0 %v4985
    %5959 = vmatprep.subr.bf16.mxu0 %v4993
    %5960 = vmatpush1.bf16.msra.mxu0 %v4992
    %5961 = vmatprep.subr.bf16.mxu0 %v5000
    %5962 = vmatpush1.bf16.msra.mxu0 %v4999
    %5963 = vmatprep.subr.bf16.mxu0 %v5007
    %5964 = vmatpush1.bf16.msra.mxu0 %v5006
    %5965 = vmatprep.subr.bf16.mxu0 %v5014
    %5966 = vmatpush1.bf16.msra.mxu0 %v5013
    %5967 = vmatprep.subr.bf16.mxu0 %v5021
    %5968 = vmatpush1.bf16.msra.mxu0 %v5020
    %5969 = vmatprep.subr.bf16.mxu0 %v5028
    %5970 = vmatpush1.bf16.msra.mxu0 %v5027
    %5971 = vmatprep.subr.bf16.mxu0 %v5035
    %5972 = vmatpush1.bf16.msra.mxu0 %v5034
    %5973 = vmatprep.subr.bf16.mxu0 %v5042
    %5974 = vmatpush1.bf16.msra.mxu0 %v5041
    %5975 = vmatprep.subr.bf16.mxu0 %v5049
    %5976 = vmatpush1.bf16.msra.mxu0 %v5048
    %5977 = vmatprep.subr.bf16.mxu0 %v5056
    %5978 = vmatpush1.bf16.msra.mxu0 %v5055
    %5979 = vmatprep.subr.bf16.mxu0 %v5063
    %5980 = vmatpush1.bf16.msra.mxu0 %v5062
    %5981 = vmatprep.subr.bf16.mxu0 %v5070
    %5982 = vmatpush1.bf16.msra.mxu0 %v5069
    %5983 = vmatprep.mubr.bf16.mxu0 %v2888
    %5984 = vmatmul.mubr.bf16.gmra.mrb[0].mxu0 %v2887
    %v5985 = vpop.f32.mrb[0].mxu0
    %v5986 = vadd.f32 %v5945, %v5985
    %v5987 = vpop.f32.mrb[0].mxu0
    %v5988 = vadd.f32 %v5947, %v5987
    %v5989 = vpop.f32.mrb[0].mxu0
    %v5990 = vpop.f32.mrb[0].mxu0
    %5991 = vdwg.mxu0
    %5992 = vmatprep.subr.bf16.mxu0 %v5077
    %5993 = vmatpush1.bf16.msra.mxu0 %v5076
    %5994 = vmatprep.subr.bf16.mxu0 %v5084
    %5995 = vmatpush1.bf16.msra.mxu0 %v5083
    %5996 = vmatprep.subr.bf16.mxu0 %v5091
    %5997 = vmatpush1.bf16.msra.mxu0 %v5090
    %5998 = vmatprep.subr.bf16.mxu0 %v5098
    %5999 = vmatpush1.bf16.msra.mxu0 %v5097
    %6000 = vmatprep.subr.bf16.mxu0 %v5105
    %6001 = vmatpush1.bf16.msra.mxu0 %v5104
    %6002 = vmatprep.subr.bf16.mxu0 %v5112
    %6003 = vmatpush1.bf16.msra.mxu0 %v5111
    %6004 = vmatprep.subr.bf16.mxu0 %v5119
    %6005 = vmatpush1.bf16.msra.mxu0 %v5118
    %6006 = vmatprep.subr.bf16.mxu0 %v5126
    %6007 = vmatpush1.bf16.msra.mxu0 %v5125
    %6008 = vmatprep.subr.bf16.mxu0 %v5133
    %6009 = vmatpush1.bf16.msra.mxu0 %v5132
    %6010 = vmatprep.subr.bf16.mxu0 %v5140
    %6011 = vmatpush1.bf16.msra.mxu0 %v5139
    %6012 = vmatprep.subr.bf16.mxu0 %v5147
    %6013 = vmatpush1.bf16.msra.mxu0 %v5146
    %6014 = vmatprep.subr.bf16.mxu0 %v5154
    %6015 = vmatpush1.bf16.msra.mxu0 %v5153
    %6016 = vmatprep.subr.bf16.mxu0 %v5161
    %6017 = vmatpush1.bf16.msra.mxu0 %v5160
    %6018 = vmatprep.subr.bf16.mxu0 %v5168
    %6019 = vmatpush1.bf16.msra.mxu0 %v5167
    %6020 = vmatprep.subr.bf16.mxu0 %v5175
    %6021 = vmatpush1.bf16.msra.mxu0 %v5174
    %6022 = vmatprep.subr.bf16.mxu0 %v5182
    %6023 = vmatpush1.bf16.msra.mxu0 %v5181
    %6024 = vmatprep.mubr.bf16.mxu0 %v2890
    %6025 = vmatmul.mubr.bf16.gmra.mrb[0].mxu0 %v2889
    %v6026 = vpop.f32.mrb[0].mxu0
    %v6027 = vadd.f32 %v5986, %v6026
    %v6028 = vpop.f32.mrb[0].mxu0
    %v6029 = vadd.f32 %v5988, %v6028
    %v6030 = vpop.f32.mrb[0].mxu0
    %v6031 = vpop.f32.mrb[0].mxu0
    %6032 = vdwg.mxu0
    %6033 = vmatprep.subr.bf16.mxu0 %v5189
    %6034 = vmatpush1.bf16.msra.mxu0 %v5188
    %6035 = vmatprep.subr.bf16.mxu0 %v5196
    %6036 = vmatpush1.bf16.msra.mxu0 %v5195
    %6037 = vmatprep.subr.bf16.mxu0 %v5203
    %6038 = vmatpush1.bf16.msra.mxu0 %v5202
    %6039 = vmatprep.subr.bf16.mxu0 %v5210
    %6040 = vmatpush1.bf16.msra.mxu0 %v5209
    %6041 = vmatprep.subr.bf16.mxu0 %v5217
    %6042 = vmatpush1.bf16.msra.mxu0 %v5216
    %6043 = vmatprep.subr.bf16.mxu0 %v5224
    %6044 = vmatpush1.bf16.msra.mxu0 %v5223
    %6045 = vmatprep.subr.bf16.mxu0 %v5231
    %6046 = vmatpush1.bf16.msra.mxu0 %v5230
    %6047 = vmatprep.subr.bf16.mxu0 %v5238
    %6048 = vmatpush1.bf16.msra.mxu0 %v5237
    %6049 = vmatprep.subr.bf16.mxu0 %v5245
    %6050 = vmatpush1.bf16.msra.mxu0 %v5244
    %6051 = vmatprep.subr.bf16.mxu0 %v5252
    %6052 = vmatpush1.bf16.msra.mxu0 %v5251
    %6053 = vmatprep.subr.bf16.mxu0 %v5259
    %6054 = vmatpush1.bf16.msra.mxu0 %v5258
    %6055 = vmatprep.subr.bf16.mxu0 %v5266
    %6056 = vmatpush1.bf16.msra.mxu0 %v5265
    %6057 = vmatprep.subr.bf16.mxu0 %v5273
    %6058 = vmatpush1.bf16.msra.mxu0 %v5272
    %6059 = vmatprep.subr.bf16.mxu0 %v5280
    %6060 = vmatpush1.bf16.msra.mxu0 %v5279
    %6061 = vmatprep.subr.bf16.mxu0 %v5287
    %6062 = vmatpush1.bf16.msra.mxu0 %v5286
    %6063 = vmatprep.subr.bf16.mxu0 %v5294
    %6064 = vmatpush1.bf16.msra.mxu0 %v5293
    %6065 = vmatprep.mubr.bf16.mxu0 %v2892
    %6066 = vmatmul.mubr.bf16.gmra.mrb[0].mxu0 %v2891
    %v6067 = vpop.f32.mrb[0].mxu0
    %v6068 = vadd.f32 %v6027, %v6067
    %v6069 = vpop.f32.mrb[0].mxu0
    %v6070 = vadd.f32 %v6029, %v6069
    %v6071 = vpop.f32.mrb[0].mxu0
    %v6072 = vpop.f32.mrb[0].mxu0
    %6073 = vdwg.mxu0
    %6074 = vmatprep.subr.bf16.mxu0 %v4855
    %6075 = vmatpush1.bf16.msra.mxu0 %v4854
    %6076 = vmatprep.subr.bf16.mxu0 %v4862
    %6077 = vmatpush1.bf16.msra.mxu0 %v4861
    %6078 = vmatprep.subr.bf16.mxu0 %v4869
    %6079 = vmatpush1.bf16.msra.mxu0 %v4868
    %6080 = vmatprep.subr.bf16.mxu0 %v4876
    %6081 = vmatpush1.bf16.msra.mxu0 %v4875
    %6082 = vmatprep.subr.bf16.mxu0 %v4883
    %6083 = vmatpush1.bf16.msra.mxu0 %v4882
    %6084 = vmatprep.subr.bf16.mxu0 %v4890
    %6085 = vmatpush1.bf16.msra.mxu0 %v4889
    %6086 = vmatprep.subr.bf16.mxu0 %v4897
    %6087 = vmatpush1.bf16.msra.mxu0 %v4896
    %6088 = vmatprep.subr.bf16.mxu0 %v4904
    %6089 = vmatpush1.bf16.msra.mxu0 %v4903
    %6090 = vmatprep.subr.bf16.mxu0 %v4911
    %6091 = vmatpush1.bf16.msra.mxu0 %v4910
    %6092 = vmatprep.subr.bf16.mxu0 %v4918
    %6093 = vmatpush1.bf16.msra.mxu0 %v4917
    %6094 = vmatprep.subr.bf16.mxu0 %v4925
    %6095 = vmatpush1.bf16.msra.mxu0 %v4924
    %6096 = vmatprep.subr.bf16.mxu0 %v4932
    %6097 = vmatpush1.bf16.msra.mxu0 %v4931
    %6098 = vmatprep.subr.bf16.mxu0 %v4939
    %6099 = vmatpush1.bf16.msra.mxu0 %v4938
    %6100 = vmatprep.subr.bf16.mxu0 %v4946
    %6101 = vmatpush1.bf16.msra.mxu0 %v4945
    %6102 = vmatprep.subr.bf16.mxu0 %v4953
    %6103 = vmatpush1.bf16.msra.mxu0 %v4952
    %6104 = vmatprep.subr.bf16.mxu0 %v4960
    %6105 = vmatpush1.bf16.msra.mxu0 %v4959
    %6106 = vmatprep.mubr.bf16.mxu0 %v2886
    %6107 = vmatmul.mubr.bf16.gmra.mrb[0].mxu0 %v2885
    %v6108 = vpop.f32.mrb[0].mxu0
    %v6109 = vadd.f32 %v3426, %v6108
    %v6110 = vpop.f32.mrb[0].mxu0
    %v6111 = vadd.f32 %v3430, %v6110
    %v6112 = vpop.f32.mrb[0].mxu0
    %v6113 = vpop.f32.mrb[0].mxu0
    %6114 = vdwg.mxu0
    %6115 = vmatprep.subr.bf16.mxu0 %v4967
    %6116 = vmatpush1.bf16.msra.mxu0 %v4966
    %6117 = vmatprep.subr.bf16.mxu0 %v4974
    %6118 = vmatpush1.bf16.msra.mxu0 %v4973
    %6119 = vmatprep.subr.bf16.mxu0 %v4981
    %6120 = vmatpush1.bf16.msra.mxu0 %v4980
    %6121 = vmatprep.subr.bf16.mxu0 %v4988
    %6122 = vmatpush1.bf16.msra.mxu0 %v4987
    %6123 = vmatprep.subr.bf16.mxu0 %v4995
    %6124 = vmatpush1.bf16.msra.mxu0 %v4994
    %6125 = vmatprep.subr.bf16.mxu0 %v5002
    %6126 = vmatpush1.bf16.msra.mxu0 %v5001
    %6127 = vmatprep.subr.bf16.mxu0 %v5009
    %6128 = vmatpush1.bf16.msra.mxu0 %v5008
    %6129 = vmatprep.subr.bf16.mxu0 %v5016
    %6130 = vmatpush1.bf16.msra.mxu0 %v5015
    %6131 = vmatprep.subr.bf16.mxu0 %v5023
    %6132 = vmatpush1.bf16.msra.mxu0 %v5022
    %6133 = vmatprep.subr.bf16.mxu0 %v5030
    %6134 = vmatpush1.bf16.msra.mxu0 %v5029
    %6135 = vmatprep.subr.bf16.mxu0 %v5037
    %6136 = vmatpush1.bf16.msra.mxu0 %v5036
    %6137 = vmatprep.subr.bf16.mxu0 %v5044
    %6138 = vmatpush1.bf16.msra.mxu0 %v5043
    %6139 = vmatprep.subr.bf16.mxu0 %v5051
    %6140 = vmatpush1.bf16.msra.mxu0 %v5050
    %6141 = vmatprep.subr.bf16.mxu0 %v5058
    %6142 = vmatpush1.bf16.msra.mxu0 %v5057
    %6143 = vmatprep.subr.bf16.mxu0 %v5065
    %6144 = vmatpush1.bf16.msra.mxu0 %v5064
    %6145 = vmatprep.subr.bf16.mxu0 %v5072
    %6146 = vmatpush1.bf16.msra.mxu0 %v5071
    %6147 = vmatprep.mubr.bf16.mxu0 %v2888
    %6148 = vmatmul.mubr.bf16.gmra.mrb[0].mxu0 %v2887
    %v6149 = vpop.f32.mrb[0].mxu0
    %v6150 = vadd.f32 %v6109, %v6149
    %v6151 = vpop.f32.mrb[0].mxu0
    %v6152 = vadd.f32 %v6111, %v6151
    %v6153 = vpop.f32.mrb[0].mxu0
    %v6154 = vpop.f32.mrb[0].mxu0
    %6155 = vdwg.mxu0
    %6156 = vmatprep.subr.bf16.mxu0 %v5079
    %6157 = vmatpush1.bf16.msra.mxu0 %v5078
    %6158 = vmatprep.subr.bf16.mxu0 %v5086
    %6159 = vmatpush1.bf16.msra.mxu0 %v5085
    %6160 = vmatprep.subr.bf16.mxu0 %v5093
    %6161 = vmatpush1.bf16.msra.mxu0 %v5092
    %6162 = vmatprep.subr.bf16.mxu0 %v5100
    %6163 = vmatpush1.bf16.msra.mxu0 %v5099
    %6164 = vmatprep.subr.bf16.mxu0 %v5107
    %6165 = vmatpush1.bf16.msra.mxu0 %v5106
    %6166 = vmatprep.subr.bf16.mxu0 %v5114
    %6167 = vmatpush1.bf16.msra.mxu0 %v5113
    %6168 = vmatprep.subr.bf16.mxu0 %v5121
    %6169 = vmatpush1.bf16.msra.mxu0 %v5120
    %6170 = vmatprep.subr.bf16.mxu0 %v5128
    %6171 = vmatpush1.bf16.msra.mxu0 %v5127
    %6172 = vmatprep.subr.bf16.mxu0 %v5135
    %6173 = vmatpush1.bf16.msra.mxu0 %v5134
    %6174 = vmatprep.subr.bf16.mxu0 %v5142
    %6175 = vmatpush1.bf16.msra.mxu0 %v5141
    %6176 = vmatprep.subr.bf16.mxu0 %v5149
    %6177 = vmatpush1.bf16.msra.mxu0 %v5148
    %6178 = vmatprep.subr.bf16.mxu0 %v5156
    %6179 = vmatpush1.bf16.msra.mxu0 %v5155
    %6180 = vmatprep.subr.bf16.mxu0 %v5163
    %6181 = vmatpush1.bf16.msra.mxu0 %v5162
    %6182 = vmatprep.subr.bf16.mxu0 %v5170
    %6183 = vmatpush1.bf16.msra.mxu0 %v5169
    %6184 = vmatprep.subr.bf16.mxu0 %v5177
    %6185 = vmatpush1.bf16.msra.mxu0 %v5176
    %6186 = vmatprep.subr.bf16.mxu0 %v5184
    %6187 = vmatpush1.bf16.msra.mxu0 %v5183
    %6188 = vmatprep.mubr.bf16.mxu0 %v2890
    %6189 = vmatmul.mubr.bf16.gmra.mrb[0].mxu0 %v2889
    %v6190 = vpop.f32.mrb[0].mxu0
    %v6191 = vadd.f32 %v6150, %v6190
    %v6192 = vpop.f32.mrb[0].mxu0
    %v6193 = vadd.f32 %v6152, %v6192
    %v6194 = vpop.f32.mrb[0].mxu0
    %v6195 = vpop.f32.mrb[0].mxu0
    %6196 = vdwg.mxu0
    %6197 = vmatprep.subr.bf16.mxu0 %v5191
    %6198 = vmatpush1.bf16.msra.mxu0 %v5190
    %6199 = vmatprep.subr.bf16.mxu0 %v5198
    %6200 = vmatpush1.bf16.msra.mxu0 %v5197
    %6201 = vmatprep.subr.bf16.mxu0 %v5205
    %6202 = vmatpush1.bf16.msra.mxu0 %v5204
    %6203 = vmatprep.subr.bf16.mxu0 %v5212
    %6204 = vmatpush1.bf16.msra.mxu0 %v5211
    %6205 = vmatprep.subr.bf16.mxu0 %v5219
    %6206 = vmatpush1.bf16.msra.mxu0 %v5218
    %6207 = vmatprep.subr.bf16.mxu0 %v5226
    %6208 = vmatpush1.bf16.msra.mxu0 %v5225
    %6209 = vmatprep.subr.bf16.mxu0 %v5233
    %6210 = vmatpush1.bf16.msra.mxu0 %v5232
    %6211 = vmatprep.subr.bf16.mxu0 %v5240
    %6212 = vmatpush1.bf16.msra.mxu0 %v5239
    %6213 = vmatprep.subr.bf16.mxu0 %v5247
    %6214 = vmatpush1.bf16.msra.mxu0 %v5246
    %6215 = vmatprep.subr.bf16.mxu0 %v5254
    %6216 = vmatpush1.bf16.msra.mxu0 %v5253
    %6217 = vmatprep.subr.bf16.mxu0 %v5261
    %6218 = vmatpush1.bf16.msra.mxu0 %v5260
    %6219 = vmatprep.subr.bf16.mxu0 %v5268
    %6220 = vmatpush1.bf16.msra.mxu0 %v5267
    %6221 = vmatprep.subr.bf16.mxu0 %v5275
    %6222 = vmatpush1.bf16.msra.mxu0 %v5274
    %6223 = vmatprep.subr.bf16.mxu0 %v5282
    %6224 = vmatpush1.bf16.msra.mxu0 %v5281
    %6225 = vmatprep.subr.bf16.mxu0 %v5289
    %6226 = vmatpush1.bf16.msra.mxu0 %v5288
    %6227 = vmatprep.subr.bf16.mxu0 %v5296
    %6228 = vmatpush1.bf16.msra.mxu0 %v5295
    %6229 = vmatprep.mubr.bf16.mxu0 %v2892
    %6230 = vmatmul.mubr.bf16.gmra.mrb[0].mxu0 %v2891
    %v6231 = vpop.f32.mrb[0].mxu0
    %v6232 = vadd.f32 %v6191, %v6231
    %v6233 = vpop.f32.mrb[0].mxu0
    %v6234 = vadd.f32 %v6193, %v6233
    %v6235 = vpop.f32.mrb[0].mxu0
    %v6236 = vpop.f32.mrb[0].mxu0
    %6237 = vdwg.mxu0
    %6238 = vmatprep.subr.bf16.mxu0 0
    %6239 = vmatpush1.bf16.msra.mxu0 %v4856
    %6240 = vmatprep.subr.bf16.mxu0 0
    %6241 = vmatpush1.bf16.msra.mxu0 %v4863
    %6242 = vmatprep.subr.bf16.mxu0 0
    %6243 = vmatpush1.bf16.msra.mxu0 %v4870
    %6244 = vmatprep.subr.bf16.mxu0 0
    %6245 = vmatpush1.bf16.msra.mxu0 %v4877
    %6246 = vmatprep.subr.bf16.mxu0 0
    %6247 = vmatpush1.bf16.msra.mxu0 %v4884
    %6248 = vmatprep.subr.bf16.mxu0 0
    %6249 = vmatpush1.bf16.msra.mxu0 %v4891
    %6250 = vmatprep.subr.bf16.mxu0 0
    %6251 = vmatpush1.bf16.msra.mxu0 %v4898
    %6252 = vmatprep.subr.bf16.mxu0 0
    %6253 = vmatpush1.bf16.msra.mxu0 %v4905
    %6254 = vmatprep.subr.bf16.mxu0 0
    %6255 = vmatpush1.bf16.msra.mxu0 %v4912
    %6256 = vmatprep.subr.bf16.mxu0 0
    %6257 = vmatpush1.bf16.msra.mxu0 %v4919
    %6258 = vmatprep.subr.bf16.mxu0 0
    %6259 = vmatpush1.bf16.msra.mxu0 %v4926
    %6260 = vmatprep.subr.bf16.mxu0 0
    %6261 = vmatpush1.bf16.msra.mxu0 %v4933
    %6262 = vmatprep.subr.bf16.mxu0 0
    %6263 = vmatpush1.bf16.msra.mxu0 %v4940
    %6264 = vmatprep.subr.bf16.mxu0 0
    %6265 = vmatpush1.bf16.msra.mxu0 %v4947
    %6266 = vmatprep.subr.bf16.mxu0 0
    %6267 = vmatpush1.bf16.msra.mxu0 %v4954
    %6268 = vmatprep.subr.bf16.mxu0 0
    %6269 = vmatpush1.bf16.msra.mxu0 %v4961
    %6270 = vmatprep.mubr.bf16.mxu0 %v2886
    %6271 = vmatmul.mubr.bf16.gmra.mrb[0].mxu0 %v2885
    %v6272 = vpop.f32.mrb[0].mxu0
    %v6273 = vadd.f32 %v3434, %v6272
    %v6274 = vpop.f32.mrb[0].mxu0
    %v6275 = vpop.f32.mrb[0].mxu0
    %v6276 = vpop.f32.mrb[0].mxu0
    %6277 = vdwg.mxu0
    %6278 = vmatprep.subr.bf16.mxu0 0
    %6279 = vmatpush1.bf16.msra.mxu0 %v4968
    %6280 = vmatprep.subr.bf16.mxu0 0
    %6281 = vmatpush1.bf16.msra.mxu0 %v4975
    %6282 = vmatprep.subr.bf16.mxu0 0
    %6283 = vmatpush1.bf16.msra.mxu0 %v4982
    %6284 = vmatprep.subr.bf16.mxu0 0
    %6285 = vmatpush1.bf16.msra.mxu0 %v4989
    %6286 = vmatprep.subr.bf16.mxu0 0
    %6287 = vmatpush1.bf16.msra.mxu0 %v4996
    %6288 = vmatprep.subr.bf16.mxu0 0
    %6289 = vmatpush1.bf16.msra.mxu0 %v5003
    %6290 = vmatprep.subr.bf16.mxu0 0
    %6291 = vmatpush1.bf16.msra.mxu0 %v5010
    %6292 = vmatprep.subr.bf16.mxu0 0
    %6293 = vmatpush1.bf16.msra.mxu0 %v5017
    %6294 = vmatprep.subr.bf16.mxu0 0
    %6295 = vmatpush1.bf16.msra.mxu0 %v5024
    %6296 = vmatprep.subr.bf16.mxu0 0
    %6297 = vmatpush1.bf16.msra.mxu0 %v5031
    %6298 = vmatprep.subr.bf16.mxu0 0
    %6299 = vmatpush1.bf16.msra.mxu0 %v5038
    %6300 = vmatprep.subr.bf16.mxu0 0
    %6301 = vmatpush1.bf16.msra.mxu0 %v5045
    %6302 = vmatprep.subr.bf16.mxu0 0
    %6303 = vmatpush1.bf16.msra.mxu0 %v5052
    %6304 = vmatprep.subr.bf16.mxu0 0
    %6305 = vmatpush1.bf16.msra.mxu0 %v5059
    %6306 = vmatprep.subr.bf16.mxu0 0
    %6307 = vmatpush1.bf16.msra.mxu0 %v5066
    %6308 = vmatprep.subr.bf16.mxu0 0
    %6309 = vmatpush1.bf16.msra.mxu0 %v5073
    %6310 = vmatprep.mubr.bf16.mxu0 %v2888
    %6311 = vmatmul.mubr.bf16.gmra.mrb[0].mxu0 %v2887
    %v6312 = vpop.f32.mrb[0].mxu0
    %v6313 = vadd.f32 %v6273, %v6312
    %v6314 = vpop.f32.mrb[0].mxu0
    %v6315 = vpop.f32.mrb[0].mxu0
    %v6316 = vpop.f32.mrb[0].mxu0
    %6317 = vdwg.mxu0
    %6318 = vmatprep.subr.bf16.mxu0 0
    %6319 = vmatpush1.bf16.msra.mxu0 %v5080
    %6320 = vmatprep.subr.bf16.mxu0 0
    %6321 = vmatpush1.bf16.msra.mxu0 %v5087
    %6322 = vmatprep.subr.bf16.mxu0 0
    %6323 = vmatpush1.bf16.msra.mxu0 %v5094
    %6324 = vmatprep.subr.bf16.mxu0 0
    %6325 = vmatpush1.bf16.msra.mxu0 %v5101
    %6326 = vmatprep.subr.bf16.mxu0 0
    %6327 = vmatpush1.bf16.msra.mxu0 %v5108
    %6328 = vmatprep.subr.bf16.mxu0 0
    %6329 = vmatpush1.bf16.msra.mxu0 %v5115
    %6330 = vmatprep.subr.bf16.mxu0 0
    %6331 = vmatpush1.bf16.msra.mxu0 %v5122
    %6332 = vmatprep.subr.bf16.mxu0 0
    %6333 = vmatpush1.bf16.msra.mxu0 %v5129
    %6334 = vmatprep.subr.bf16.mxu0 0
    %6335 = vmatpush1.bf16.msra.mxu0 %v5136
    %6336 = vmatprep.subr.bf16.mxu0 0
    %6337 = vmatpush1.bf16.msra.mxu0 %v5143
    %6338 = vmatprep.subr.bf16.mxu0 0
    %6339 = vmatpush1.bf16.msra.mxu0 %v5150
    %6340 = vmatprep.subr.bf16.mxu0 0
    %6341 = vmatpush1.bf16.msra.mxu0 %v5157
    %6342 = vmatprep.subr.bf16.mxu0 0
    %6343 = vmatpush1.bf16.msra.mxu0 %v5164
    %6344 = vmatprep.subr.bf16.mxu0 0
    %6345 = vmatpush1.bf16.msra.mxu0 %v5171
    %6346 = vmatprep.subr.bf16.mxu0 0
    %6347 = vmatpush1.bf16.msra.mxu0 %v5178
    %6348 = vmatprep.subr.bf16.mxu0 0
    %6349 = vmatpush1.bf16.msra.mxu0 %v5185
    %6350 = vmatprep.mubr.bf16.mxu0 %v2890
    %6351 = vmatmul.mubr.bf16.gmra.mrb[0].mxu0 %v2889
    %v6352 = vpop.f32.mrb[0].mxu0
    %v6353 = vadd.f32 %v6313, %v6352
    %v6354 = vpop.f32.mrb[0].mxu0
    %v6355 = vpop.f32.mrb[0].mxu0
    %v6356 = vpop.f32.mrb[0].mxu0
    %6357 = vdwg.mxu0
    %6358 = vmatprep.subr.bf16.mxu0 0
    %6359 = vmatpush1.bf16.msra.mxu0 %v5192
    %6360 = vmatprep.subr.bf16.mxu0 0
    %6361 = vmatpush1.bf16.msra.mxu0 %v5199
    %6362 = vmatprep.subr.bf16.mxu0 0
    %6363 = vmatpush1.bf16.msra.mxu0 %v5206
    %6364 = vmatprep.subr.bf16.mxu0 0
    %6365 = vmatpush1.bf16.msra.mxu0 %v5213
    %6366 = vmatprep.subr.bf16.mxu0 0
    %6367 = vmatpush1.bf16.msra.mxu0 %v5220
    %6368 = vmatprep.subr.bf16.mxu0 0
    %6369 = vmatpush1.bf16.msra.mxu0 %v5227
    %6370 = vmatprep.subr.bf16.mxu0 0
    %6371 = vmatpush1.bf16.msra.mxu0 %v5234
    %6372 = vmatprep.subr.bf16.mxu0 0
    %6373 = vmatpush1.bf16.msra.mxu0 %v5241
    %6374 = vmatprep.subr.bf16.mxu0 0
    %6375 = vmatpush1.bf16.msra.mxu0 %v5248
    %6376 = vmatprep.subr.bf16.mxu0 0
    %6377 = vmatpush1.bf16.msra.mxu0 %v5255
    %6378 = vmatprep.subr.bf16.mxu0 0
    %6379 = vmatpush1.bf16.msra.mxu0 %v5262
    %6380 = vmatprep.subr.bf16.mxu0 0
    %6381 = vmatpush1.bf16.msra.mxu0 %v5269
    %6382 = vmatprep.subr.bf16.mxu0 0
    %6383 = vmatpush1.bf16.msra.mxu0 %v5276
    %6384 = vmatprep.subr.bf16.mxu0 0
    %6385 = vmatpush1.bf16.msra.mxu0 %v5283
    %6386 = vmatprep.subr.bf16.mxu0 0
    %6387 = vmatpush1.bf16.msra.mxu0 %v5290
    %6388 = vmatprep.subr.bf16.mxu0 0
    %6389 = vmatpush1.bf16.msra.mxu0 %v5297
    %6390 = vmatprep.mubr.bf16.mxu0 %v2892
    %6391 = vmatmul.mubr.bf16.gmra.mrb[0].mxu0 %v2891
    %v6392 = vpop.f32.mrb[0].mxu0
    %v6393 = vadd.f32 %v6353, %v6392
    %v6394 = vpop.f32.mrb[0].mxu0
    %v6395 = vpop.f32.mrb[0].mxu0
    %v6396 = vpop.f32.mrb[0].mxu0
    %6397 = vdwg.mxu0
    %v6398 = vtanh.pop %v5904
    %v6399 = vtanh.pop %v5906
    %v6400 = vtanh.pop %v6068
    %v6401 = vtanh.pop %v6070
    %v6402 = vtanh.pop %v6232
    %v6403 = vtanh.pop %v6234
    %v6404 = vtanh.pop %v6393
    %6405 = vst [vmem:[#allocation20] sm:$0xff] %v6398
    %6406 = vst [vmem:[#allocation20 + $0x8] sm:$0xff] %v6399
    %6407 = vst [vmem:[#allocation20 + $0x10] sm:$0xff] %v6400
    %6408 = vst [vmem:[#allocation20 + $0x18] sm:$0xff] %v6401
    %6409 = vst [vmem:[#allocation20 + $0x20] sm:$0xff] %v6402
    %6410 = vst [vmem:[#allocation20 + $0x28] sm:$0xff] %v6403
    %6411 = vst [vmem:[#allocation20 + $0x30] sm:$0xff] %v6404
    // Predicated region
    $region90: #{tpu_custom_call.1} parent=1 // pred_check
      _
    $region91: #{tpu_custom_call.1} parent=1 // pred_check_branch
      %6413 = sbr.rel (0) target = $region93
    $region92: #{tpu_custom_call.1} parent=1 // pred_region
      %s6415 = ssub.s32 896, 896
      %6416 = vsyncadd [#allocation4], %s6415
      %s6418 = sshll.u32 [#allocation20], 4
      %s6419 = int_to_ptr.vmem [resolvable:$true] %s6418
      %6421 = dma.vmem_to_hbm [thread:$0]  %s6419, 896, %s11, [#allocation4]
    $region93: #{tpu_custom_call.1} parent=1 // pred_fallthru
      _
    // Predicated region
    $region94: #{tpu_custom_call.1} parent=1 // pred_check
      _
    $region95: #{tpu_custom_call.1} parent=1 // pred_check_branch
      %6423 = sbr.rel (0) target = $region97
    $region96: #{tpu_custom_call.1} parent=1 // pred_region
      %6424 = dma.done [#allocation4], 896
    $region97: #{tpu_custom_call.1} parent=1 // pred_fallthru
      _
    %6425 = vsyncpa [#allocation3], 1
    %6426 = vsyncpa [#allocation6], 1
    %6427 = vsyncpa [#allocation9], 1
    %6428 = vsyncpa [#allocation12], 1
    %6429 = vsyncpa [#allocation15], 1
    %6430 = vsyncpa [#allocation18], 1
    %6431 = vsyncpa [#allocation4], 1

</llo_original>
